<compile_context>
chip_gen: v6e
topology: v6e:2x2x1
jax: 0.10.0
libtpu: 0.0.40
codegen_flags: <defaults>
</compile_context>

<pallas_src>
import jax
import jax.numpy as jnp
from jax import lax
from jax.experimental import pallas as pl
from jax.experimental.pallas import tpu as pltpu

# ---------------------------- sizes -----------------------------------------
NUM_AGENTS = 2
POSE_DIM = 5
POSE_FEATS = 16
AUDIO_C, AUDIO_H, AUDIO_W = 2, 16, 16
MAP_C, RGB_C, VIS_H, VIS_W = 2, 3, 16, 16
CONV_OC = 8
CONV_HO, CONV_WO = VIS_H // 2, VIS_W // 2           # 8, 8
CONV_FLAT = CONV_OC * CONV_HO * CONV_WO             # 512
AUDIO_FEATS = 32
VIS_FEATS = 64
FUSE_OUT = 32
ACTION_FEATS = 16
HIDDEN = 64
RNN_IN = NUM_AGENTS * (FUSE_OUT * 4) + ACTION_FEATS  # 272

AUD_KCOL = CONV_WO * AUDIO_C * 9                    # 144
MAP_KCOL = CONV_WO * MAP_C * 9                      # 144
RGB_KCOL = CONV_WO * RGB_C * 9                      # 216
CONV_NCOL = CONV_WO * CONV_OC                       # 64

CONV_ROW_TILE = 512       # conv stage: rows = output-H lines (one line / image row-group)
IMG_TILE = 512            # encode/fuse stage: rows = images (agent samples)
BATCH_TILE = 512          # tail stage: rows = batch elements
VMEM_LIMIT = 48 * 1024 * 1024   # <= v7x 64 MiB physical; harmless on v5e/v6e


# ---------------------------- in-kernel helpers ------------------------------
def _relu(x):
    return jnp.maximum(x, 0.0)


def _mm_bias_relu(x, w, b):
    return _relu(jnp.dot(x, w, preferred_element_type=jnp.float32) + b)


def _pose_encode(pose, w, b):
    """Linear(5 -> 16) + ReLU computed on the VPU (a K=5 MXU push is ~all idle)."""
    acc = b                                   # (1, 16), broadcasts
    for k in range(POSE_DIM):
        acc = acc + pose[:, k:k + 1] * w[k:k + 1, :]
    return _relu(acc)


# ---------------------------- Pallas kernels ---------------------------------
def _conv_stage_kernel(aud_ref, map_ref, rgb_ref,
                       aud_w_ref, aud_b_ref, map_w_ref, map_b_ref,
                       rgb_w_ref, rgb_b_ref,
                       aud_o_ref, map_o_ref, rgb_o_ref):
    """All three 3x3/s2 convs as im2col matmuls with 8-way position-packed
    block-diagonal weights -> 64-lane-wide outputs."""
    aud_o_ref[...] = _mm_bias_relu(aud_ref[...], aud_w_ref[...], aud_b_ref[...])
    map_o_ref[...] = _mm_bias_relu(map_ref[...], map_w_ref[...], map_b_ref[...])
    rgb_o_ref[...] = _mm_bias_relu(rgb_ref[...], rgb_w_ref[...], rgb_b_ref[...])


def _encode_fuse_kernel(aud_ref, amask_ref, apose_ref,
                        map_ref, rgb_ref, vmask_ref, vpose_ref,
                        pose_w_ref, pose_b_ref, aud_lw_ref, aud_lb_ref,
                        vis_wm_ref, vis_wr_ref, vis_lb_ref,
                        fap_w_ref, fap_b_ref, fvp_w_ref, fvp_b_ref,
                        fap_o_ref, fvp_o_ref):
    """Audio linear (masked) + pose enc + fuse(audio,pose), and
       visual linear (masked) + pose enc + fuse(vision,pose).
       Audio / visual features never leave VMEM."""
    # ---- audio path (rows = 4x the vision rows of this grid step) ----------
    audio_f = _mm_bias_relu(aud_ref[...], aud_lw_ref[...], aud_lb_ref[...]) * amask_ref[...]
    pose_fa = _pose_encode(apose_ref[...], pose_w_ref[...], pose_b_ref[...])
    fap_o_ref[...] = _mm_bias_relu(
        jnp.concatenate([audio_f, pose_fa], axis=1), fap_w_ref[...], fap_b_ref[...])

    # ---- visual path --------------------------------------------------------
    vis_f = _relu(
        jnp.dot(map_ref[...], vis_wm_ref[...], preferred_element_type=jnp.float32)
        + jnp.dot(rgb_ref[...], vis_wr_ref[...], preferred_element_type=jnp.float32)
        + vis_lb_ref[...]) * vmask_ref[...]
    pose_fv = _pose_encode(vpose_ref[...], pose_w_ref[...], pose_b_ref[...])
    fvp_o_ref[...] = _mm_bias_relu(
        jnp.concatenate([vis_f, pose_fv], axis=1), fvp_w_ref[...], fvp_b_ref[...])


def _tail_gru_kernel(fvp_ref, fap_ref, pose_ref, act_in_ref, h_ref, mask_ref,
                     pose_w_ref, pose_b_ref, act_w_ref, act_b_ref,
                     fsa_w_ref, fsa_b_ref, foa_w_ref, foa_b_ref,
                     fsp_w_ref, fsp_b_ref,
                     wi_ref, wh_ref, bi_ref, bh_ref,
                     h_out_ref):
    """Prev/curr fuses + pose/pose fuse + action encoder + masked 1-step GRU.
    Builds one lane-dense (rows, 272) slab and runs a single input matmul."""
    fvp = fvp_ref[...]        # (A, Tb, 32)
    fap = fap_ref[...]        # (4, A, Tb, 32): kinds = [self_prev, self_curr, other_prev, other_curr]
    pose = pose_ref[...]      # (2, A, Tb, 5): self pose, [prev, curr]
    pose_w = pose_w_ref[...]
    pose_b = pose_b_ref[...]

    h = h_ref[...] * mask_ref[...]                                   # RNNStateEncoder masking
    act_f = _relu(act_in_ref[...] * act_w_ref[...] + act_b_ref[...])  # K=1 linear on the VPU

    pieces = []
    for a in range(NUM_AGENTS):
        fsa = _mm_bias_relu(jnp.concatenate([fap[0, a], fap[1, a]], axis=1),
                            fsa_w_ref[...], fsa_b_ref[...])
        foa = _mm_bias_relu(jnp.concatenate([fap[2, a], fap[3, a]], axis=1),
                            foa_w_ref[...], foa_b_ref[...])
        p_prev = _pose_encode(pose[0, a], pose_w, pose_b)
        p_curr = _pose_encode(pose[1, a], pose_w, pose_b)
        fsp = _mm_bias_relu(jnp.concatenate([p_prev, p_curr], axis=1),
                            fsp_w_ref[...], fsp_b_ref[...])
        pieces += [fvp[a], fsa, foa, fsp]
    pieces.append(act_f)

    slab = jnp.concatenate(pieces, axis=1)                           # (Tb, 272)
    gi = jnp.dot(slab, wi_ref[...], preferred_element_type=jnp.float32) + bi_ref[...]
    gh = jnp.dot(h, wh_ref[...], preferred_element_type=jnp.float32) + bh_ref[...]

    r = jax.nn.sigmoid(gi[:, 0:HIDDEN] + gh[:, 0:HIDDEN])
    z = jax.nn.sigmoid(gi[:, HIDDEN:2 * HIDDEN] + gh[:, HIDDEN:2 * HIDDEN])
    n = jnp.tanh(gi[:, 2 * HIDDEN:] + r * gh[:, 2 * HIDDEN:])
    h_out_ref[...] = (1.0 - z) * n + z * h


# ---------------------------- spec helpers ------------------------------------
def _full_spec(a):
    nd = a.ndim
    return pl.BlockSpec(a.shape, lambda i, nd=nd: (0,) * nd)


def _row_spec(rows, cols):
    return pl.BlockSpec((rows, cols), lambda i: (i, 0))


# ---------------------------- im2col glue ------------------------------------
def _grouped_patches(x_nchw):
    """3x3/s2/p1 patches, grouped so one row = one output-H line of one image:
    (n, C, 16, 16) -> (n*8, 8*C*9).  The trailing reshape is a free row-major
    bitcast (collapses contiguous dims of the NHWC patch tensor)."""
    n, c = x_nchw.shape[0], x_nchw.shape[1]
    pat = lax.conv_general_dilated_patches(
        x_nchw, filter_shape=(3, 3), window_strides=(2, 2),
        padding=((1, 1), (1, 1)),
        dimension_numbers=("NCHW", "OIHW", "NHWC"))          # (n, Ho, Wo, C*9)
    return pat.reshape(n * CONV_HO, CONV_WO * c * 9)


# ---------------------------- parameters -------------------------------------
def _init(key, shape, scale=0.05):
    return scale * jax.random.normal(key, shape, dtype=jnp.float32)


def init_params(seed=0):
    """Canonical (PyTorch-convention) parameters."""
    keys = iter(jax.random.split(jax.random.PRNGKey(seed), 64))
    p = {}
    p["pose_w"] = _init(next(keys), (POSE_DIM, POSE_FEATS))
    p["pose_b"] = _init(next(keys), (1, POSE_FEATS))
    p["aud_conv_w"] = _init(next(keys), (CONV_OC, AUDIO_C, 3, 3))
    p["aud_conv_b"] = _init(next(keys), (1, CONV_OC))
    p["aud_lin_w"] = _init(next(keys), (CONV_FLAT, AUDIO_FEATS))
    p["aud_lin_b"] = _init(next(keys), (1, AUDIO_FEATS))
    p["map_conv_w"] = _init(next(keys), (CONV_OC, MAP_C, 3, 3))
    p["map_conv_b"] = _init(next(keys), (1, CONV_OC))
    p["rgb_conv_w"] = _init(next(keys), (CONV_OC, RGB_C, 3, 3))
    p["rgb_conv_b"] = _init(next(keys), (1, CONV_OC))
    p["vis_lin_w"] = _init(next(keys), (2 * CONV_FLAT, VIS_FEATS))
    p["vis_lin_b"] = _init(next(keys), (1, VIS_FEATS))
    p["fvp_w"] = _init(next(keys), (VIS_FEATS + POSE_FEATS, FUSE_OUT))       # (80, 32)
    p["fvp_b"] = _init(next(keys), (1, FUSE_OUT))
    p["fap_w"] = _init(next(keys), (AUDIO_FEATS + POSE_FEATS, FUSE_OUT))     # (48, 32)
    p["fap_b"] = _init(next(keys), (1, FUSE_OUT))
    p["fsa_w"] = _init(next(keys), (2 * FUSE_OUT, FUSE_OUT))                 # (64, 32)
    p["fsa_b"] = _init(next(keys), (1, FUSE_OUT))
    p["foa_w"] = _init(next(keys), (2 * FUSE_OUT, FUSE_OUT))
    p["foa_b"] = _init(next(keys), (1, FUSE_OUT))
    p["fsp_w"] = _init(next(keys), (2 * POSE_FEATS, FUSE_OUT))               # (32, 32)
    p["fsp_b"] = _init(next(keys), (1, FUSE_OUT))
    p["act_w"] = _init(next(keys), (1, ACTION_FEATS))
    p["act_b"] = _init(next(keys), (1, ACTION_FEATS))
    # GRU (single layer), gate order [r, z, n] like torch.nn.GRU, stored (In, 3H)
    p["gru_wi"] = _init(next(keys), (RNN_IN, 3 * HIDDEN))
    p["gru_wh"] = _init(next(keys), (HIDDEN, 3 * HIDDEN))
    p["gru_bi"] = _init(next(keys), (1, 3 * HIDDEN))
    p["gru_bh"] = _init(next(keys), (1, 3 * HIDDEN))
    return p


def _block_diag(m, reps):
    r, c = m.shape
    out = jnp.zeros((reps * r, reps * c), m.dtype)
    for g in range(reps):
        out = out.at[g * r:(g + 1) * r, g * c:(g + 1) * c].set(m)
    return out


def prepare_params(p):
    """One-time, numerically-equivalent relayout of the canonical params:
    - conv kernels become 8-way position-packed block-diagonal matmul weights
      (input col = wo*(C*9)+k, output col = wo*8+oc);
    - the downstream linear weights are row-permuted ONCE so the kernel's
      (ho, wo, oc)-major flatten matches PyTorch's NCHW .view(B, -1)."""
    q = {}
    q["pose_w"], q["pose_b"] = p["pose_w"], p["pose_b"]

    def conv_pack(conv_w, conv_b):
        km = conv_w.reshape(CONV_OC, -1).T                      # (C*9, 8), rows (c,kh,kw)
        return _block_diag(km, CONV_WO), jnp.tile(conv_b, (1, CONV_WO))  # (Wo*C*9, 64), (1, 64)

    q["aud_k_w"], q["aud_k_b"] = conv_pack(p["aud_conv_w"], p["aud_conv_b"])
    q["map_k_w"], q["map_k_b"] = conv_pack(p["map_conv_w"], p["map_conv_b"])
    q["rgb_k_w"], q["rgb_k_b"] = conv_pack(p["rgb_conv_w"], p["rgb_conv_b"])

    # kernel flatten col = ho*64 + wo*8 + oc  <->  canonical row oc*64 + ho*8 + wo
    perm = (jnp.arange(CONV_FLAT)
            .reshape(CONV_OC, CONV_HO, CONV_WO).transpose(1, 2, 0).reshape(-1))
    q["aud_lin_w"] = p["aud_lin_w"][perm]
    q["aud_lin_b"] = p["aud_lin_b"]
    q["vis_lin_w_map"] = p["vis_lin_w"][:CONV_FLAT][perm]
    q["vis_lin_w_rgb"] = p["vis_lin_w"][CONV_FLAT:][perm]
    q["vis_lin_b"] = p["vis_lin_b"]

    for k in ("fvp_w", "fvp_b", "fap_w", "fap_b", "fsa_w", "fsa_b",
              "foa_w", "foa_b", "fsp_w", "fsp_b", "act_w", "act_b",
              "gru_wi", "gru_wh", "gru_bi", "gru_bh"):
        q[k] = p[k]
    return jax.tree_util.tree_map(jnp.asarray, q)


# ---------------------------- PolicyNet forward ------------------------------
@jax.jit
def policy_net_forward(q, obs, rnn_hidden_states, prev_actions, masks):
    A = NUM_AGENTS
    bs = obs["prevNcurr_allAgnts_selfPose"].shape[0]

    # ---- batch-stack encoder inputs (XLA glue; weights are shared) ----------
    def stack_prevcurr(x):                 # (bs, 2, A, ...) -> (2*A*bs, ...) order (prev/curr, agent, b)
        axes = (1, 2, 0) + tuple(range(3, x.ndim))
        return jnp.transpose(x, axes).reshape((2 * A * bs,) + x.shape[3:])

    def stack_agents(x):                   # (bs, A, ...) -> (A*bs, ...) order (agent, b)
        axes = (1, 0) + tuple(range(2, x.ndim))
        return jnp.transpose(x, axes).reshape((A * bs,) + x.shape[2:])

    pose_self = stack_prevcurr(obs["prevNcurr_allAgnts_selfPose"])            # (4bs, 5)
    pose_other = stack_prevcurr(obs["prevNcurr_allAgnts_otherPose"])          # (4bs, 5)
    pose_stack = jnp.concatenate([pose_self, pose_other], axis=0)             # (8bs, 5)
    aud_stack = jnp.concatenate(
        [stack_prevcurr(obs["prevNcurr_allAgnts_selfAudio"]),
         stack_prevcurr(obs["prevNcurr_allAgnts_otherAudio"])], axis=0)       # (8bs, 2, 16, 16)
    aud_mask = jnp.concatenate(
        [stack_prevcurr(obs["prevNcurr_allAgnts_selfAudio_mask"]),
         stack_prevcurr(obs["prevNcurr_allAgnts_otherAudio_mask"])],
        axis=0)[:, None]                                                      # (8bs, 1)
    map_stack = stack_agents(obs["prev_allAgnts_map"])                        # (2bs, 2, 16, 16)
    rgb_stack = stack_agents(obs["prev_allAgnts_rgb"])                        # (2bs, 3, 16, 16)
    vis_mask = stack_agents(obs["prev_allAgnts_view_mask"])[:, None]          # (2bs, 1)

    n_aud = 4 * A * bs                    # 8*bs images
    n_vis = A * bs                        # 2*bs images

    aud_cols = _grouped_patches(aud_stack)                                    # (8bs*8, 144)
    map_cols = _grouped_patches(map_stack)                                    # (2bs*8, 144)
    rgb_cols = _grouped_patches(rgb_stack)                                    # (2bs*8, 216)

    # ============ kernel 1: conv stage (row-tiled, parallel) =================
    rows_v = n_vis * CONV_HO                              # vision conv rows
    tc = rows_v if rows_v <= CONV_ROW_TILE else CONV_ROW_TILE
    grid_c = pl.cdiv(rows_v, tc)
    flops_c = 2 * (4 * rows_v * AUD_KCOL * CONV_NCOL
                   + rows_v * MAP_KCOL * CONV_NCOL + rows_v * RGB_KCOL * CONV_NCOL)
    bytes_c = 4 * (aud_cols.size + map_cols.size + rgb_cols.size
                   + 6 * rows_v * CONV_NCOL
                   + q["aud_k_w"].size + q["map_k_w"].size + q["rgb_k_w"].size)

    aud_conv, map_conv, rgb_conv = pl.pallas_call(
        _conv_stage_kernel,
        grid=(grid_c,),
        in_specs=[
            _row_spec(4 * tc, AUD_KCOL),
            _row_spec(tc, MAP_KCOL),
            _row_spec(tc, RGB_KCOL),
            _full_spec(q["aud_k_w"]), _full_spec(q["aud_k_b"]),
            _full_spec(q["map_k_w"]), _full_spec(q["map_k_b"]),
            _full_spec(q["rgb_k_w"]), _full_spec(q["rgb_k_b"]),
        ],
        out_specs=[
            _row_spec(4 * tc, CONV_NCOL),
            _row_spec(tc, CONV_NCOL),
            _row_spec(tc, CONV_NCOL),
        ],
        out_shape=(
            jax.ShapeDtypeStruct((4 * rows_v, CONV_NCOL), jnp.float32),
            jax.ShapeDtypeStruct((rows_v, CONV_NCOL), jnp.float32),
            jax.ShapeDtypeStruct((rows_v, CONV_NCOL), jnp.float32),
        ),
        compiler_params=pltpu.CompilerParams(
            dimension_semantics=("parallel",), vmem_limit_bytes=VMEM_LIMIT),
        cost_estimate=pl.CostEstimate(flops=int(flops_c), transcendentals=0,
                                      bytes_accessed=int(bytes_c)),
    )(aud_cols, map_cols, rgb_cols,
      q["aud_k_w"], q["aud_k_b"], q["map_k_w"], q["map_k_b"],
      q["rgb_k_w"], q["rgb_k_b"])

    # (n*8, 64) -> (n, 512): free row-major bitcast reshape, (ho, wo, oc) order.
    aud_flat = aud_conv.reshape(n_aud, CONV_FLAT)
    map_flat = map_conv.reshape(n_vis, CONV_FLAT)
    rgb_flat = rgb_conv.reshape(n_vis, CONV_FLAT)

    # ============ kernel 2: encode + fuse stage (row-tiled, parallel) ========
    tv = n_vis if n_vis <= IMG_TILE else IMG_TILE
    grid_e = pl.cdiv(n_vis, tv)
    pose_vis = pose_self[:n_vis]          # prev-self pose rows, aligned with vision rows
    flops_e = 2 * (n_aud * (CONV_FLAT * AUDIO_FEATS + 48 * FUSE_OUT + POSE_DIM * POSE_FEATS)
                   + n_vis * (2 * CONV_FLAT * VIS_FEATS + 80 * FUSE_OUT + POSE_DIM * POSE_FEATS))
    bytes_e = 4 * (n_aud * (CONV_FLAT + POSE_DIM + 1 + FUSE_OUT)
                   + n_vis * (2 * CONV_FLAT + POSE_DIM + 1 + FUSE_OUT)
                   + q["aud_lin_w"].size + q["vis_lin_w_map"].size + q["vis_lin_w_rgb"].size)

    fap_f, fvp_f = pl.pallas_call(
        _encode_fuse_kernel,
        grid=(grid_e,),
        in_specs=[
            _row_spec(4 * tv, CONV_FLAT),          # aud_flat
            _row_spec(4 * tv, 1),                  # aud_mask
            _row_spec(4 * tv, POSE_DIM),           # pose_stack (all 8bs rows)
            _row_spec(tv, CONV_FLAT),              # map_flat
            _row_spec(tv, CONV_FLAT),              # rgb_flat
            _row_spec(tv, 1),                      # vis_mask
            _row_spec(tv, POSE_DIM),               # prev-self pose (vision rows)
            _full_spec(q["pose_w"]), _full_spec(q["pose_b"]),
            _full_spec(q["aud_lin_w"]), _full_spec(q["aud_lin_b"]),
            _full_spec(q["vis_lin_w_map"]), _full_spec(q["vis_lin_w_rgb"]),
            _full_spec(q["vis_lin_b"]),
            _full_spec(q["fap_w"]), _full_spec(q["fap_b"]),
            _full_spec(q["fvp_w"]), _full_spec(q["fvp_b"]),
        ],
        out_specs=[
            _row_spec(4 * tv, FUSE_OUT),
            _row_spec(tv, FUSE_OUT),
        ],
        out_shape=(
            jax.ShapeDtypeStruct((n_aud, FUSE_OUT), jnp.float32),
            jax.ShapeDtypeStruct((n_vis, FUSE_OUT), jnp.float32),
        ),
        compiler_params=pltpu.CompilerParams(
            dimension_semantics=("parallel",), vmem_limit_bytes=VMEM_LIMIT),
        cost_estimate=pl.CostEstimate(flops=int(flops_e), transcendentals=0,
                                      bytes_accessed=int(bytes_e)),
    )(aud_flat, aud_mask, pose_stack, map_flat, rgb_flat, vis_mask, pose_vis,
      q["pose_w"], q["pose_b"], q["aud_lin_w"], q["aud_lin_b"],
      q["vis_lin_w_map"], q["vis_lin_w_rgb"], q["vis_lin_b"],
      q["fap_w"], q["fap_b"], q["fvp_w"], q["fvp_b"])

    # ============ kernel 3: prev/curr fuses + action + masked GRU ============
    tb = bs if bs <= BATCH_TILE else BATCH_TILE
    grid_t = pl.cdiv(bs, tb)

    act_in = prev_actions.astype(jnp.float32) * masks                 # (bs, 1)
    h0 = rnn_hidden_states[0]                                         # (bs, HIDDEN)
    # Free reshapes (leading-dim splits) exposing (kind, agent, batch) axes.
    fvp3 = fvp_f.reshape(A, bs, FUSE_OUT)
    fap4 = fap_f.reshape(4, A, bs, FUSE_OUT)   # kinds: self_prev, self_curr, other_prev, other_curr
    pose_sc = pose_self.reshape(2, A, bs, POSE_DIM)                    # self pose, [prev, curr]

    flops_t = 2 * bs * (RNN_IN * 3 * HIDDEN + HIDDEN * 3 * HIDDEN
                        + A * (2 * 64 * FUSE_OUT + 32 * FUSE_OUT + 2 * POSE_DIM * POSE_FEATS))
    h_new = pl.pallas_call(
        _tail_gru_kernel,
        grid=(grid_t,),
        in_specs=[
            pl.BlockSpec((A, tb, FUSE_OUT), lambda i: (0, i, 0)),
            pl.BlockSpec((4, A, tb, FUSE_OUT), lambda i: (0, 0, i, 0)),
            pl.BlockSpec((2, A, tb, POSE_DIM), lambda i: (0, 0, i, 0)),
            _row_spec(tb, 1),                  # act_in
            _row_spec(tb, HIDDEN),             # h0 (aliased to output)
            _row_spec(tb, 1),                  # masks
            _full_spec(q["pose_w"]), _full_spec(q["pose_b"]),
            _full_spec(q["act_w"]), _full_spec(q["act_b"]),
            _full_spec(q["fsa_w"]), _full_spec(q["fsa_b"]),
            _full_spec(q["foa_w"]), _full_spec(q["foa_b"]),
            _full_spec(q["fsp_w"]), _full_spec(q["fsp_b"]),
            _full_spec(q["gru_wi"]), _full_spec(q["gru_wh"]),
            _full_spec(q["gru_bi"]), _full_spec(q["gru_bh"]),
        ],
        out_specs=_row_spec(tb, HIDDEN),
        out_shape=jax.ShapeDtypeStruct((bs, HIDDEN), jnp.float32),
        input_output_aliases={4: 0},           # hidden state updated in place
        compiler_params=pltpu.CompilerParams(
            dimension_semantics=("parallel",), vmem_limit_bytes=VMEM_LIMIT),
        cost_estimate=pl.CostEstimate(flops=int(flops_t),
                                      transcendentals=int(5 * bs * HIDDEN),
                                      bytes_accessed=int(4 * bs * (RNN_IN + 4 * HIDDEN))),
    )(fvp3, fap4, pose_sc, act_in, h0, masks,
      q["pose_w"], q["pose_b"], q["act_w"], q["act_b"],
      q["fsa_w"], q["fsa_b"], q["foa_w"], q["foa_b"], q["fsp_w"], q["fsp_b"],
      q["gru_wi"], q["gru_wh"], q["gru_bi"], q["gru_bh"])

    rnn_feats_new = h_new
    rnn_hidden_states_new = h_new[None]                                # (1, bs, HIDDEN)
    return rnn_feats_new, rnn_hidden_states_new


# ---------------------------- demo -------------------------------------------
if __name__ == "__main__":
    bs = 2
    key = jax.random.PRNGKey(0)
    ks = iter(jax.random.split(key, 32))

    obs = {
        "prevNcurr_allAgnts_selfPose":
            jax.random.normal(next(ks), (bs, 2, NUM_AGENTS, POSE_DIM), jnp.float32),
        "prevNcurr_allAgnts_otherPose":
            jax.random.normal(next(ks), (bs, 2, NUM_AGENTS, POSE_DIM), jnp.float32),
        "prev_allAgnts_view_mask":
            (jax.random.uniform(next(ks), (bs, NUM_AGENTS)) > 0.3).astype(jnp.float32),
        "prev_allAgnts_map":
            jax.random.normal(next(ks), (bs, NUM_AGENTS, MAP_C, VIS_H, VIS_W), jnp.float32),
        "prev_allAgnts_rgb":
            jax.random.normal(next(ks), (bs, NUM_AGENTS, RGB_C, VIS_H, VIS_W), jnp.float32),
        "prevNcurr_allAgnts_selfAudio_mask":
            (jax.random.uniform(next(ks), (bs, 2, NUM_AGENTS)) > 0.3).astype(jnp.float32),
        "prevNcurr_allAgnts_selfAudio":
            jax.random.normal(next(ks), (bs, 2, NUM_AGENTS, AUDIO_C, AUDIO_H, AUDIO_W), jnp.float32),
        "prevNcurr_allAgnts_otherAudio_mask":
            (jax.random.uniform(next(ks), (bs, 2, NUM_AGENTS)) > 0.3).astype(jnp.float32),
        "prevNcurr_allAgnts_otherAudio":
            jax.random.normal(next(ks), (bs, 2, NUM_AGENTS, AUDIO_C, AUDIO_H, AUDIO_W), jnp.float32),
    }
    rnn_hidden_states = jax.random.normal(next(ks), (1, bs, HIDDEN), jnp.float32)
    prev_actions = jax.random.randint(next(ks), (bs, 1), 0, 4).astype(jnp.int32)
    masks = (jax.random.uniform(next(ks), (bs, 1)) > 0.2).astype(jnp.float32)

    params = prepare_params(init_params(seed=0))

    rnn_feats_new, rnn_hidden_new = policy_net_forward(
        params, obs, rnn_hidden_states, prev_actions, masks)
    jax.block_until_ready((rnn_feats_new, rnn_hidden_new))

    assert rnn_feats_new.shape == (bs, HIDDEN)
    assert rnn_hidden_new.shape == (1, bs, HIDDEN)
    assert not bool(jnp.isnan(rnn_feats_new).any())
    print("KERNEL_OK")
</pallas_src>

<mosaic_0001>
module attributes {stable_mosaic.version = 11 : i64} {
  func.func @_conv_stage_kernel(%arg0: i32, %arg1: memref<128x144xf32, #tpu.memory_space<vmem>>, %arg2: memref<32x144xf32, #tpu.memory_space<vmem>>, %arg3: memref<32x216xf32, #tpu.memory_space<vmem>>, %arg4: memref<144x64xf32, #tpu.memory_space<vmem>>, %arg5: memref<1x64xf32, #tpu.memory_space<vmem>>, %arg6: memref<144x64xf32, #tpu.memory_space<vmem>>, %arg7: memref<1x64xf32, #tpu.memory_space<vmem>>, %arg8: memref<216x64xf32, #tpu.memory_space<vmem>>, %arg9: memref<1x64xf32, #tpu.memory_space<vmem>>, %arg10: memref<128x64xf32, #tpu.memory_space<vmem>>, %arg11: memref<32x64xf32, #tpu.memory_space<vmem>>, %arg12: memref<32x64xf32, #tpu.memory_space<vmem>>) attributes {dimension_semantics = [#tpu.dimension_semantics<parallel>], iteration_bounds = array<i64: 1>, scalar_prefetch = 0 : i64, scratch_operands = 0 : i64, tpu.core_type = #tpu.core_type<tc>, window_params = [{transform_indices = @transform_0, window_bounds = array<i64: 128, 144>}, {transform_indices = @transform_1, window_bounds = array<i64: 32, 144>}, {transform_indices = @transform_2, window_bounds = array<i64: 32, 216>}, {pipeline_mode = #tpu.pipeline_mode<synchronous>, transform_indices = @transform_3, window_bounds = array<i64: 144, 64>}, {pipeline_mode = #tpu.pipeline_mode<synchronous>, transform_indices = @transform_4, window_bounds = array<i64: 1, 64>}, {pipeline_mode = #tpu.pipeline_mode<synchronous>, transform_indices = @transform_5, window_bounds = array<i64: 144, 64>}, {pipeline_mode = #tpu.pipeline_mode<synchronous>, transform_indices = @transform_6, window_bounds = array<i64: 1, 64>}, {pipeline_mode = #tpu.pipeline_mode<synchronous>, transform_indices = @transform_7, window_bounds = array<i64: 216, 64>}, {pipeline_mode = #tpu.pipeline_mode<synchronous>, transform_indices = @transform_8, window_bounds = array<i64: 1, 64>}, {transform_indices = @transform_9, window_bounds = array<i64: 128, 64>}, {transform_indices = @transform_10, window_bounds = array<i64: 32, 64>}, {transform_indices = @transform_11, window_bounds = array<i64: 32, 64>}]} {
    %c0 = arith.constant 0 : index
    %c0_0 = arith.constant 0 : index
    %0 = vector.load %arg1[%c0, %c0_0] : memref<128x144xf32, #tpu.memory_space<vmem>>, vector<128x144xf32>
    %c0_1 = arith.constant 0 : index
    %c0_2 = arith.constant 0 : index
    %1 = vector.load %arg4[%c0_1, %c0_2] : memref<144x64xf32, #tpu.memory_space<vmem>>, vector<144x64xf32>
    %c0_3 = arith.constant 0 : index
    %c0_4 = arith.constant 0 : index
    %2 = vector.load %arg5[%c0_3, %c0_4] : memref<1x64xf32, #tpu.memory_space<vmem>>, vector<1x64xf32>
    %cst = arith.constant dense<0.000000e+00> : vector<128x64xf32>
    %3 = tpu.matmul %0, %1, %cst {dimension_numbers = #tpu.dot_dimension_numbers<[1], [0], [0], [1], [0, 0, 1, 1], [], []>} : vector<128x144xf32>, vector<144x64xf32>, vector<128x64xf32> -> vector<128x64xf32>
    %4 = vector.broadcast %2 : vector<1x64xf32> to vector<128x64xf32>
    %5 = arith.addf %3, %4 : vector<128x64xf32>
    %cst_5 = arith.constant 0.000000e+00 : f32
    %6 = vector.broadcast %cst_5 : f32 to vector<128x64xf32>
    %7 = arith.maximumf %5, %6 : vector<128x64xf32>
    %c0_6 = arith.constant 0 : index
    %c0_7 = arith.constant 0 : index
    %8 = vector.load %arg10[%c0_6, %c0_7] : memref<128x64xf32, #tpu.memory_space<vmem>>, vector<128x64xf32>
    tpu.vector_store %arg10[%c0_6, %c0_7], %7 {strides = array<i32>} : memref<128x64xf32, #tpu.memory_space<vmem>>, vector<128x64xf32>,
    %c0_8 = arith.constant 0 : index
    %c0_9 = arith.constant 0 : index
    %9 = vector.load %arg2[%c0_8, %c0_9] : memref<32x144xf32, #tpu.memory_space<vmem>>, vector<32x144xf32>
    %c0_10 = arith.constant 0 : index
    %c0_11 = arith.constant 0 : index
    %10 = vector.load %arg6[%c0_10, %c0_11] : memref<144x64xf32, #tpu.memory_space<vmem>>, vector<144x64xf32>
    %c0_12 = arith.constant 0 : index
    %c0_13 = arith.constant 0 : index
    %11 = vector.load %arg7[%c0_12, %c0_13] : memref<1x64xf32, #tpu.memory_space<vmem>>, vector<1x64xf32>
    %cst_14 = arith.constant dense<0.000000e+00> : vector<32x64xf32>
    %12 = tpu.matmul %9, %10, %cst_14 {dimension_numbers = #tpu.dot_dimension_numbers<[1], [0], [0], [1], [0, 0, 1, 1], [], []>} : vector<32x144xf32>, vector<144x64xf32>, vector<32x64xf32> -> vector<32x64xf32>
    %13 = vector.broadcast %11 : vector<1x64xf32> to vector<32x64xf32>
    %14 = arith.addf %12, %13 : vector<32x64xf32>
    %cst_15 = arith.constant 0.000000e+00 : f32
    %15 = vector.broadcast %cst_15 : f32 to vector<32x64xf32>
    %16 = arith.maximumf %14, %15 : vector<32x64xf32>
    %c0_16 = arith.constant 0 : index
    %c0_17 = arith.constant 0 : index
    %17 = vector.load %arg11[%c0_16, %c0_17] : memref<32x64xf32, #tpu.memory_space<vmem>>, vector<32x64xf32>
    tpu.vector_store %arg11[%c0_16, %c0_17], %16 {strides = array<i32>} : memref<32x64xf32, #tpu.memory_space<vmem>>, vector<32x64xf32>,
    %c0_18 = arith.constant 0 : index
    %c0_19 = arith.constant 0 : index
    %18 = vector.load %arg3[%c0_18, %c0_19] : memref<32x216xf32, #tpu.memory_space<vmem>>, vector<32x216xf32>
    %c0_20 = arith.constant 0 : index
    %c0_21 = arith.constant 0 : index
    %19 = vector.load %arg8[%c0_20, %c0_21] : memref<216x64xf32, #tpu.memory_space<vmem>>, vector<216x64xf32>
    %c0_22 = arith.constant 0 : index
    %c0_23 = arith.constant 0 : index
    %20 = vector.load %arg9[%c0_22, %c0_23] : memref<1x64xf32, #tpu.memory_space<vmem>>, vector<1x64xf32>
    %cst_24 = arith.constant dense<0.000000e+00> : vector<32x64xf32>
    %21 = tpu.matmul %18, %19, %cst_24 {dimension_numbers = #tpu.dot_dimension_numbers<[1], [0], [0], [1], [0, 0, 1, 1], [], []>} : vector<32x216xf32>, vector<216x64xf32>, vector<32x64xf32> -> vector<32x64xf32>
    %22 = vector.broadcast %20 : vector<1x64xf32> to vector<32x64xf32>
    %23 = arith.addf %21, %22 : vector<32x64xf32>
    %cst_25 = arith.constant 0.000000e+00 : f32
    %24 = vector.broadcast %cst_25 : f32 to vector<32x64xf32>
    %25 = arith.maximumf %23, %24 : vector<32x64xf32>
    %c0_26 = arith.constant 0 : index
    %c0_27 = arith.constant 0 : index
    %26 = vector.load %arg12[%c0_26, %c0_27] : memref<32x64xf32, #tpu.memory_space<vmem>>, vector<32x64xf32>
    tpu.vector_store %arg12[%c0_26, %c0_27], %25 {strides = array<i32>} : memref<32x64xf32, #tpu.memory_space<vmem>>, vector<32x64xf32>,
    return
  }
  func.func @transform_0(%arg0: i32) -> (i32, i32) {
    %c0_i32 = arith.constant 0 : i32
    %c0_i32_0 = arith.constant 0 : i32
    return %arg0, %c0_i32 : i32, i32
  }
  func.func @transform_1(%arg0: i32) -> (i32, i32) {
    %c0_i32 = arith.constant 0 : i32
    %c0_i32_0 = arith.constant 0 : i32
    return %arg0, %c0_i32 : i32, i32
  }
  func.func @transform_2(%arg0: i32) -> (i32, i32) {
    %c0_i32 = arith.constant 0 : i32
    %c0_i32_0 = arith.constant 0 : i32
    return %arg0, %c0_i32 : i32, i32
  }
  func.func @transform_3(%arg0: i32) -> (i32, i32) {
    %c0_i32 = arith.constant 0 : i32
    %c0_i32_0 = arith.constant 0 : i32
    %c0_i32_1 = arith.constant 0 : i32
    return %c0_i32, %c0_i32_0 : i32, i32
  }
  func.func @transform_4(%arg0: i32) -> (i32, i32) {
    %c0_i32 = arith.constant 0 : i32
    %c0_i32_0 = arith.constant 0 : i32
    %c0_i32_1 = arith.constant 0 : i32
    return %c0_i32, %c0_i32_0 : i32, i32
  }
  func.func @transform_5(%arg0: i32) -> (i32, i32) {
    %c0_i32 = arith.constant 0 : i32
    %c0_i32_0 = arith.constant 0 : i32
    %c0_i32_1 = arith.constant 0 : i32
    return %c0_i32, %c0_i32_0 : i32, i32
  }
  func.func @transform_6(%arg0: i32) -> (i32, i32) {
    %c0_i32 = arith.constant 0 : i32
    %c0_i32_0 = arith.constant 0 : i32
    %c0_i32_1 = arith.constant 0 : i32
    return %c0_i32, %c0_i32_0 : i32, i32
  }
  func.func @transform_7(%arg0: i32) -> (i32, i32) {
    %c0_i32 = arith.constant 0 : i32
    %c0_i32_0 = arith.constant 0 : i32
    %c0_i32_1 = arith.constant 0 : i32
    return %c0_i32, %c0_i32_0 : i32, i32
  }
  func.func @transform_8(%arg0: i32) -> (i32, i32) {
    %c0_i32 = arith.constant 0 : i32
    %c0_i32_0 = arith.constant 0 : i32
    %c0_i32_1 = arith.constant 0 : i32
    return %c0_i32, %c0_i32_0 : i32, i32
  }
  func.func @transform_9(%arg0: i32) -> (i32, i32) {
    %c0_i32 = arith.constant 0 : i32
    %c0_i32_0 = arith.constant 0 : i32
    return %arg0, %c0_i32 : i32, i32
  }
  func.func @transform_10(%arg0: i32) -> (i32, i32) {
    %c0_i32 = arith.constant 0 : i32
    %c0_i32_0 = arith.constant 0 : i32
    return %arg0, %c0_i32 : i32, i32
  }
  func.func @transform_11(%arg0: i32) -> (i32, i32) {
    %c0_i32 = arith.constant 0 : i32
    %c0_i32_0 = arith.constant 0 : i32
    return %arg0, %c0_i32 : i32, i32
  }
}

module attributes {stable_mosaic.version = 11 : i64} {
  func.func @_encode_fuse_kernel(%arg0: i32, %arg1: memref<16x512xf32, #tpu.memory_space<vmem>>, %arg2: memref<16x1xf32, #tpu.memory_space<vmem>>, %arg3: memref<16x5xf32, #tpu.memory_space<vmem>>, %arg4: memref<4x512xf32, #tpu.memory_space<vmem>>, %arg5: memref<4x512xf32, #tpu.memory_space<vmem>>, %arg6: memref<4x1xf32, #tpu.memory_space<vmem>>, %arg7: memref<4x5xf32, #tpu.memory_space<vmem>>, %arg8: memref<5x16xf32, #tpu.memory_space<vmem>>, %arg9: memref<1x16xf32, #tpu.memory_space<vmem>>, %arg10: memref<512x32xf32, #tpu.memory_space<vmem>>, %arg11: memref<1x32xf32, #tpu.memory_space<vmem>>, %arg12: memref<512x64xf32, #tpu.memory_space<vmem>>, %arg13: memref<512x64xf32, #tpu.memory_space<vmem>>, %arg14: memref<1x64xf32, #tpu.memory_space<vmem>>, %arg15: memref<48x32xf32, #tpu.memory_space<vmem>>, %arg16: memref<1x32xf32, #tpu.memory_space<vmem>>, %arg17: memref<80x32xf32, #tpu.memory_space<vmem>>, %arg18: memref<1x32xf32, #tpu.memory_space<vmem>>, %arg19: memref<16x32xf32, #tpu.memory_space<vmem>>, %arg20: memref<4x32xf32, #tpu.memory_space<vmem>>) attributes {dimension_semantics = [#tpu.dimension_semantics<parallel>], iteration_bounds = array<i64: 1>, scalar_prefetch = 0 : i64, scratch_operands = 0 : i64, tpu.core_type = #tpu.core_type<tc>, window_params = [{transform_indices = @transform_0, window_bounds = array<i64: 16, 512>}, {transform_indices = @transform_1, window_bounds = array<i64: 16, 1>}, {transform_indices = @transform_2, window_bounds = array<i64: 16, 5>}, {transform_indices = @transform_3, window_bounds = array<i64: 4, 512>}, {transform_indices = @transform_4, window_bounds = array<i64: 4, 512>}, {transform_indices = @transform_5, window_bounds = array<i64: 4, 1>}, {transform_indices = @transform_6, window_bounds = array<i64: 4, 5>}, {pipeline_mode = #tpu.pipeline_mode<synchronous>, transform_indices = @transform_7, window_bounds = array<i64: 5, 16>}, {pipeline_mode = #tpu.pipeline_mode<synchronous>, transform_indices = @transform_8, window_bounds = array<i64: 1, 16>}, {pipeline_mode = #tpu.pipeline_mode<synchronous>, transform_indices = @transform_9, window_bounds = array<i64: 512, 32>}, {pipeline_mode = #tpu.pipeline_mode<synchronous>, transform_indices = @transform_10, window_bounds = array<i64: 1, 32>}, {pipeline_mode = #tpu.pipeline_mode<synchronous>, transform_indices = @transform_11, window_bounds = array<i64: 512, 64>}, {pipeline_mode = #tpu.pipeline_mode<synchronous>, transform_indices = @transform_12, window_bounds = array<i64: 512, 64>}, {pipeline_mode = #tpu.pipeline_mode<synchronous>, transform_indices = @transform_13, window_bounds = array<i64: 1, 64>}, {pipeline_mode = #tpu.pipeline_mode<synchronous>, transform_indices = @transform_14, window_bounds = array<i64: 48, 32>}, {pipeline_mode = #tpu.pipeline_mode<synchronous>, transform_indices = @transform_15, window_bounds = array<i64: 1, 32>}, {pipeline_mode = #tpu.pipeline_mode<synchronous>, transform_indices = @transform_16, window_bounds = array<i64: 80, 32>}, {pipeline_mode = #tpu.pipeline_mode<synchronous>, transform_indices = @transform_17, window_bounds = array<i64: 1, 32>}, {transform_indices = @transform_18, window_bounds = array<i64: 16, 32>}, {transform_indices = @transform_19, window_bounds = array<i64: 4, 32>}]} {
    %c0 = arith.constant 0 : index
    %c0_0 = arith.constant 0 : index
    %0 = vector.load %arg1[%c0, %c0_0] : memref<16x512xf32, #tpu.memory_space<vmem>>, vector<16x512xf32>
    %c0_1 = arith.constant 0 : index
    %c0_2 = arith.constant 0 : index
    %1 = vector.load %arg10[%c0_1, %c0_2] : memref<512x32xf32, #tpu.memory_space<vmem>>, vector<512x32xf32>
    %c0_3 = arith.constant 0 : index
    %c0_4 = arith.constant 0 : index
    %2 = vector.load %arg11[%c0_3, %c0_4] : memref<1x32xf32, #tpu.memory_space<vmem>>, vector<1x32xf32>
    %cst = arith.constant dense<0.000000e+00> : vector<16x32xf32>
    %3 = tpu.matmul %0, %1, %cst {dimension_numbers = #tpu.dot_dimension_numbers<[1], [0], [0], [1], [0, 0, 1, 1], [], []>} : vector<16x512xf32>, vector<512x32xf32>, vector<16x32xf32> -> vector<16x32xf32>
    %4 = vector.broadcast %2 : vector<1x32xf32> to vector<16x32xf32>
    %5 = arith.addf %3, %4 : vector<16x32xf32>
    %cst_5 = arith.constant 0.000000e+00 : f32
    %6 = vector.broadcast %cst_5 : f32 to vector<16x32xf32>
    %7 = arith.maximumf %5, %6 : vector<16x32xf32>
    %c0_6 = arith.constant 0 : index
    %c0_7 = arith.constant 0 : index
    %8 = vector.load %arg2[%c0_6, %c0_7] : memref<16x1xf32, #tpu.memory_space<vmem>>, vector<16x1xf32>
    %9 = vector.broadcast %8 : vector<16x1xf32> to vector<16x32xf32>
    %10 = arith.mulf %7, %9 : vector<16x32xf32>
    %c0_8 = arith.constant 0 : index
    %c0_9 = arith.constant 0 : index
    %11 = vector.load %arg3[%c0_8, %c0_9] : memref<16x5xf32, #tpu.memory_space<vmem>>, vector<16x5xf32>
    %c0_10 = arith.constant 0 : index
    %c0_11 = arith.constant 0 : index
    %12 = vector.load %arg8[%c0_10, %c0_11] : memref<5x16xf32, #tpu.memory_space<vmem>>, vector<5x16xf32>
    %c0_12 = arith.constant 0 : index
    %c0_13 = arith.constant 0 : index
    %13 = vector.load %arg9[%c0_12, %c0_13] : memref<1x16xf32, #tpu.memory_space<vmem>>, vector<1x16xf32>
    %14 = vector.extract_strided_slice %11 {offsets = [0, 0], sizes = [16, 1], strides = [1, 1]} : vector<16x5xf32> to vector<16x1xf32>
    %15 = vector.extract_strided_slice %12 {offsets = [0, 0], sizes = [1, 16], strides = [1, 1]} : vector<5x16xf32> to vector<1x16xf32>
    %16 = vector.broadcast %14 : vector<16x1xf32> to vector<16x16xf32>
    %17 = vector.broadcast %15 : vector<1x16xf32> to vector<16x16xf32>
    %18 = arith.mulf %16, %17 : vector<16x16xf32>
    %19 = vector.broadcast %13 : vector<1x16xf32> to vector<16x16xf32>
    %20 = arith.addf %19, %18 : vector<16x16xf32>
    %21 = vector.extract_strided_slice %11 {offsets = [0, 1], sizes = [16, 1], strides = [1, 1]} : vector<16x5xf32> to vector<16x1xf32>
    %22 = vector.extract_strided_slice %12 {offsets = [1, 0], sizes = [1, 16], strides = [1, 1]} : vector<5x16xf32> to vector<1x16xf32>
    %23 = vector.broadcast %21 : vector<16x1xf32> to vector<16x16xf32>
    %24 = vector.broadcast %22 : vector<1x16xf32> to vector<16x16xf32>
    %25 = arith.mulf %23, %24 : vector<16x16xf32>
    %26 = arith.addf %20, %25 : vector<16x16xf32>
    %27 = vector.extract_strided_slice %11 {offsets = [0, 2], sizes = [16, 1], strides = [1, 1]} : vector<16x5xf32> to vector<16x1xf32>
    %28 = vector.extract_strided_slice %12 {offsets = [2, 0], sizes = [1, 16], strides = [1, 1]} : vector<5x16xf32> to vector<1x16xf32>
    %29 = vector.broadcast %27 : vector<16x1xf32> to vector<16x16xf32>
    %30 = vector.broadcast %28 : vector<1x16xf32> to vector<16x16xf32>
    %31 = arith.mulf %29, %30 : vector<16x16xf32>
    %32 = arith.addf %26, %31 : vector<16x16xf32>
    %33 = vector.extract_strided_slice %11 {offsets = [0, 3], sizes = [16, 1], strides = [1, 1]} : vector<16x5xf32> to vector<16x1xf32>
    %34 = vector.extract_strided_slice %12 {offsets = [3, 0], sizes = [1, 16], strides = [1, 1]} : vector<5x16xf32> to vector<1x16xf32>
    %35 = vector.broadcast %33 : vector<16x1xf32> to vector<16x16xf32>
    %36 = vector.broadcast %34 : vector<1x16xf32> to vector<16x16xf32>
    %37 = arith.mulf %35, %36 : vector<16x16xf32>
    %38 = arith.addf %32, %37 : vector<16x16xf32>
    %39 = vector.extract_strided_slice %11 {offsets = [0, 4], sizes = [16, 1], strides = [1, 1]} : vector<16x5xf32> to vector<16x1xf32>
    %40 = vector.extract_strided_slice %12 {offsets = [4, 0], sizes = [1, 16], strides = [1, 1]} : vector<5x16xf32> to vector<1x16xf32>
    %41 = vector.broadcast %39 : vector<16x1xf32> to vector<16x16xf32>
    %42 = vector.broadcast %40 : vector<1x16xf32> to vector<16x16xf32>
    %43 = arith.mulf %41, %42 : vector<16x16xf32>
    %44 = arith.addf %38, %43 : vector<16x16xf32>
    %cst_14 = arith.constant 0.000000e+00 : f32
    %45 = vector.broadcast %cst_14 : f32 to vector<16x16xf32>
    %46 = arith.maximumf %44, %45 : vector<16x16xf32>
    %47 = tpu.concatenate %10, %46 in 1 : vector<16x32xf32>, vector<16x16xf32> -> vector<16x48xf32>
    %c0_15 = arith.constant 0 : index
    %c0_16 = arith.constant 0 : index
    %48 = vector.load %arg15[%c0_15, %c0_16] : memref<48x32xf32, #tpu.memory_space<vmem>>, vector<48x32xf32>
    %c0_17 = arith.constant 0 : index
    %c0_18 = arith.constant 0 : index
    %49 = vector.load %arg16[%c0_17, %c0_18] : memref<1x32xf32, #tpu.memory_space<vmem>>, vector<1x32xf32>
    %cst_19 = arith.constant dense<0.000000e+00> : vector<16x32xf32>
    %50 = tpu.matmul %47, %48, %cst_19 {dimension_numbers = #tpu.dot_dimension_numbers<[1], [0], [0], [1], [0, 0, 1, 1], [], []>} : vector<16x48xf32>, vector<48x32xf32>, vector<16x32xf32> -> vector<16x32xf32>
    %51 = vector.broadcast %49 : vector<1x32xf32> to vector<16x32xf32>
    %52 = arith.addf %50, %51 : vector<16x32xf32>
    %cst_20 = arith.constant 0.000000e+00 : f32
    %53 = vector.broadcast %cst_20 : f32 to vector<16x32xf32>
    %54 = arith.maximumf %52, %53 : vector<16x32xf32>
    %c0_21 = arith.constant 0 : index
    %c0_22 = arith.constant 0 : index
    %55 = vector.load %arg19[%c0_21, %c0_22] : memref<16x32xf32, #tpu.memory_space<vmem>>, vector<16x32xf32>
    tpu.vector_store %arg19[%c0_21, %c0_22], %54 {strides = array<i32>} : memref<16x32xf32, #tpu.memory_space<vmem>>, vector<16x32xf32>,
    %c0_23 = arith.constant 0 : index
    %c0_24 = arith.constant 0 : index
    %56 = vector.load %arg4[%c0_23, %c0_24] : memref<4x512xf32, #tpu.memory_space<vmem>>, vector<4x512xf32>
    %c0_25 = arith.constant 0 : index
    %c0_26 = arith.constant 0 : index
    %57 = vector.load %arg12[%c0_25, %c0_26] : memref<512x64xf32, #tpu.memory_space<vmem>>, vector<512x64xf32>
    %cst_27 = arith.constant dense<0.000000e+00> : vector<4x64xf32>
    %58 = tpu.matmul %56, %57, %cst_27 {dimension_numbers = #tpu.dot_dimension_numbers<[1], [0], [0], [1], [0, 0, 1, 1], [], []>} : vector<4x512xf32>, vector<512x64xf32>, vector<4x64xf32> -> vector<4x64xf32>
    %c0_28 = arith.constant 0 : index
    %c0_29 = arith.constant 0 : index
    %59 = vector.load %arg5[%c0_28, %c0_29] : memref<4x512xf32, #tpu.memory_space<vmem>>, vector<4x512xf32>
    %c0_30 = arith.constant 0 : index
    %c0_31 = arith.constant 0 : index
    %60 = vector.load %arg13[%c0_30, %c0_31] : memref<512x64xf32, #tpu.memory_space<vmem>>, vector<512x64xf32>
    %cst_32 = arith.constant dense<0.000000e+00> : vector<4x64xf32>
    %61 = tpu.matmul %59, %60, %cst_32 {dimension_numbers = #tpu.dot_dimension_numbers<[1], [0], [0], [1], [0, 0, 1, 1], [], []>} : vector<4x512xf32>, vector<512x64xf32>, vector<4x64xf32> -> vector<4x64xf32>
    %62 = arith.addf %58, %61 : vector<4x64xf32>
    %c0_33 = arith.constant 0 : index
    %c0_34 = arith.constant 0 : index
    %63 = vector.load %arg14[%c0_33, %c0_34] : memref<1x64xf32, #tpu.memory_space<vmem>>, vector<1x64xf32>
    %64 = vector.broadcast %63 : vector<1x64xf32> to vector<4x64xf32>
    %65 = arith.addf %62, %64 : vector<4x64xf32>
    %cst_35 = arith.constant 0.000000e+00 : f32
    %66 = vector.broadcast %cst_35 : f32 to vector<4x64xf32>
    %67 = arith.maximumf %65, %66 : vector<4x64xf32>
    %c0_36 = arith.constant 0 : index
    %c0_37 = arith.constant 0 : index
    %68 = vector.load %arg6[%c0_36, %c0_37] : memref<4x1xf32, #tpu.memory_space<vmem>>, vector<4x1xf32>
    %69 = vector.broadcast %68 : vector<4x1xf32> to vector<4x64xf32>
    %70 = arith.mulf %67, %69 : vector<4x64xf32>
    %c0_38 = arith.constant 0 : index
    %c0_39 = arith.constant 0 : index
    %71 = vector.load %arg7[%c0_38, %c0_39] : memref<4x5xf32, #tpu.memory_space<vmem>>, vector<4x5xf32>
    %c0_40 = arith.constant 0 : index
    %c0_41 = arith.constant 0 : index
    %72 = vector.load %arg8[%c0_40, %c0_41] : memref<5x16xf32, #tpu.memory_space<vmem>>, vector<5x16xf32>
    %c0_42 = arith.constant 0 : index
    %c0_43 = arith.constant 0 : index
    %73 = vector.load %arg9[%c0_42, %c0_43] : memref<1x16xf32, #tpu.memory_space<vmem>>, vector<1x16xf32>
    %74 = vector.extract_strided_slice %71 {offsets = [0, 0], sizes = [4, 1], strides = [1, 1]} : vector<4x5xf32> to vector<4x1xf32>
    %75 = vector.extract_strided_slice %72 {offsets = [0, 0], sizes = [1, 16], strides = [1, 1]} : vector<5x16xf32> to vector<1x16xf32>
    %76 = vector.broadcast %74 : vector<4x1xf32> to vector<4x16xf32>
    %77 = vector.broadcast %75 : vector<1x16xf32> to vector<4x16xf32>
    %78 = arith.mulf %76, %77 : vector<4x16xf32>
    %79 = vector.broadcast %73 : vector<1x16xf32> to vector<4x16xf32>
    %80 = arith.addf %79, %78 : vector<4x16xf32>
    %81 = vector.extract_strided_slice %71 {offsets = [0, 1], sizes = [4, 1], strides = [1, 1]} : vector<4x5xf32> to vector<4x1xf32>
    %82 = vector.extract_strided_slice %72 {offsets = [1, 0], sizes = [1, 16], strides = [1, 1]} : vector<5x16xf32> to vector<1x16xf32>
    %83 = vector.broadcast %81 : vector<4x1xf32> to vector<4x16xf32>
    %84 = vector.broadcast %82 : vector<1x16xf32> to vector<4x16xf32>
    %85 = arith.mulf %83, %84 : vector<4x16xf32>
    %86 = arith.addf %80, %85 : vector<4x16xf32>
    %87 = vector.extract_strided_slice %71 {offsets = [0, 2], sizes = [4, 1], strides = [1, 1]} : vector<4x5xf32> to vector<4x1xf32>
    %88 = vector.extract_strided_slice %72 {offsets = [2, 0], sizes = [1, 16], strides = [1, 1]} : vector<5x16xf32> to vector<1x16xf32>
    %89 = vector.broadcast %87 : vector<4x1xf32> to vector<4x16xf32>
    %90 = vector.broadcast %88 : vector<1x16xf32> to vector<4x16xf32>
    %91 = arith.mulf %89, %90 : vector<4x16xf32>
    %92 = arith.addf %86, %91 : vector<4x16xf32>
    %93 = vector.extract_strided_slice %71 {offsets = [0, 3], sizes = [4, 1], strides = [1, 1]} : vector<4x5xf32> to vector<4x1xf32>
    %94 = vector.extract_strided_slice %72 {offsets = [3, 0], sizes = [1, 16], strides = [1, 1]} : vector<5x16xf32> to vector<1x16xf32>
    %95 = vector.broadcast %93 : vector<4x1xf32> to vector<4x16xf32>
    %96 = vector.broadcast %94 : vector<1x16xf32> to vector<4x16xf32>
    %97 = arith.mulf %95, %96 : vector<4x16xf32>
    %98 = arith.addf %92, %97 : vector<4x16xf32>
    %99 = vector.extract_strided_slice %71 {offsets = [0, 4], sizes = [4, 1], strides = [1, 1]} : vector<4x5xf32> to vector<4x1xf32>
    %100 = vector.extract_strided_slice %72 {offsets = [4, 0], sizes = [1, 16], strides = [1, 1]} : vector<5x16xf32> to vector<1x16xf32>
    %101 = vector.broadcast %99 : vector<4x1xf32> to vector<4x16xf32>
    %102 = vector.broadcast %100 : vector<1x16xf32> to vector<4x16xf32>
    %103 = arith.mulf %101, %102 : vector<4x16xf32>
    %104 = arith.addf %98, %103 : vector<4x16xf32>
    %cst_44 = arith.constant 0.000000e+00 : f32
    %105 = vector.broadcast %cst_44 : f32 to vector<4x16xf32>
    %106 = arith.maximumf %104, %105 : vector<4x16xf32>
    %107 = tpu.concatenate %70, %106 in 1 : vector<4x64xf32>, vector<4x16xf32> -> vector<4x80xf32>
    %c0_45 = arith.constant 0 : index
    %c0_46 = arith.constant 0 : index
    %108 = vector.load %arg17[%c0_45, %c0_46] : memref<80x32xf32, #tpu.memory_space<vmem>>, vector<80x32xf32>
    %c0_47 = arith.constant 0 : index
    %c0_48 = arith.constant 0 : index
    %109 = vector.load %arg18[%c0_47, %c0_48] : memref<1x32xf32, #tpu.memory_space<vmem>>, vector<1x32xf32>
    %cst_49 = arith.constant dense<0.000000e+00> : vector<4x32xf32>
    %110 = tpu.matmul %107, %108, %cst_49 {dimension_numbers = #tpu.dot_dimension_numbers<[1], [0], [0], [1], [0, 0, 1, 1], [], []>} : vector<4x80xf32>, vector<80x32xf32>, vector<4x32xf32> -> vector<4x32xf32>
    %111 = vector.broadcast %109 : vector<1x32xf32> to vector<4x32xf32>
    %112 = arith.addf %110, %111 : vector<4x32xf32>
    %cst_50 = arith.constant 0.000000e+00 : f32
    %113 = vector.broadcast %cst_50 : f32 to vector<4x32xf32>
    %114 = arith.maximumf %112, %113 : vector<4x32xf32>
    %c0_51 = arith.constant 0 : index
    %c0_52 = arith.constant 0 : index
    %115 = vector.load %arg20[%c0_51, %c0_52] : memref<4x32xf32, #tpu.memory_space<vmem>>, vector<4x32xf32>
    tpu.vector_store %arg20[%c0_51, %c0_52], %114 {strides = array<i32>} : memref<4x32xf32, #tpu.memory_space<vmem>>, vector<4x32xf32>,
    return
  }
  func.func @transform_0(%arg0: i32) -> (i32, i32) {
    %c0_i32 = arith.constant 0 : i32
    %c0_i32_0 = arith.constant 0 : i32
    return %arg0, %c0_i32 : i32, i32
  }
  func.func @transform_1(%arg0: i32) -> (i32, i32) {
    %c0_i32 = arith.constant 0 : i32
    %c0_i32_0 = arith.constant 0 : i32
    return %arg0, %c0_i32 : i32, i32
  }
  func.func @transform_2(%arg0: i32) -> (i32, i32) {
    %c0_i32 = arith.constant 0 : i32
    %c0_i32_0 = arith.constant 0 : i32
    return %arg0, %c0_i32 : i32, i32
  }
  func.func @transform_3(%arg0: i32) -> (i32, i32) {
    %c0_i32 = arith.constant 0 : i32
    %c0_i32_0 = arith.constant 0 : i32
    return %arg0, %c0_i32 : i32, i32
  }
  func.func @transform_4(%arg0: i32) -> (i32, i32) {
    %c0_i32 = arith.constant 0 : i32
    %c0_i32_0 = arith.constant 0 : i32
    return %arg0, %c0_i32 : i32, i32
  }
  func.func @transform_5(%arg0: i32) -> (i32, i32) {
    %c0_i32 = arith.constant 0 : i32
    %c0_i32_0 = arith.constant 0 : i32
    return %arg0, %c0_i32 : i32, i32
  }
  func.func @transform_6(%arg0: i32) -> (i32, i32) {
    %c0_i32 = arith.constant 0 : i32
    %c0_i32_0 = arith.constant 0 : i32
    return %arg0, %c0_i32 : i32, i32
  }
  func.func @transform_7(%arg0: i32) -> (i32, i32) {
    %c0_i32 = arith.constant 0 : i32
    %c0_i32_0 = arith.constant 0 : i32
    %c0_i32_1 = arith.constant 0 : i32
    return %c0_i32, %c0_i32_0 : i32, i32
  }
  func.func @transform_8(%arg0: i32) -> (i32, i32) {
    %c0_i32 = arith.constant 0 : i32
    %c0_i32_0 = arith.constant 0 : i32
    %c0_i32_1 = arith.constant 0 : i32
    return %c0_i32, %c0_i32_0 : i32, i32
  }
  func.func @transform_9(%arg0: i32) -> (i32, i32) {
    %c0_i32 = arith.constant 0 : i32
    %c0_i32_0 = arith.constant 0 : i32
    %c0_i32_1 = arith.constant 0 : i32
    return %c0_i32, %c0_i32_0 : i32, i32
  }
  func.func @transform_10(%arg0: i32) -> (i32, i32) {
    %c0_i32 = arith.constant 0 : i32
    %c0_i32_0 = arith.constant 0 : i32
    %c0_i32_1 = arith.constant 0 : i32
    return %c0_i32, %c0_i32_0 : i32, i32
  }
  func.func @transform_11(%arg0: i32) -> (i32, i32) {
    %c0_i32 = arith.constant 0 : i32
    %c0_i32_0 = arith.constant 0 : i32
    %c0_i32_1 = arith.constant 0 : i32
    return %c0_i32, %c0_i32_0 : i32, i32
  }
  func.func @transform_12(%arg0: i32) -> (i32, i32) {
    %c0_i32 = arith.constant 0 : i32
    %c0_i32_0 = arith.constant 0 : i32
    %c0_i32_1 = arith.constant 0 : i32
    return %c0_i32, %c0_i32_0 : i32, i32
  }
  func.func @transform_13(%arg0: i32) -> (i32, i32) {
    %c0_i32 = arith.constant 0 : i32
    %c0_i32_0 = arith.constant 0 : i32
    %c0_i32_1 = arith.constant 0 : i32
    return %c0_i32, %c0_i32_0 : i32, i32
  }
  func.func @transform_14(%arg0: i32) -> (i32, i32) {
    %c0_i32 = arith.constant 0 : i32
    %c0_i32_0 = arith.constant 0 : i32
    %c0_i32_1 = arith.constant 0 : i32
    return %c0_i32, %c0_i32_0 : i32, i32
  }
  func.func @transform_15(%arg0: i32) -> (i32, i32) {
    %c0_i32 = arith.constant 0 : i32
    %c0_i32_0 = arith.constant 0 : i32
    %c0_i32_1 = arith.constant 0 : i32
    return %c0_i32, %c0_i32_0 : i32, i32
  }
  func.func @transform_16(%arg0: i32) -> (i32, i32) {
    %c0_i32 = arith.constant 0 : i32
    %c0_i32_0 = arith.constant 0 : i32
    %c0_i32_1 = arith.constant 0 : i32
    return %c0_i32, %c0_i32_0 : i32, i32
  }
  func.func @transform_17(%arg0: i32) -> (i32, i32) {
    %c0_i32 = arith.constant 0 : i32
    %c0_i32_0 = arith.constant 0 : i32
    %c0_i32_1 = arith.constant 0 : i32
    return %c0_i32, %c0_i32_0 : i32, i32
  }
  func.func @transform_18(%arg0: i32) -> (i32, i32) {
    %c0_i32 = arith.constant 0 : i32
    %c0_i32_0 = arith.constant 0 : i32
    return %arg0, %c0_i32 : i32, i32
  }
  func.func @transform_19(%arg0: i32) -> (i32, i32) {
    %c0_i32 = arith.constant 0 : i32
    %c0_i32_0 = arith.constant 0 : i32
    return %arg0, %c0_i32 : i32, i32
  }
}

module attributes {stable_mosaic.version = 11 : i64} {
  func.func @_tail_gru_kernel(%arg0: i32, %arg1: memref<2x2x32xf32, #tpu.memory_space<vmem>>, %arg2: memref<4x2x2x32xf32, #tpu.memory_space<vmem>>, %arg3: memref<2x2x2x5xf32, #tpu.memory_space<vmem>>, %arg4: memref<2x1xf32, #tpu.memory_space<vmem>>, %arg5: memref<2x64xf32, #tpu.memory_space<vmem>>, %arg6: memref<2x1xf32, #tpu.memory_space<vmem>>, %arg7: memref<5x16xf32, #tpu.memory_space<vmem>>, %arg8: memref<1x16xf32, #tpu.memory_space<vmem>>, %arg9: memref<1x16xf32, #tpu.memory_space<vmem>>, %arg10: memref<1x16xf32, #tpu.memory_space<vmem>>, %arg11: memref<64x32xf32, #tpu.memory_space<vmem>>, %arg12: memref<1x32xf32, #tpu.memory_space<vmem>>, %arg13: memref<64x32xf32, #tpu.memory_space<vmem>>, %arg14: memref<1x32xf32, #tpu.memory_space<vmem>>, %arg15: memref<32x32xf32, #tpu.memory_space<vmem>>, %arg16: memref<1x32xf32, #tpu.memory_space<vmem>>, %arg17: memref<272x192xf32, #tpu.memory_space<vmem>>, %arg18: memref<64x192xf32, #tpu.memory_space<vmem>>, %arg19: memref<1x192xf32, #tpu.memory_space<vmem>>, %arg20: memref<1x192xf32, #tpu.memory_space<vmem>>, %arg21: memref<2x64xf32, #tpu.memory_space<vmem>>) attributes {dimension_semantics = [#tpu.dimension_semantics<parallel>], iteration_bounds = array<i64: 1>, scalar_prefetch = 0 : i64, scratch_operands = 0 : i64, tpu.core_type = #tpu.core_type<tc>, window_params = [{transform_indices = @transform_0, window_bounds = array<i64: 2, 2, 32>}, {transform_indices = @transform_1, window_bounds = array<i64: 4, 2, 2, 32>}, {transform_indices = @transform_2, window_bounds = array<i64: 2, 2, 2, 5>}, {transform_indices = @transform_3, window_bounds = array<i64: 2, 1>}, {transform_indices = @transform_4, window_bounds = array<i64: 2, 64>}, {transform_indices = @transform_5, window_bounds = array<i64: 2, 1>}, {pipeline_mode = #tpu.pipeline_mode<synchronous>, transform_indices = @transform_6, window_bounds = array<i64: 5, 16>}, {pipeline_mode = #tpu.pipeline_mode<synchronous>, transform_indices = @transform_7, window_bounds = array<i64: 1, 16>}, {pipeline_mode = #tpu.pipeline_mode<synchronous>, transform_indices = @transform_8, window_bounds = array<i64: 1, 16>}, {pipeline_mode = #tpu.pipeline_mode<synchronous>, transform_indices = @transform_9, window_bounds = array<i64: 1, 16>}, {pipeline_mode = #tpu.pipeline_mode<synchronous>, transform_indices = @transform_10, window_bounds = array<i64: 64, 32>}, {pipeline_mode = #tpu.pipeline_mode<synchronous>, transform_indices = @transform_11, window_bounds = array<i64: 1, 32>}, {pipeline_mode = #tpu.pipeline_mode<synchronous>, transform_indices = @transform_12, window_bounds = array<i64: 64, 32>}, {pipeline_mode = #tpu.pipeline_mode<synchronous>, transform_indices = @transform_13, window_bounds = array<i64: 1, 32>}, {pipeline_mode = #tpu.pipeline_mode<synchronous>, transform_indices = @transform_14, window_bounds = array<i64: 32, 32>}, {pipeline_mode = #tpu.pipeline_mode<synchronous>, transform_indices = @transform_15, window_bounds = array<i64: 1, 32>}, {pipeline_mode = #tpu.pipeline_mode<synchronous>, transform_indices = @transform_16, window_bounds = array<i64: 272, 192>}, {pipeline_mode = #tpu.pipeline_mode<synchronous>, transform_indices = @transform_17, window_bounds = array<i64: 64, 192>}, {pipeline_mode = #tpu.pipeline_mode<synchronous>, transform_indices = @transform_18, window_bounds = array<i64: 1, 192>}, {pipeline_mode = #tpu.pipeline_mode<synchronous>, transform_indices = @transform_19, window_bounds = array<i64: 1, 192>}, {transform_indices = @transform_20, window_bounds = array<i64: 2, 64>}]} {
    %c0 = arith.constant 0 : index
    %c0_0 = arith.constant 0 : index
    %c0_1 = arith.constant 0 : index
    %0 = vector.load %arg1[%c0, %c0_0, %c0_1] : memref<2x2x32xf32, #tpu.memory_space<vmem>>, vector<2x2x32xf32>
    %c0_2 = arith.constant 0 : index
    %c0_3 = arith.constant 0 : index
    %c0_4 = arith.constant 0 : index
    %c0_5 = arith.constant 0 : index
    %1 = vector.load %arg2[%c0_2, %c0_3, %c0_4, %c0_5] : memref<4x2x2x32xf32, #tpu.memory_space<vmem>>, vector<4x2x2x32xf32>
    %c0_6 = arith.constant 0 : index
    %c0_7 = arith.constant 0 : index
    %c0_8 = arith.constant 0 : index
    %c0_9 = arith.constant 0 : index
    %2 = vector.load %arg3[%c0_6, %c0_7, %c0_8, %c0_9] : memref<2x2x2x5xf32, #tpu.memory_space<vmem>>, vector<2x2x2x5xf32>
    %c0_10 = arith.constant 0 : index
    %c0_11 = arith.constant 0 : index
    %3 = vector.load %arg7[%c0_10, %c0_11] : memref<5x16xf32, #tpu.memory_space<vmem>>, vector<5x16xf32>
    %c0_12 = arith.constant 0 : index
    %c0_13 = arith.constant 0 : index
    %4 = vector.load %arg8[%c0_12, %c0_13] : memref<1x16xf32, #tpu.memory_space<vmem>>, vector<1x16xf32>
    %c0_14 = arith.constant 0 : index
    %c0_15 = arith.constant 0 : index
    %5 = vector.load %arg5[%c0_14, %c0_15] : memref<2x64xf32, #tpu.memory_space<vmem>>, vector<2x64xf32>
    %c0_16 = arith.constant 0 : index
    %c0_17 = arith.constant 0 : index
    %6 = vector.load %arg6[%c0_16, %c0_17] : memref<2x1xf32, #tpu.memory_space<vmem>>, vector<2x1xf32>
    %7 = vector.broadcast %6 : vector<2x1xf32> to vector<2x64xf32>
    %8 = arith.mulf %5, %7 : vector<2x64xf32>
    %c0_18 = arith.constant 0 : index
    %c0_19 = arith.constant 0 : index
    %9 = vector.load %arg4[%c0_18, %c0_19] : memref<2x1xf32, #tpu.memory_space<vmem>>, vector<2x1xf32>
    %c0_20 = arith.constant 0 : index
    %c0_21 = arith.constant 0 : index
    %10 = vector.load %arg9[%c0_20, %c0_21] : memref<1x16xf32, #tpu.memory_space<vmem>>, vector<1x16xf32>
    %11 = vector.broadcast %9 : vector<2x1xf32> to vector<2x16xf32>
    %12 = vector.broadcast %10 : vector<1x16xf32> to vector<2x16xf32>
    %13 = arith.mulf %11, %12 : vector<2x16xf32>
    %c0_22 = arith.constant 0 : index
    %c0_23 = arith.constant 0 : index
    %14 = vector.load %arg10[%c0_22, %c0_23] : memref<1x16xf32, #tpu.memory_space<vmem>>, vector<1x16xf32>
    %15 = vector.broadcast %14 : vector<1x16xf32> to vector<2x16xf32>
    %16 = arith.addf %13, %15 : vector<2x16xf32>
    %cst = arith.constant 0.000000e+00 : f32
    %17 = vector.broadcast %cst : f32 to vector<2x16xf32>
    %18 = arith.maximumf %16, %17 : vector<2x16xf32>
    %19 = vector.extract_strided_slice %1 {offsets = [0, 0, 0, 0], sizes = [1, 1, 2, 32], strides = [1, 1, 1, 1]} : vector<4x2x2x32xf32> to vector<1x1x2x32xf32>
    %20 = vector.shape_cast %19 : vector<1x1x2x32xf32> to vector<2x32xf32>
    %21 = vector.extract_strided_slice %1 {offsets = [1, 0, 0, 0], sizes = [1, 1, 2, 32], strides = [1, 1, 1, 1]} : vector<4x2x2x32xf32> to vector<1x1x2x32xf32>
    %22 = vector.shape_cast %21 : vector<1x1x2x32xf32> to vector<2x32xf32>
    %23 = tpu.concatenate %20, %22 in 1 : vector<2x32xf32>, vector<2x32xf32> -> vector<2x64xf32>
    %c0_24 = arith.constant 0 : index
    %c0_25 = arith.constant 0 : index
    %24 = vector.load %arg11[%c0_24, %c0_25] : memref<64x32xf32, #tpu.memory_space<vmem>>, vector<64x32xf32>
    %c0_26 = arith.constant 0 : index
    %c0_27 = arith.constant 0 : index
    %25 = vector.load %arg12[%c0_26, %c0_27] : memref<1x32xf32, #tpu.memory_space<vmem>>, vector<1x32xf32>
    %cst_28 = arith.constant dense<0.000000e+00> : vector<2x32xf32>
    %26 = tpu.matmul %23, %24, %cst_28 {dimension_numbers = #tpu.dot_dimension_numbers<[1], [0], [0], [1], [0, 0, 1, 1], [], []>} : vector<2x64xf32>, vector<64x32xf32>, vector<2x32xf32> -> vector<2x32xf32>
    %27 = vector.broadcast %25 : vector<1x32xf32> to vector<2x32xf32>
    %28 = arith.addf %26, %27 : vector<2x32xf32>
    %cst_29 = arith.constant 0.000000e+00 : f32
    %29 = vector.broadcast %cst_29 : f32 to vector<2x32xf32>
    %30 = arith.maximumf %28, %29 : vector<2x32xf32>
    %31 = vector.extract_strided_slice %1 {offsets = [2, 0, 0, 0], sizes = [1, 1, 2, 32], strides = [1, 1, 1, 1]} : vector<4x2x2x32xf32> to vector<1x1x2x32xf32>
    %32 = vector.shape_cast %31 : vector<1x1x2x32xf32> to vector<2x32xf32>
    %33 = vector.extract_strided_slice %1 {offsets = [3, 0, 0, 0], sizes = [1, 1, 2, 32], strides = [1, 1, 1, 1]} : vector<4x2x2x32xf32> to vector<1x1x2x32xf32>
    %34 = vector.shape_cast %33 : vector<1x1x2x32xf32> to vector<2x32xf32>
    %35 = tpu.concatenate %32, %34 in 1 : vector<2x32xf32>, vector<2x32xf32> -> vector<2x64xf32>
    %c0_30 = arith.constant 0 : index
    %c0_31 = arith.constant 0 : index
    %36 = vector.load %arg13[%c0_30, %c0_31] : memref<64x32xf32, #tpu.memory_space<vmem>>, vector<64x32xf32>
    %c0_32 = arith.constant 0 : index
    %c0_33 = arith.constant 0 : index
    %37 = vector.load %arg14[%c0_32, %c0_33] : memref<1x32xf32, #tpu.memory_space<vmem>>, vector<1x32xf32>
    %cst_34 = arith.constant dense<0.000000e+00> : vector<2x32xf32>
    %38 = tpu.matmul %35, %36, %cst_34 {dimension_numbers = #tpu.dot_dimension_numbers<[1], [0], [0], [1], [0, 0, 1, 1], [], []>} : vector<2x64xf32>, vector<64x32xf32>, vector<2x32xf32> -> vector<2x32xf32>
    %39 = vector.broadcast %37 : vector<1x32xf32> to vector<2x32xf32>
    %40 = arith.addf %38, %39 : vector<2x32xf32>
    %cst_35 = arith.constant 0.000000e+00 : f32
    %41 = vector.broadcast %cst_35 : f32 to vector<2x32xf32>
    %42 = arith.maximumf %40, %41 : vector<2x32xf32>
    %43 = vector.extract_strided_slice %2 {offsets = [0, 0, 0, 0], sizes = [1, 1, 2, 5], strides = [1, 1, 1, 1]} : vector<2x2x2x5xf32> to vector<1x1x2x5xf32>
    %44 = vector.shape_cast %43 : vector<1x1x2x5xf32> to vector<2x5xf32>
    %45 = vector.extract_strided_slice %44 {offsets = [0, 0], sizes = [2, 1], strides = [1, 1]} : vector<2x5xf32> to vector<2x1xf32>
    %46 = vector.extract_strided_slice %3 {offsets = [0, 0], sizes = [1, 16], strides = [1, 1]} : vector<5x16xf32> to vector<1x16xf32>
    %47 = vector.broadcast %45 : vector<2x1xf32> to vector<2x16xf32>
    %48 = vector.broadcast %46 : vector<1x16xf32> to vector<2x16xf32>
    %49 = arith.mulf %47, %48 : vector<2x16xf32>
    %50 = vector.broadcast %4 : vector<1x16xf32> to vector<2x16xf32>
    %51 = arith.addf %50, %49 : vector<2x16xf32>
    %52 = vector.extract_strided_slice %44 {offsets = [0, 1], sizes = [2, 1], strides = [1, 1]} : vector<2x5xf32> to vector<2x1xf32>
    %53 = vector.extract_strided_slice %3 {offsets = [1, 0], sizes = [1, 16], strides = [1, 1]} : vector<5x16xf32> to vector<1x16xf32>
    %54 = vector.broadcast %52 : vector<2x1xf32> to vector<2x16xf32>
    %55 = vector.broadcast %53 : vector<1x16xf32> to vector<2x16xf32>
    %56 = arith.mulf %54, %55 : vector<2x16xf32>
    %57 = arith.addf %51, %56 : vector<2x16xf32>
    %58 = vector.extract_strided_slice %44 {offsets = [0, 2], sizes = [2, 1], strides = [1, 1]} : vector<2x5xf32> to vector<2x1xf32>
    %59 = vector.extract_strided_slice %3 {offsets = [2, 0], sizes = [1, 16], strides = [1, 1]} : vector<5x16xf32> to vector<1x16xf32>
    %60 = vector.broadcast %58 : vector<2x1xf32> to vector<2x16xf32>
    %61 = vector.broadcast %59 : vector<1x16xf32> to vector<2x16xf32>
    %62 = arith.mulf %60, %61 : vector<2x16xf32>
    %63 = arith.addf %57, %62 : vector<2x16xf32>
    %64 = vector.extract_strided_slice %44 {offsets = [0, 3], sizes = [2, 1], strides = [1, 1]} : vector<2x5xf32> to vector<2x1xf32>
    %65 = vector.extract_strided_slice %3 {offsets = [3, 0], sizes = [1, 16], strides = [1, 1]} : vector<5x16xf32> to vector<1x16xf32>
    %66 = vector.broadcast %64 : vector<2x1xf32> to vector<2x16xf32>
    %67 = vector.broadcast %65 : vector<1x16xf32> to vector<2x16xf32>
    %68 = arith.mulf %66, %67 : vector<2x16xf32>
    %69 = arith.addf %63, %68 : vector<2x16xf32>
    %70 = vector.extract_strided_slice %44 {offsets = [0, 4], sizes = [2, 1], strides = [1, 1]} : vector<2x5xf32> to vector<2x1xf32>
    %71 = vector.extract_strided_slice %3 {offsets = [4, 0], sizes = [1, 16], strides = [1, 1]} : vector<5x16xf32> to vector<1x16xf32>
    %72 = vector.broadcast %70 : vector<2x1xf32> to vector<2x16xf32>
    %73 = vector.broadcast %71 : vector<1x16xf32> to vector<2x16xf32>
    %74 = arith.mulf %72, %73 : vector<2x16xf32>
    %75 = arith.addf %69, %74 : vector<2x16xf32>
    %cst_36 = arith.constant 0.000000e+00 : f32
    %76 = vector.broadcast %cst_36 : f32 to vector<2x16xf32>
    %77 = arith.maximumf %75, %76 : vector<2x16xf32>
    %78 = vector.extract_strided_slice %2 {offsets = [1, 0, 0, 0], sizes = [1, 1, 2, 5], strides = [1, 1, 1, 1]} : vector<2x2x2x5xf32> to vector<1x1x2x5xf32>
    %79 = vector.shape_cast %78 : vector<1x1x2x5xf32> to vector<2x5xf32>
    %80 = vector.extract_strided_slice %79 {offsets = [0, 0], sizes = [2, 1], strides = [1, 1]} : vector<2x5xf32> to vector<2x1xf32>
    %81 = vector.extract_strided_slice %3 {offsets = [0, 0], sizes = [1, 16], strides = [1, 1]} : vector<5x16xf32> to vector<1x16xf32>
    %82 = vector.broadcast %80 : vector<2x1xf32> to vector<2x16xf32>
    %83 = vector.broadcast %81 : vector<1x16xf32> to vector<2x16xf32>
    %84 = arith.mulf %82, %83 : vector<2x16xf32>
    %85 = vector.broadcast %4 : vector<1x16xf32> to vector<2x16xf32>
    %86 = arith.addf %85, %84 : vector<2x16xf32>
    %87 = vector.extract_strided_slice %79 {offsets = [0, 1], sizes = [2, 1], strides = [1, 1]} : vector<2x5xf32> to vector<2x1xf32>
    %88 = vector.extract_strided_slice %3 {offsets = [1, 0], sizes = [1, 16], strides = [1, 1]} : vector<5x16xf32> to vector<1x16xf32>
    %89 = vector.broadcast %87 : vector<2x1xf32> to vector<2x16xf32>
    %90 = vector.broadcast %88 : vector<1x16xf32> to vector<2x16xf32>
    %91 = arith.mulf %89, %90 : vector<2x16xf32>
    %92 = arith.addf %86, %91 : vector<2x16xf32>
    %93 = vector.extract_strided_slice %79 {offsets = [0, 2], sizes = [2, 1], strides = [1, 1]} : vector<2x5xf32> to vector<2x1xf32>
    %94 = vector.extract_strided_slice %3 {offsets = [2, 0], sizes = [1, 16], strides = [1, 1]} : vector<5x16xf32> to vector<1x16xf32>
    %95 = vector.broadcast %93 : vector<2x1xf32> to vector<2x16xf32>
    %96 = vector.broadcast %94 : vector<1x16xf32> to vector<2x16xf32>
    %97 = arith.mulf %95, %96 : vector<2x16xf32>
    %98 = arith.addf %92, %97 : vector<2x16xf32>
    %99 = vector.extract_strided_slice %79 {offsets = [0, 3], sizes = [2, 1], strides = [1, 1]} : vector<2x5xf32> to vector<2x1xf32>
    %100 = vector.extract_strided_slice %3 {offsets = [3, 0], sizes = [1, 16], strides = [1, 1]} : vector<5x16xf32> to vector<1x16xf32>
    %101 = vector.broadcast %99 : vector<2x1xf32> to vector<2x16xf32>
    %102 = vector.broadcast %100 : vector<1x16xf32> to vector<2x16xf32>
    %103 = arith.mulf %101, %102 : vector<2x16xf32>
    %104 = arith.addf %98, %103 : vector<2x16xf32>
    %105 = vector.extract_strided_slice %79 {offsets = [0, 4], sizes = [2, 1], strides = [1, 1]} : vector<2x5xf32> to vector<2x1xf32>
    %106 = vector.extract_strided_slice %3 {offsets = [4, 0], sizes = [1, 16], strides = [1, 1]} : vector<5x16xf32> to vector<1x16xf32>
    %107 = vector.broadcast %105 : vector<2x1xf32> to vector<2x16xf32>
    %108 = vector.broadcast %106 : vector<1x16xf32> to vector<2x16xf32>
    %109 = arith.mulf %107, %108 : vector<2x16xf32>
    %110 = arith.addf %104, %109 : vector<2x16xf32>
    %cst_37 = arith.constant 0.000000e+00 : f32
    %111 = vector.broadcast %cst_37 : f32 to vector<2x16xf32>
    %112 = arith.maximumf %110, %111 : vector<2x16xf32>
    %113 = tpu.concatenate %77, %112 in 1 : vector<2x16xf32>, vector<2x16xf32> -> vector<2x32xf32>
    %c0_38 = arith.constant 0 : index
    %c0_39 = arith.constant 0 : index
    %114 = vector.load %arg15[%c0_38, %c0_39] : memref<32x32xf32, #tpu.memory_space<vmem>>, vector<32x32xf32>
    %c0_40 = arith.constant 0 : index
    %c0_41 = arith.constant 0 : index
    %115 = vector.load %arg16[%c0_40, %c0_41] : memref<1x32xf32, #tpu.memory_space<vmem>>, vector<1x32xf32>
    %cst_42 = arith.constant dense<0.000000e+00> : vector<2x32xf32>
    %116 = tpu.matmul %113, %114, %cst_42 {dimension_numbers = #tpu.dot_dimension_numbers<[1], [0], [0], [1], [0, 0, 1, 1], [], []>} : vector<2x32xf32>, vector<32x32xf32>, vector<2x32xf32> -> vector<2x32xf32>
    %117 = vector.broadcast %115 : vector<1x32xf32> to vector<2x32xf32>
    %118 = arith.addf %116, %117 : vector<2x32xf32>
    %cst_43 = arith.constant 0.000000e+00 : f32
    %119 = vector.broadcast %cst_43 : f32 to vector<2x32xf32>
    %120 = arith.maximumf %118, %119 : vector<2x32xf32>
    %121 = vector.extract_strided_slice %0 {offsets = [0, 0, 0], sizes = [1, 2, 32], strides = [1, 1, 1]} : vector<2x2x32xf32> to vector<1x2x32xf32>
    %122 = vector.shape_cast %121 : vector<1x2x32xf32> to vector<2x32xf32>
    %123 = vector.extract_strided_slice %1 {offsets = [0, 1, 0, 0], sizes = [1, 1, 2, 32], strides = [1, 1, 1, 1]} : vector<4x2x2x32xf32> to vector<1x1x2x32xf32>
    %124 = vector.shape_cast %123 : vector<1x1x2x32xf32> to vector<2x32xf32>
    %125 = vector.extract_strided_slice %1 {offsets = [1, 1, 0, 0], sizes = [1, 1, 2, 32], strides = [1, 1, 1, 1]} : vector<4x2x2x32xf32> to vector<1x1x2x32xf32>
    %126 = vector.shape_cast %125 : vector<1x1x2x32xf32> to vector<2x32xf32>
    %127 = tpu.concatenate %124, %126 in 1 : vector<2x32xf32>, vector<2x32xf32> -> vector<2x64xf32>
    %c0_44 = arith.constant 0 : index
    %c0_45 = arith.constant 0 : index
    %128 = vector.load %arg11[%c0_44, %c0_45] : memref<64x32xf32, #tpu.memory_space<vmem>>, vector<64x32xf32>
    %c0_46 = arith.constant 0 : index
    %c0_47 = arith.constant 0 : index
    %129 = vector.load %arg12[%c0_46, %c0_47] : memref<1x32xf32, #tpu.memory_space<vmem>>, vector<1x32xf32>
    %cst_48 = arith.constant dense<0.000000e+00> : vector<2x32xf32>
    %130 = tpu.matmul %127, %128, %cst_48 {dimension_numbers = #tpu.dot_dimension_numbers<[1], [0], [0], [1], [0, 0, 1, 1], [], []>} : vector<2x64xf32>, vector<64x32xf32>, vector<2x32xf32> -> vector<2x32xf32>
    %131 = vector.broadcast %129 : vector<1x32xf32> to vector<2x32xf32>
    %132 = arith.addf %130, %131 : vector<2x32xf32>
    %cst_49 = arith.constant 0.000000e+00 : f32
    %133 = vector.broadcast %cst_49 : f32 to vector<2x32xf32>
    %134 = arith.maximumf %132, %133 : vector<2x32xf32>
    %135 = vector.extract_strided_slice %1 {offsets = [2, 1, 0, 0], sizes = [1, 1, 2, 32], strides = [1, 1, 1, 1]} : vector<4x2x2x32xf32> to vector<1x1x2x32xf32>
    %136 = vector.shape_cast %135 : vector<1x1x2x32xf32> to vector<2x32xf32>
    %137 = vector.extract_strided_slice %1 {offsets = [3, 1, 0, 0], sizes = [1, 1, 2, 32], strides = [1, 1, 1, 1]} : vector<4x2x2x32xf32> to vector<1x1x2x32xf32>
    %138 = vector.shape_cast %137 : vector<1x1x2x32xf32> to vector<2x32xf32>
    %139 = tpu.concatenate %136, %138 in 1 : vector<2x32xf32>, vector<2x32xf32> -> vector<2x64xf32>
    %c0_50 = arith.constant 0 : index
    %c0_51 = arith.constant 0 : index
    %140 = vector.load %arg13[%c0_50, %c0_51] : memref<64x32xf32, #tpu.memory_space<vmem>>, vector<64x32xf32>
    %c0_52 = arith.constant 0 : index
    %c0_53 = arith.constant 0 : index
    %141 = vector.load %arg14[%c0_52, %c0_53] : memref<1x32xf32, #tpu.memory_space<vmem>>, vector<1x32xf32>
    %cst_54 = arith.constant dense<0.000000e+00> : vector<2x32xf32>
    %142 = tpu.matmul %139, %140, %cst_54 {dimension_numbers = #tpu.dot_dimension_numbers<[1], [0], [0], [1], [0, 0, 1, 1], [], []>} : vector<2x64xf32>, vector<64x32xf32>, vector<2x32xf32> -> vector<2x32xf32>
    %143 = vector.broadcast %141 : vector<1x32xf32> to vector<2x32xf32>
    %144 = arith.addf %142, %143 : vector<2x32xf32>
    %cst_55 = arith.constant 0.000000e+00 : f32
    %145 = vector.broadcast %cst_55 : f32 to vector<2x32xf32>
    %146 = arith.maximumf %144, %145 : vector<2x32xf32>
    %147 = vector.extract_strided_slice %2 {offsets = [0, 1, 0, 0], sizes = [1, 1, 2, 5], strides = [1, 1, 1, 1]} : vector<2x2x2x5xf32> to vector<1x1x2x5xf32>
    %148 = vector.shape_cast %147 : vector<1x1x2x5xf32> to vector<2x5xf32>
    %149 = vector.extract_strided_slice %148 {offsets = [0, 0], sizes = [2, 1], strides = [1, 1]} : vector<2x5xf32> to vector<2x1xf32>
    %150 = vector.extract_strided_slice %3 {offsets = [0, 0], sizes = [1, 16], strides = [1, 1]} : vector<5x16xf32> to vector<1x16xf32>
    %151 = vector.broadcast %149 : vector<2x1xf32> to vector<2x16xf32>
    %152 = vector.broadcast %150 : vector<1x16xf32> to vector<2x16xf32>
    %153 = arith.mulf %151, %152 : vector<2x16xf32>
    %154 = vector.broadcast %4 : vector<1x16xf32> to vector<2x16xf32>
    %155 = arith.addf %154, %153 : vector<2x16xf32>
    %156 = vector.extract_strided_slice %148 {offsets = [0, 1], sizes = [2, 1], strides = [1, 1]} : vector<2x5xf32> to vector<2x1xf32>
    %157 = vector.extract_strided_slice %3 {offsets = [1, 0], sizes = [1, 16], strides = [1, 1]} : vector<5x16xf32> to vector<1x16xf32>
    %158 = vector.broadcast %156 : vector<2x1xf32> to vector<2x16xf32>
    %159 = vector.broadcast %157 : vector<1x16xf32> to vector<2x16xf32>
    %160 = arith.mulf %158, %159 : vector<2x16xf32>
    %161 = arith.addf %155, %160 : vector<2x16xf32>
    %162 = vector.extract_strided_slice %148 {offsets = [0, 2], sizes = [2, 1], strides = [1, 1]} : vector<2x5xf32> to vector<2x1xf32>
    %163 = vector.extract_strided_slice %3 {offsets = [2, 0], sizes = [1, 16], strides = [1, 1]} : vector<5x16xf32> to vector<1x16xf32>
    %164 = vector.broadcast %162 : vector<2x1xf32> to vector<2x16xf32>
    %165 = vector.broadcast %163 : vector<1x16xf32> to vector<2x16xf32>
    %166 = arith.mulf %164, %165 : vector<2x16xf32>
    %167 = arith.addf %161, %166 : vector<2x16xf32>
    %168 = vector.extract_strided_slice %148 {offsets = [0, 3], sizes = [2, 1], strides = [1, 1]} : vector<2x5xf32> to vector<2x1xf32>
    %169 = vector.extract_strided_slice %3 {offsets = [3, 0], sizes = [1, 16], strides = [1, 1]} : vector<5x16xf32> to vector<1x16xf32>
    %170 = vector.broadcast %168 : vector<2x1xf32> to vector<2x16xf32>
    %171 = vector.broadcast %169 : vector<1x16xf32> to vector<2x16xf32>
    %172 = arith.mulf %170, %171 : vector<2x16xf32>
    %173 = arith.addf %167, %172 : vector<2x16xf32>
    %174 = vector.extract_strided_slice %148 {offsets = [0, 4], sizes = [2, 1], strides = [1, 1]} : vector<2x5xf32> to vector<2x1xf32>
    %175 = vector.extract_strided_slice %3 {offsets = [4, 0], sizes = [1, 16], strides = [1, 1]} : vector<5x16xf32> to vector<1x16xf32>
    %176 = vector.broadcast %174 : vector<2x1xf32> to vector<2x16xf32>
    %177 = vector.broadcast %175 : vector<1x16xf32> to vector<2x16xf32>
    %178 = arith.mulf %176, %177 : vector<2x16xf32>
    %179 = arith.addf %173, %178 : vector<2x16xf32>
    %cst_56 = arith.constant 0.000000e+00 : f32
    %180 = vector.broadcast %cst_56 : f32 to vector<2x16xf32>
    %181 = arith.maximumf %179, %180 : vector<2x16xf32>
    %182 = vector.extract_strided_slice %2 {offsets = [1, 1, 0, 0], sizes = [1, 1, 2, 5], strides = [1, 1, 1, 1]} : vector<2x2x2x5xf32> to vector<1x1x2x5xf32>
    %183 = vector.shape_cast %182 : vector<1x1x2x5xf32> to vector<2x5xf32>
    %184 = vector.extract_strided_slice %183 {offsets = [0, 0], sizes = [2, 1], strides = [1, 1]} : vector<2x5xf32> to vector<2x1xf32>
    %185 = vector.extract_strided_slice %3 {offsets = [0, 0], sizes = [1, 16], strides = [1, 1]} : vector<5x16xf32> to vector<1x16xf32>
    %186 = vector.broadcast %184 : vector<2x1xf32> to vector<2x16xf32>
    %187 = vector.broadcast %185 : vector<1x16xf32> to vector<2x16xf32>
    %188 = arith.mulf %186, %187 : vector<2x16xf32>
    %189 = vector.broadcast %4 : vector<1x16xf32> to vector<2x16xf32>
    %190 = arith.addf %189, %188 : vector<2x16xf32>
    %191 = vector.extract_strided_slice %183 {offsets = [0, 1], sizes = [2, 1], strides = [1, 1]} : vector<2x5xf32> to vector<2x1xf32>
    %192 = vector.extract_strided_slice %3 {offsets = [1, 0], sizes = [1, 16], strides = [1, 1]} : vector<5x16xf32> to vector<1x16xf32>
    %193 = vector.broadcast %191 : vector<2x1xf32> to vector<2x16xf32>
    %194 = vector.broadcast %192 : vector<1x16xf32> to vector<2x16xf32>
    %195 = arith.mulf %193, %194 : vector<2x16xf32>
    %196 = arith.addf %190, %195 : vector<2x16xf32>
    %197 = vector.extract_strided_slice %183 {offsets = [0, 2], sizes = [2, 1], strides = [1, 1]} : vector<2x5xf32> to vector<2x1xf32>
    %198 = vector.extract_strided_slice %3 {offsets = [2, 0], sizes = [1, 16], strides = [1, 1]} : vector<5x16xf32> to vector<1x16xf32>
    %199 = vector.broadcast %197 : vector<2x1xf32> to vector<2x16xf32>
    %200 = vector.broadcast %198 : vector<1x16xf32> to vector<2x16xf32>
    %201 = arith.mulf %199, %200 : vector<2x16xf32>
    %202 = arith.addf %196, %201 : vector<2x16xf32>
    %203 = vector.extract_strided_slice %183 {offsets = [0, 3], sizes = [2, 1], strides = [1, 1]} : vector<2x5xf32> to vector<2x1xf32>
    %204 = vector.extract_strided_slice %3 {offsets = [3, 0], sizes = [1, 16], strides = [1, 1]} : vector<5x16xf32> to vector<1x16xf32>
    %205 = vector.broadcast %203 : vector<2x1xf32> to vector<2x16xf32>
    %206 = vector.broadcast %204 : vector<1x16xf32> to vector<2x16xf32>
    %207 = arith.mulf %205, %206 : vector<2x16xf32>
    %208 = arith.addf %202, %207 : vector<2x16xf32>
    %209 = vector.extract_strided_slice %183 {offsets = [0, 4], sizes = [2, 1], strides = [1, 1]} : vector<2x5xf32> to vector<2x1xf32>
    %210 = vector.extract_strided_slice %3 {offsets = [4, 0], sizes = [1, 16], strides = [1, 1]} : vector<5x16xf32> to vector<1x16xf32>
    %211 = vector.broadcast %209 : vector<2x1xf32> to vector<2x16xf32>
    %212 = vector.broadcast %210 : vector<1x16xf32> to vector<2x16xf32>
    %213 = arith.mulf %211, %212 : vector<2x16xf32>
    %214 = arith.addf %208, %213 : vector<2x16xf32>
    %cst_57 = arith.constant 0.000000e+00 : f32
    %215 = vector.broadcast %cst_57 : f32 to vector<2x16xf32>
    %216 = arith.maximumf %214, %215 : vector<2x16xf32>
    %217 = tpu.concatenate %181, %216 in 1 : vector<2x16xf32>, vector<2x16xf32> -> vector<2x32xf32>
    %c0_58 = arith.constant 0 : index
    %c0_59 = arith.constant 0 : index
    %218 = vector.load %arg15[%c0_58, %c0_59] : memref<32x32xf32, #tpu.memory_space<vmem>>, vector<32x32xf32>
    %c0_60 = arith.constant 0 : index
    %c0_61 = arith.constant 0 : index
    %219 = vector.load %arg16[%c0_60, %c0_61] : memref<1x32xf32, #tpu.memory_space<vmem>>, vector<1x32xf32>
    %cst_62 = arith.constant dense<0.000000e+00> : vector<2x32xf32>
    %220 = tpu.matmul %217, %218, %cst_62 {dimension_numbers = #tpu.dot_dimension_numbers<[1], [0], [0], [1], [0, 0, 1, 1], [], []>} : vector<2x32xf32>, vector<32x32xf32>, vector<2x32xf32> -> vector<2x32xf32>
    %221 = vector.broadcast %219 : vector<1x32xf32> to vector<2x32xf32>
    %222 = arith.addf %220, %221 : vector<2x32xf32>
    %cst_63 = arith.constant 0.000000e+00 : f32
    %223 = vector.broadcast %cst_63 : f32 to vector<2x32xf32>
    %224 = arith.maximumf %222, %223 : vector<2x32xf32>
    %225 = vector.extract_strided_slice %0 {offsets = [1, 0, 0], sizes = [1, 2, 32], strides = [1, 1, 1]} : vector<2x2x32xf32> to vector<1x2x32xf32>
    %226 = vector.shape_cast %225 : vector<1x2x32xf32> to vector<2x32xf32>
    %227 = tpu.concatenate %122, %30, %42, %120, %226, %134, %146, %224, %18 in 1 : vector<2x32xf32>, vector<2x32xf32>, vector<2x32xf32>, vector<2x32xf32>, vector<2x32xf32>, vector<2x32xf32>, vector<2x32xf32>, vector<2x32xf32>, vector<2x16xf32> -> vector<2x272xf32>
    %c0_64 = arith.constant 0 : index
    %c0_65 = arith.constant 0 : index
    %228 = vector.load %arg17[%c0_64, %c0_65] : memref<272x192xf32, #tpu.memory_space<vmem>>, vector<272x192xf32>
    %cst_66 = arith.constant dense<0.000000e+00> : vector<2x192xf32>
    %229 = tpu.matmul %227, %228, %cst_66 {dimension_numbers = #tpu.dot_dimension_numbers<[1], [0], [0], [1], [0, 0, 1, 1], [], []>} : vector<2x272xf32>, vector<272x192xf32>, vector<2x192xf32> -> vector<2x192xf32>
    %c0_67 = arith.constant 0 : index
    %c0_68 = arith.constant 0 : index
    %230 = vector.load %arg19[%c0_67, %c0_68] : memref<1x192xf32, #tpu.memory_space<vmem>>, vector<1x192xf32>
    %231 = vector.broadcast %230 : vector<1x192xf32> to vector<2x192xf32>
    %232 = arith.addf %229, %231 : vector<2x192xf32>
    %c0_69 = arith.constant 0 : index
    %c0_70 = arith.constant 0 : index
    %233 = vector.load %arg18[%c0_69, %c0_70] : memref<64x192xf32, #tpu.memory_space<vmem>>, vector<64x192xf32>
    %cst_71 = arith.constant dense<0.000000e+00> : vector<2x192xf32>
    %234 = tpu.matmul %8, %233, %cst_71 {dimension_numbers = #tpu.dot_dimension_numbers<[1], [0], [0], [1], [0, 0, 1, 1], [], []>} : vector<2x64xf32>, vector<64x192xf32>, vector<2x192xf32> -> vector<2x192xf32>
    %c0_72 = arith.constant 0 : index
    %c0_73 = arith.constant 0 : index
    %235 = vector.load %arg20[%c0_72, %c0_73] : memref<1x192xf32, #tpu.memory_space<vmem>>, vector<1x192xf32>
    %236 = vector.broadcast %235 : vector<1x192xf32> to vector<2x192xf32>
    %237 = arith.addf %234, %236 : vector<2x192xf32>
    %238 = vector.extract_strided_slice %232 {offsets = [0, 0], sizes = [2, 64], strides = [1, 1]} : vector<2x192xf32> to vector<2x64xf32>
    %239 = vector.extract_strided_slice %237 {offsets = [0, 0], sizes = [2, 64], strides = [1, 1]} : vector<2x192xf32> to vector<2x64xf32>
    %240 = arith.addf %238, %239 : vector<2x64xf32>
    %241 = arith.negf %240 : vector<2x64xf32>
    %242 = math.exp %241 : vector<2x64xf32>
    %cst_74 = arith.constant 1.000000e+00 : f32
    %243 = vector.broadcast %cst_74 : f32 to vector<2x64xf32>
    %244 = arith.addf %243, %242 : vector<2x64xf32>
    %245 = arith.divf %243, %244 : vector<2x64xf32>
    %246 = vector.extract_strided_slice %232 {offsets = [0, 64], sizes = [2, 64], strides = [1, 1]} : vector<2x192xf32> to vector<2x64xf32>
    %247 = vector.extract_strided_slice %237 {offsets = [0, 64], sizes = [2, 64], strides = [1, 1]} : vector<2x192xf32> to vector<2x64xf32>
    %248 = arith.addf %246, %247 : vector<2x64xf32>
    %249 = arith.negf %248 : vector<2x64xf32>
    %250 = math.exp %249 : vector<2x64xf32>
    %cst_75 = arith.constant 1.000000e+00 : f32
    %251 = vector.broadcast %cst_75 : f32 to vector<2x64xf32>
    %252 = arith.addf %251, %250 : vector<2x64xf32>
    %253 = arith.divf %251, %252 : vector<2x64xf32>
    %254 = vector.extract_strided_slice %232 {offsets = [0, 128], sizes = [2, 64], strides = [1, 1]} : vector<2x192xf32> to vector<2x64xf32>
    %255 = vector.extract_strided_slice %237 {offsets = [0, 128], sizes = [2, 64], strides = [1, 1]} : vector<2x192xf32> to vector<2x64xf32>
    %256 = arith.mulf %245, %255 : vector<2x64xf32>
    %257 = arith.addf %254, %256 : vector<2x64xf32>
    %258 = math.tanh %257 : vector<2x64xf32>
    %cst_76 = arith.constant 1.000000e+00 : f32
    %259 = vector.broadcast %cst_76 : f32 to vector<2x64xf32>
    %260 = arith.subf %259, %253 : vector<2x64xf32>
    %261 = arith.mulf %260, %258 : vector<2x64xf32>
    %262 = arith.mulf %253, %8 : vector<2x64xf32>
    %263 = arith.addf %261, %262 : vector<2x64xf32>
    %c0_77 = arith.constant 0 : index
    %c0_78 = arith.constant 0 : index
    %264 = vector.load %arg21[%c0_77, %c0_78] : memref<2x64xf32, #tpu.memory_space<vmem>>, vector<2x64xf32>
    tpu.vector_store %arg21[%c0_77, %c0_78], %263 {strides = array<i32>} : memref<2x64xf32, #tpu.memory_space<vmem>>, vector<2x64xf32>,
    return
  }
  func.func @transform_0(%arg0: i32) -> (i32, i32, i32) {
    %c0_i32 = arith.constant 0 : i32
    %c0_i32_0 = arith.constant 0 : i32
    %c0_i32_1 = arith.constant 0 : i32
    return %c0_i32, %arg0, %c0_i32_0 : i32, i32, i32
  }
  func.func @transform_1(%arg0: i32) -> (i32, i32, i32, i32) {
    %c0_i32 = arith.constant 0 : i32
    %c0_i32_0 = arith.constant 0 : i32
    %c0_i32_1 = arith.constant 0 : i32
    %c0_i32_2 = arith.constant 0 : i32
    return %c0_i32, %c0_i32_0, %arg0, %c0_i32_1 : i32, i32, i32, i32
  }
  func.func @transform_2(%arg0: i32) -> (i32, i32, i32, i32) {
    %c0_i32 = arith.constant 0 : i32
    %c0_i32_0 = arith.constant 0 : i32
    %c0_i32_1 = arith.constant 0 : i32
    %c0_i32_2 = arith.constant 0 : i32
    return %c0_i32, %c0_i32_0, %arg0, %c0_i32_1 : i32, i32, i32, i32
  }
  func.func @transform_3(%arg0: i32) -> (i32, i32) {
    %c0_i32 = arith.constant 0 : i32
    %c0_i32_0 = arith.constant 0 : i32
    return %arg0, %c0_i32 : i32, i32
  }
  func.func @transform_4(%arg0: i32) -> (i32, i32) {
    %c0_i32 = arith.constant 0 : i32
    %c0_i32_0 = arith.constant 0 : i32
    return %arg0, %c0_i32 : i32, i32
  }
  func.func @transform_5(%arg0: i32) -> (i32, i32) {
    %c0_i32 = arith.constant 0 : i32
    %c0_i32_0 = arith.constant 0 : i32
    return %arg0, %c0_i32 : i32, i32
  }
  func.func @transform_6(%arg0: i32) -> (i32, i32) {
    %c0_i32 = arith.constant 0 : i32
    %c0_i32_0 = arith.constant 0 : i32
    %c0_i32_1 = arith.constant 0 : i32
    return %c0_i32, %c0_i32_0 : i32, i32
  }
  func.func @transform_7(%arg0: i32) -> (i32, i32) {
    %c0_i32 = arith.constant 0 : i32
    %c0_i32_0 = arith.constant 0 : i32
    %c0_i32_1 = arith.constant 0 : i32
    return %c0_i32, %c0_i32_0 : i32, i32
  }
  func.func @transform_8(%arg0: i32) -> (i32, i32) {
    %c0_i32 = arith.constant 0 : i32
    %c0_i32_0 = arith.constant 0 : i32
    %c0_i32_1 = arith.constant 0 : i32
    return %c0_i32, %c0_i32_0 : i32, i32
  }
  func.func @transform_9(%arg0: i32) -> (i32, i32) {
    %c0_i32 = arith.constant 0 : i32
    %c0_i32_0 = arith.constant 0 : i32
    %c0_i32_1 = arith.constant 0 : i32
    return %c0_i32, %c0_i32_0 : i32, i32
  }
  func.func @transform_10(%arg0: i32) -> (i32, i32) {
    %c0_i32 = arith.constant 0 : i32
    %c0_i32_0 = arith.constant 0 : i32
    %c0_i32_1 = arith.constant 0 : i32
    return %c0_i32, %c0_i32_0 : i32, i32
  }
  func.func @transform_11(%arg0: i32) -> (i32, i32) {
    %c0_i32 = arith.constant 0 : i32
    %c0_i32_0 = arith.constant 0 : i32
    %c0_i32_1 = arith.constant 0 : i32
    return %c0_i32, %c0_i32_0 : i32, i32
  }
  func.func @transform_12(%arg0: i32) -> (i32, i32) {
    %c0_i32 = arith.constant 0 : i32
    %c0_i32_0 = arith.constant 0 : i32
    %c0_i32_1 = arith.constant 0 : i32
    return %c0_i32, %c0_i32_0 : i32, i32
  }
  func.func @transform_13(%arg0: i32) -> (i32, i32) {
    %c0_i32 = arith.constant 0 : i32
    %c0_i32_0 = arith.constant 0 : i32
    %c0_i32_1 = arith.constant 0 : i32
    return %c0_i32, %c0_i32_0 : i32, i32
  }
  func.func @transform_14(%arg0: i32) -> (i32, i32) {
    %c0_i32 = arith.constant 0 : i32
    %c0_i32_0 = arith.constant 0 : i32
    %c0_i32_1 = arith.constant 0 : i32
    return %c0_i32, %c0_i32_0 : i32, i32
  }
  func.func @transform_15(%arg0: i32) -> (i32, i32) {
    %c0_i32 = arith.constant 0 : i32
    %c0_i32_0 = arith.constant 0 : i32
    %c0_i32_1 = arith.constant 0 : i32
    return %c0_i32, %c0_i32_0 : i32, i32
  }
  func.func @transform_16(%arg0: i32) -> (i32, i32) {
    %c0_i32 = arith.constant 0 : i32
    %c0_i32_0 = arith.constant 0 : i32
    %c0_i32_1 = arith.constant 0 : i32
    return %c0_i32, %c0_i32_0 : i32, i32
  }
  func.func @transform_17(%arg0: i32) -> (i32, i32) {
    %c0_i32 = arith.constant 0 : i32
    %c0_i32_0 = arith.constant 0 : i32
    %c0_i32_1 = arith.constant 0 : i32
    return %c0_i32, %c0_i32_0 : i32, i32
  }
  func.func @transform_18(%arg0: i32) -> (i32, i32) {
    %c0_i32 = arith.constant 0 : i32
    %c0_i32_0 = arith.constant 0 : i32
    %c0_i32_1 = arith.constant 0 : i32
    return %c0_i32, %c0_i32_0 : i32, i32
  }
  func.func @transform_19(%arg0: i32) -> (i32, i32) {
    %c0_i32 = arith.constant 0 : i32
    %c0_i32_0 = arith.constant 0 : i32
    %c0_i32_1 = arith.constant 0 : i32
    return %c0_i32, %c0_i32_0 : i32, i32
  }
  func.func @transform_20(%arg0: i32) -> (i32, i32) {
    %c0_i32 = arith.constant 0 : i32
    %c0_i32_0 = arith.constant 0 : i32
    return %arg0, %c0_i32 : i32, i32
  }
}

</mosaic_0001>

<llo_original>
// kernel: mul.1
$region0: #{mul.1}
  #allocation0 [shape = 's32[1]{0}', space=sflag, size = 0x4, scoped, tag = 'scoped memory for mul.1']
  %s0 = inlined_call_operand.vmem [shape: f32[2,1], index: 0, kind: input, shape index: {}]
  %s1 = inlined_call_operand.vmem [shape: f32[2,1], index: 1, kind: input, shape index: {}]
  %s2 = inlined_call_operand.vmem [shape: f32[2,1], index: 2, kind: output, shape index: {}]
  %v3 = vld [vmem:[%s0] sm:$0x3]
  %v4 = vld [vmem:[%s1] sm:$0x3]
  %5 = xla_tuple %v3, %v4
  %6 = xla_tuple %5
  %v7 = vmul.f32 %v3, %v4
  %8 = xla_tuple %v7
  %9 = vst [vmem:[%s2] sm:$0x3] %v7

// kernel: policy_net_forward.3
$region0: #{policy_net_forward.3}
  #allocation0 [shape = 'u32[]', space=smem, size = 0x4, offset = 0x4, fixed_abs, tag = 'smem constant byte address 0x4 - core index']
  #allocation1 [shape = 'u32[144,128]{1,0:T(1,128)}', space=vmem, size = 0x12000, scoped, tag = 'internal scratch']
  %s0 = inlined_call_operand.vmem [shape: f32[128,144], index: 0, kind: input, shape index: {}]
  %s1 = inlined_call_operand.vmem [shape: f32[32,144], index: 1, kind: input, shape index: {}]
  %s2 = inlined_call_operand.vmem [shape: f32[32,216], index: 2, kind: input, shape index: {}]
  %s3 = inlined_call_operand.vmem [shape: f32[144,64], index: 3, kind: input, shape index: {}]
  %s4 = inlined_call_operand.vmem [shape: f32[1,64], index: 4, kind: input, shape index: {}]
  %s5 = inlined_call_operand.vmem [shape: f32[144,64], index: 5, kind: input, shape index: {}]
  %s6 = inlined_call_operand.vmem [shape: f32[1,64], index: 6, kind: input, shape index: {}]
  %s7 = inlined_call_operand.vmem [shape: f32[216,64], index: 7, kind: input, shape index: {}]
  %s8 = inlined_call_operand.vmem [shape: f32[1,64], index: 8, kind: input, shape index: {}]
  %s9 = inlined_call_operand.vmem [shape: f32[128,64], index: 9, kind: output, shape index: {0}]
  %s10 = inlined_call_operand.vmem [shape: f32[32,64], index: 10, kind: output, shape index: {1}]
  %s11 = inlined_call_operand.vmem [shape: f32[32,64], index: 11, kind: output, shape index: {2}]
  %12 = xla_tuple %s9, %s10, %s11
  %s13 = sld [smem:[#allocation0]]
  $region62: #{policy_net_forward.3} parent=0
    _
  %s15 = ssub.s32 1, %s13
  %s16 = scalar_select 0, %s15, %s13
  // Predicated region
  $region2: #{policy_net_forward.3} parent=0 // pred_check
    _
  $region3: #{policy_net_forward.3} parent=0 // pred_check_branch
    %18 = sbr.rel (0) target = $region5
  $region4: #{policy_net_forward.3} parent=0 // pred_region
    _
  $region5: #{policy_net_forward.3} parent=0 // pred_fallthru
    _
  // Predicated region
  $region6: #{policy_net_forward.3} parent=0 // pred_check
    _
  $region7: #{policy_net_forward.3} parent=0 // pred_check_branch
    %20 = sbr.rel (0) target = $region9
  $region8: #{policy_net_forward.3} parent=0 // pred_region
    _
  $region9: #{policy_net_forward.3} parent=0 // pred_fallthru
    _
  // Predicated region
  $region10: #{policy_net_forward.3} parent=0 // pred_check
    _
  $region11: #{policy_net_forward.3} parent=0 // pred_check_branch
    %22 = sbr.rel (0) target = $region13
  $region12: #{policy_net_forward.3} parent=0 // pred_region
    _
  $region13: #{policy_net_forward.3} parent=0 // pred_fallthru
    _
  // Predicated region
  $region14: #{policy_net_forward.3} parent=0 // pred_check
    _
  $region15: #{policy_net_forward.3} parent=0 // pred_check_branch
    %24 = sbr.rel (0) target = $region17
  $region16: #{policy_net_forward.3} parent=0 // pred_region
    _
  $region17: #{policy_net_forward.3} parent=0 // pred_fallthru
    _
  // Predicated region
  $region18: #{policy_net_forward.3} parent=0 // pred_check
    _
  $region19: #{policy_net_forward.3} parent=0 // pred_check_branch
    %26 = sbr.rel (0) target = $region21
  $region20: #{policy_net_forward.3} parent=0 // pred_region
    _
  $region21: #{policy_net_forward.3} parent=0 // pred_fallthru
    _
  // Predicated region
  $region22: #{policy_net_forward.3} parent=0 // pred_check
    _
  $region23: #{policy_net_forward.3} parent=0 // pred_check_branch
    %28 = sbr.rel (0) target = $region25
  $region24: #{policy_net_forward.3} parent=0 // pred_region
    _
  $region25: #{policy_net_forward.3} parent=0 // pred_fallthru
    _
  // Predicated region
  $region26: #{policy_net_forward.3} parent=0 // pred_check
    _
  $region27: #{policy_net_forward.3} parent=0 // pred_check_branch
    %30 = sbr.rel (0) target = $region29
  $region28: #{policy_net_forward.3} parent=0 // pred_region
    _
  $region29: #{policy_net_forward.3} parent=0 // pred_fallthru
    _
  // Predicated region
  $region30: #{policy_net_forward.3} parent=0 // pred_check
    _
  $region31: #{policy_net_forward.3} parent=0 // pred_check_branch
    %32 = sbr.rel (0) target = $region33
  $region32: #{policy_net_forward.3} parent=0 // pred_region
    _
  $region33: #{policy_net_forward.3} parent=0 // pred_fallthru
    _
  // Predicated region
  $region34: #{policy_net_forward.3} parent=0 // pred_check
    _
  $region35: #{policy_net_forward.3} parent=0 // pred_check_branch
    %34 = sbr.rel (0) target = $region37
  $region36: #{policy_net_forward.3} parent=0 // pred_region
    _
  $region37: #{policy_net_forward.3} parent=0 // pred_fallthru
    _
  %v35 = vld [vmem:[%s0] sm:$0xff]
  %v36 = vld [vmem:[%s0 + $0x8] sm:$0xff]
  %v37 = vld [vmem:[%s0 + $0x10] sm:$0xff]
  %v38 = vld [vmem:[%s0 + $0x18] sm:$0xff]
  %v39 = vld [vmem:[%s0 + $0x20] sm:$0xff]
  %v40 = vld [vmem:[%s0 + $0x28] sm:$0xff]
  %v41 = vld [vmem:[%s0 + $0x30] sm:$0xff]
  %v42 = vld [vmem:[%s0 + $0x38] sm:$0xff]
  %v43 = vld [vmem:[%s0 + $0x40] sm:$0xff]
  %v44 = vld [vmem:[%s0 + $0x48] sm:$0xff]
  %v45 = vld [vmem:[%s0 + $0x50] sm:$0xff]
  %v46 = vld [vmem:[%s0 + $0x58] sm:$0xff]
  %v47 = vld [vmem:[%s0 + $0x60] sm:$0xff]
  %v48 = vld [vmem:[%s0 + $0x68] sm:$0xff]
  %v49 = vld [vmem:[%s0 + $0x70] sm:$0xff]
  %v50 = vld [vmem:[%s0 + $0x78] sm:$0xff]
  %v51 = vld [vmem:[%s0 + $0x80] sm:$0xff]
  %v52 = vld [vmem:[%s0 + $0x88] sm:$0xff]
  %v53 = vld [vmem:[%s0 + $0x90] sm:$0xff]
  %v54 = vld [vmem:[%s0 + $0x98] sm:$0xff]
  %v55 = vld [vmem:[%s0 + $0xa0] sm:$0xff]
  %v56 = vld [vmem:[%s0 + $0xa8] sm:$0xff]
  %v57 = vld [vmem:[%s0 + $0xb0] sm:$0xff]
  %v58 = vld [vmem:[%s0 + $0xb8] sm:$0xff]
  %v59 = vld [vmem:[%s0 + $0xc0] sm:$0xff]
  %v60 = vld [vmem:[%s0 + $0xc8] sm:$0xff]
  %v61 = vld [vmem:[%s0 + $0xd0] sm:$0xff]
  %v62 = vld [vmem:[%s0 + $0xd8] sm:$0xff]
  %v63 = vld [vmem:[%s0 + $0xe0] sm:$0xff]
  %v64 = vld [vmem:[%s0 + $0xe8] sm:$0xff]
  %v65 = vld [vmem:[%s0 + $0xf0] sm:$0xff]
  %v66 = vld [vmem:[%s0 + $0xf8] sm:$0xff]
  %v67 = vld [vmem:[%s3] sm:$0xff]
  %v68 = vld [vmem:[%s3 + $0x8] sm:$0xff]
  %v69 = vld [vmem:[%s3 + $0x10] sm:$0xff]
  %v70 = vld [vmem:[%s3 + $0x18] sm:$0xff]
  %v71 = vld [vmem:[%s3 + $0x20] sm:$0xff]
  %v72 = vld [vmem:[%s3 + $0x28] sm:$0xff]
  %v73 = vld [vmem:[%s3 + $0x30] sm:$0xff]
  %v74 = vld [vmem:[%s3 + $0x38] sm:$0xff]
  %v75 = vld [vmem:[%s3 + $0x40] sm:$0xff]
  %v76 = vld [vmem:[%s3 + $0x48] sm:$0xff]
  %v77 = vld [vmem:[%s3 + $0x50] sm:$0xff]
  %v78 = vld [vmem:[%s3 + $0x58] sm:$0xff]
  %v79 = vld [vmem:[%s3 + $0x60] sm:$0xff]
  %v80 = vld [vmem:[%s3 + $0x68] sm:$0xff]
  %v81 = vld [vmem:[%s3 + $0x70] sm:$0xff]
  %v82 = vld [vmem:[%s3 + $0x78] sm:$0xff]
  %v83 = vld [vmem:[%s3 + $0x80] sm:$0xff]
  %v84 = vld [vmem:[%s3 + $0x88] sm:$0xff]
  %v85 = vld [vmem:[%s4] sm:$0x1]
  %v87 = vlaneseq
  %v88 = vshrl.u32 %v87, 7
  %v89 = vsub.s32 0, %v88
  %v90 = vrot.slane %v85, %v89
  %vm92 = vcmask 130048
  %v94 = vsel %vm92, %v36, 0
  %v97 = vsel %vm92, %v38, 0
  %v100 = vsel %vm92, %v40, 0
  %v103 = vsel %vm92, %v42, 0
  %v106 = vsel %vm92, %v44, 0
  %v109 = vsel %vm92, %v46, 0
  %v112 = vsel %vm92, %v48, 0
  %v115 = vsel %vm92, %v50, 0
  %v118 = vsel %vm92, %v52, 0
  %v121 = vsel %vm92, %v54, 0
  %v124 = vsel %vm92, %v56, 0
  %v127 = vsel %vm92, %v58, 0
  %v130 = vsel %vm92, %v60, 0
  %v133 = vsel %vm92, %v62, 0
  %v136 = vsel %vm92, %v64, 0
  %v139 = vsel %vm92, %v66, 0
  %141 = vmatprep.subr.mxu0 0.0
  %142 = vmatpush1.msra.mxu0 %v82
  %143 = vmatprep.subr.mxu0 0.0
  %144 = vmatpush1.msra.mxu0 %v81
  %145 = vmatprep.subr.mxu0 0.0
  %146 = vmatpush1.msra.mxu0 %v80
  %147 = vmatprep.subr.mxu0 0.0
  %148 = vmatpush1.msra.mxu0 %v79
  %149 = vmatprep.subr.mxu0 0.0
  %150 = vmatpush1.msra.mxu0 %v78
  %151 = vmatprep.subr.mxu0 0.0
  %152 = vmatpush1.msra.mxu0 %v77
  %153 = vmatprep.subr.mxu0 0.0
  %154 = vmatpush1.msra.mxu0 %v76
  %155 = vmatprep.subr.mxu0 0.0
  %156 = vmatpush1.msra.mxu0 %v75
  %157 = vmatprep.subr.mxu0 0.0
  %158 = vmatpush1.msra.mxu0 %v74
  %159 = vmatprep.subr.mxu0 0.0
  %160 = vmatpush1.msra.mxu0 %v73
  %161 = vmatprep.subr.mxu0 0.0
  %162 = vmatpush1.msra.mxu0 %v72
  %163 = vmatprep.subr.mxu0 0.0
  %164 = vmatpush1.msra.mxu0 %v71
  %165 = vmatprep.subr.mxu0 0.0
  %166 = vmatpush1.msra.mxu0 %v70
  %167 = vmatprep.subr.mxu0 0.0
  %168 = vmatpush1.msra.mxu0 %v69
  %169 = vmatprep.subr.mxu0 0.0
  %170 = vmatpush1.msra.mxu0 %v68
  %171 = vmatprep.subr.mxu0 0.0
  %172 = vmatpush1.msra.mxu0 %v67
  %173 = vmatprep.subr.mxu0 0.0
  %174 = vmatpush2.msra.mxu0 0.0
  %175 = vmatprep.subr.mxu0 0.0
  %176 = vmatpush2.msra.mxu0 0.0
  %177 = vmatprep.subr.mxu0 0.0
  %178 = vmatpush2.msra.mxu0 0.0
  %179 = vmatprep.subr.mxu0 0.0
  %180 = vmatpush2.msra.mxu0 0.0
  %181 = vmatprep.subr.mxu0 0.0
  %182 = vmatpush2.msra.mxu0 0.0
  %183 = vmatprep.subr.mxu0 0.0
  %184 = vmatpush2.msra.mxu0 0.0
  %185 = vmatprep.subr.mxu0 0.0
  %186 = vmatpush2.msra.mxu0 0.0
  %187 = vmatprep.subr.mxu0 0.0
  %188 = vmatpush2.msra.mxu0 0.0
  %189 = vmatprep.subr.mxu0 0.0
  %190 = vmatpush2.msra.mxu0 0.0
  %191 = vmatprep.subr.mxu0 0.0
  %192 = vmatpush2.msra.mxu0 0.0
  %193 = vmatprep.subr.mxu0 0.0
  %194 = vmatpush2.msra.mxu0 0.0
  %195 = vmatprep.subr.mxu0 0.0
  %196 = vmatpush2.msra.mxu0 0.0
  %197 = vmatprep.subr.mxu0 0.0
  %198 = vmatpush2.msra.mxu0 0.0
  %199 = vmatprep.subr.mxu0 0.0
  %200 = vmatpush2.msra.mxu0 0.0
  %201 = vmatprep.subr.mxu0 0.0
  %202 = vmatpush2.msra.mxu0 %v84
  %203 = vmatprep.subr.mxu0 0.0
  %204 = vmatpush2.msra.mxu0 %v83
  %205 = vmatprep.mubr.f32.mxu0 %v94
  %206 = vmatmul.mubr.f32.gmra.mxu0 %v35
  %v207 = vpop.f32.mrf.mxu0
  %v208 = vadd.f32 %v90, %v207
  %v209 = vpop.f32.mrf.mxu0
  %210 = vmatprep.mubr.f32.mxu0 %v97
  %211 = vmatmul.mubr.f32.gmra.mxu0 %v37
  %v212 = vpop.f32.mrf.mxu0
  %v213 = vadd.f32 %v90, %v212
  %v214 = vpop.f32.mrf.mxu0
  %215 = vmatprep.mubr.f32.mxu0 %v100
  %216 = vmatmul.mubr.f32.gmra.mxu0 %v39
  %v217 = vpop.f32.mrf.mxu0
  %v218 = vadd.f32 %v90, %v217
  %v219 = vpop.f32.mrf.mxu0
  %220 = vmatprep.mubr.f32.mxu0 %v103
  %221 = vmatmul.mubr.f32.gmra.mxu0 %v41
  %v222 = vpop.f32.mrf.mxu0
  %v223 = vadd.f32 %v90, %v222
  %v224 = vpop.f32.mrf.mxu0
  %225 = vmatprep.mubr.f32.mxu0 %v106
  %226 = vmatmul.mubr.f32.gmra.mxu0 %v43
  %v227 = vpop.f32.mrf.mxu0
  %v228 = vadd.f32 %v90, %v227
  %v229 = vpop.f32.mrf.mxu0
  %230 = vmatprep.mubr.f32.mxu0 %v109
  %231 = vmatmul.mubr.f32.gmra.mxu0 %v45
  %v232 = vpop.f32.mrf.mxu0
  %v233 = vadd.f32 %v90, %v232
  %v234 = vpop.f32.mrf.mxu0
  %235 = vmatprep.mubr.f32.mxu0 %v112
  %236 = vmatmul.mubr.f32.gmra.mxu0 %v47
  %v237 = vpop.f32.mrf.mxu0
  %v238 = vadd.f32 %v90, %v237
  %v239 = vpop.f32.mrf.mxu0
  %240 = vmatprep.mubr.f32.mxu0 %v115
  %241 = vmatmul.mubr.f32.gmra.mxu0 %v49
  %v242 = vpop.f32.mrf.mxu0
  %v243 = vadd.f32 %v90, %v242
  %v244 = vpop.f32.mrf.mxu0
  %245 = vmatprep.mubr.f32.mxu0 %v118
  %246 = vmatmul.mubr.f32.gmra.mxu0 %v51
  %v247 = vpop.f32.mrf.mxu0
  %v248 = vadd.f32 %v90, %v247
  %v249 = vpop.f32.mrf.mxu0
  %250 = vmatprep.mubr.f32.mxu0 %v121
  %251 = vmatmul.mubr.f32.gmra.mxu0 %v53
  %v252 = vpop.f32.mrf.mxu0
  %v253 = vadd.f32 %v90, %v252
  %v254 = vpop.f32.mrf.mxu0
  %255 = vmatprep.mubr.f32.mxu0 %v124
  %256 = vmatmul.mubr.f32.gmra.mxu0 %v55
  %v257 = vpop.f32.mrf.mxu0
  %v258 = vadd.f32 %v90, %v257
  %v259 = vpop.f32.mrf.mxu0
  %260 = vmatprep.mubr.f32.mxu0 %v127
  %261 = vmatmul.mubr.f32.gmra.mxu0 %v57
  %v262 = vpop.f32.mrf.mxu0
  %v263 = vadd.f32 %v90, %v262
  %v264 = vpop.f32.mrf.mxu0
  %265 = vmatprep.mubr.f32.mxu0 %v130
  %266 = vmatmul.mubr.f32.gmra.mxu0 %v59
  %v267 = vpop.f32.mrf.mxu0
  %v268 = vadd.f32 %v90, %v267
  %v269 = vpop.f32.mrf.mxu0
  %270 = vmatprep.mubr.f32.mxu0 %v133
  %271 = vmatmul.mubr.f32.gmra.mxu0 %v61
  %v272 = vpop.f32.mrf.mxu0
  %v273 = vadd.f32 %v90, %v272
  %v274 = vpop.f32.mrf.mxu0
  %275 = vmatprep.mubr.f32.mxu0 %v136
  %276 = vmatmul.mubr.f32.gmra.mxu0 %v63
  %v277 = vpop.f32.mrf.mxu0
  %v278 = vadd.f32 %v90, %v277
  %v279 = vpop.f32.mrf.mxu0
  %280 = vmatprep.mubr.f32.mxu0 %v139
  %281 = vmatmul.mubr.f32.gmra.mxu0 %v65
  %v282 = vpop.f32.mrf.mxu0
  %v283 = vadd.f32 %v90, %v282
  %v284 = vpop.f32.mrf.mxu0
  %285 = vdwg.mxu0
  %v286 = vmax.f32 %v208, 0.0
  %v287 = vmax.f32 %v213, 0.0
  %v288 = vmax.f32 %v218, 0.0
  %v289 = vmax.f32 %v223, 0.0
  %v290 = vmax.f32 %v228, 0.0
  %v291 = vmax.f32 %v233, 0.0
  %v292 = vmax.f32 %v238, 0.0
  %v293 = vmax.f32 %v243, 0.0
  %v294 = vmax.f32 %v248, 0.0
  %v295 = vmax.f32 %v253, 0.0
  %v296 = vmax.f32 %v258, 0.0
  %v297 = vmax.f32 %v263, 0.0
  %v298 = vmax.f32 %v268, 0.0
  %v299 = vmax.f32 %v273, 0.0
  %v300 = vmax.f32 %v278, 0.0
  %v301 = vmax.f32 %v283, 0.0
  %vm302 = vcmask 523264
  %303 = vst.msk [vmem:[%s9] sm:$0xff] %vm302, %v286
  %304 = vst.msk [vmem:[%s9 + $0x8] sm:$0xff] %vm302, %v287
  %305 = vst.msk [vmem:[%s9 + $0x10] sm:$0xff] %vm302, %v288
  %306 = vst.msk [vmem:[%s9 + $0x18] sm:$0xff] %vm302, %v289
  %307 = vst.msk [vmem:[%s9 + $0x20] sm:$0xff] %vm302, %v290
  %308 = vst.msk [vmem:[%s9 + $0x28] sm:$0xff] %vm302, %v291
  %309 = vst.msk [vmem:[%s9 + $0x30] sm:$0xff] %vm302, %v292
  %310 = vst.msk [vmem:[%s9 + $0x38] sm:$0xff] %vm302, %v293
  %311 = vst.msk [vmem:[%s9 + $0x40] sm:$0xff] %vm302, %v294
  %312 = vst.msk [vmem:[%s9 + $0x48] sm:$0xff] %vm302, %v295
  %313 = vst.msk [vmem:[%s9 + $0x50] sm:$0xff] %vm302, %v296
  %314 = vst.msk [vmem:[%s9 + $0x58] sm:$0xff] %vm302, %v297
  %315 = vst.msk [vmem:[%s9 + $0x60] sm:$0xff] %vm302, %v298
  %316 = vst.msk [vmem:[%s9 + $0x68] sm:$0xff] %vm302, %v299
  %317 = vst.msk [vmem:[%s9 + $0x70] sm:$0xff] %vm302, %v300
  %318 = vst.msk [vmem:[%s9 + $0x78] sm:$0xff] %vm302, %v301
  %v319 = vld [vmem:[%s1] sm:$0xff]
  %v320 = vld [vmem:[%s1 + $0x8] sm:$0xff]
  %v321 = vld [vmem:[%s1 + $0x10] sm:$0xff]
  %v322 = vld [vmem:[%s1 + $0x18] sm:$0xff]
  %v323 = vld [vmem:[%s1 + $0x20] sm:$0xff]
  %v324 = vld [vmem:[%s1 + $0x28] sm:$0xff]
  %v325 = vld [vmem:[%s1 + $0x30] sm:$0xff]
  %v326 = vld [vmem:[%s1 + $0x38] sm:$0xff]
  %v327 = vld [vmem:[%s5] sm:$0xff]
  %v328 = vld [vmem:[%s5 + $0x8] sm:$0xff]
  %v329 = vld [vmem:[%s5 + $0x10] sm:$0xff]
  %v330 = vld [vmem:[%s5 + $0x18] sm:$0xff]
  %v331 = vld [vmem:[%s5 + $0x20] sm:$0xff]
  %v332 = vld [vmem:[%s5 + $0x28] sm:$0xff]
  %v333 = vld [vmem:[%s5 + $0x30] sm:$0xff]
  %v334 = vld [vmem:[%s5 + $0x38] sm:$0xff]
  %v335 = vld [vmem:[%s5 + $0x40] sm:$0xff]
  %v336 = vld [vmem:[%s5 + $0x48] sm:$0xff]
  %v337 = vld [vmem:[%s5 + $0x50] sm:$0xff]
  %v338 = vld [vmem:[%s5 + $0x58] sm:$0xff]
  %v339 = vld [vmem:[%s5 + $0x60] sm:$0xff]
  %v340 = vld [vmem:[%s5 + $0x68] sm:$0xff]
  %v341 = vld [vmem:[%s5 + $0x70] sm:$0xff]
  %v342 = vld [vmem:[%s5 + $0x78] sm:$0xff]
  %v343 = vld [vmem:[%s5 + $0x80] sm:$0xff]
  %v344 = vld [vmem:[%s5 + $0x88] sm:$0xff]
  %v345 = vld [vmem:[%s6] sm:$0x1]
  %v347 = vlaneseq
  %v348 = vshrl.u32 %v347, 7
  %v349 = vsub.s32 0, %v348
  %v350 = vrot.slane %v345, %v349
  %v353 = vsel %vm92, %v320, 0
  %v356 = vsel %vm92, %v322, 0
  %v359 = vsel %vm92, %v324, 0
  %v362 = vsel %vm92, %v326, 0
  %364 = vmatprep.subr.mxu0 0.0
  %365 = vmatpush1.msra.mxu0 %v342
  %366 = vmatprep.subr.mxu0 0.0
  %367 = vmatpush1.msra.mxu0 %v341
  %368 = vmatprep.subr.mxu0 0.0
  %369 = vmatpush1.msra.mxu0 %v340
  %370 = vmatprep.subr.mxu0 0.0
  %371 = vmatpush1.msra.mxu0 %v339
  %372 = vmatprep.subr.mxu0 0.0
  %373 = vmatpush1.msra.mxu0 %v338
  %374 = vmatprep.subr.mxu0 0.0
  %375 = vmatpush1.msra.mxu0 %v337
  %376 = vmatprep.subr.mxu0 0.0
  %377 = vmatpush1.msra.mxu0 %v336
  %378 = vmatprep.subr.mxu0 0.0
  %379 = vmatpush1.msra.mxu0 %v335
  %380 = vmatprep.subr.mxu0 0.0
  %381 = vmatpush1.msra.mxu0 %v334
  %382 = vmatprep.subr.mxu0 0.0
  %383 = vmatpush1.msra.mxu0 %v333
  %384 = vmatprep.subr.mxu0 0.0
  %385 = vmatpush1.msra.mxu0 %v332
  %386 = vmatprep.subr.mxu0 0.0
  %387 = vmatpush1.msra.mxu0 %v331
  %388 = vmatprep.subr.mxu0 0.0
  %389 = vmatpush1.msra.mxu0 %v330
  %390 = vmatprep.subr.mxu0 0.0
  %391 = vmatpush1.msra.mxu0 %v329
  %392 = vmatprep.subr.mxu0 0.0
  %393 = vmatpush1.msra.mxu0 %v328
  %394 = vmatprep.subr.mxu0 0.0
  %395 = vmatpush1.msra.mxu0 %v327
  %396 = vmatprep.subr.mxu0 0.0
  %397 = vmatpush2.msra.mxu0 0.0
  %398 = vmatprep.subr.mxu0 0.0
  %399 = vmatpush2.msra.mxu0 0.0
  %400 = vmatprep.subr.mxu0 0.0
  %401 = vmatpush2.msra.mxu0 0.0
  %402 = vmatprep.subr.mxu0 0.0
  %403 = vmatpush2.msra.mxu0 0.0
  %404 = vmatprep.subr.mxu0 0.0
  %405 = vmatpush2.msra.mxu0 0.0
  %406 = vmatprep.subr.mxu0 0.0
  %407 = vmatpush2.msra.mxu0 0.0
  %408 = vmatprep.subr.mxu0 0.0
  %409 = vmatpush2.msra.mxu0 0.0
  %410 = vmatprep.subr.mxu0 0.0
  %411 = vmatpush2.msra.mxu0 0.0
  %412 = vmatprep.subr.mxu0 0.0
  %413 = vmatpush2.msra.mxu0 0.0
  %414 = vmatprep.subr.mxu0 0.0
  %415 = vmatpush2.msra.mxu0 0.0
  %416 = vmatprep.subr.mxu0 0.0
  %417 = vmatpush2.msra.mxu0 0.0
  %418 = vmatprep.subr.mxu0 0.0
  %419 = vmatpush2.msra.mxu0 0.0
  %420 = vmatprep.subr.mxu0 0.0
  %421 = vmatpush2.msra.mxu0 0.0
  %422 = vmatprep.subr.mxu0 0.0
  %423 = vmatpush2.msra.mxu0 0.0
  %424 = vmatprep.subr.mxu0 0.0
  %425 = vmatpush2.msra.mxu0 %v344
  %426 = vmatprep.subr.mxu0 0.0
  %427 = vmatpush2.msra.mxu0 %v343
  %428 = vmatprep.mubr.f32.mxu0 %v353
  %429 = vmatmul.mubr.f32.gmra.mxu0 %v319
  %v430 = vpop.f32.mrf.mxu0
  %v431 = vadd.f32 %v350, %v430
  %v432 = vpop.f32.mrf.mxu0
  %433 = vmatprep.mubr.f32.mxu0 %v356
  %434 = vmatmul.mubr.f32.gmra.mxu0 %v321
  %v435 = vpop.f32.mrf.mxu0
  %v436 = vadd.f32 %v350, %v435
  %v437 = vpop.f32.mrf.mxu0
  %438 = vmatprep.mubr.f32.mxu0 %v359
  %439 = vmatmul.mubr.f32.gmra.mxu0 %v323
  %v440 = vpop.f32.mrf.mxu0
  %v441 = vadd.f32 %v350, %v440
  %v442 = vpop.f32.mrf.mxu0
  %443 = vmatprep.mubr.f32.mxu0 %v362
  %444 = vmatmul.mubr.f32.gmra.mxu0 %v325
  %v445 = vpop.f32.mrf.mxu0
  %v446 = vadd.f32 %v350, %v445
  %v447 = vpop.f32.mrf.mxu0
  %448 = vdwg.mxu0
  %v449 = vmax.f32 %v431, 0.0
  %v450 = vmax.f32 %v436, 0.0
  %v451 = vmax.f32 %v441, 0.0
  %v452 = vmax.f32 %v446, 0.0
  %453 = vst.msk [vmem:[%s10] sm:$0xff] %vm302, %v449
  %454 = vst.msk [vmem:[%s10 + $0x8] sm:$0xff] %vm302, %v450
  %455 = vst.msk [vmem:[%s10 + $0x10] sm:$0xff] %vm302, %v451
  %456 = vst.msk [vmem:[%s10 + $0x18] sm:$0xff] %vm302, %v452
  %v457 = vld [vmem:[%s2] sm:$0xff]
  %v458 = vld [vmem:[%s2 + $0x8] sm:$0xff]
  %v459 = vld [vmem:[%s2 + $0x10] sm:$0xff]
  %v460 = vld [vmem:[%s2 + $0x18] sm:$0xff]
  %v461 = vld [vmem:[%s2 + $0x20] sm:$0xff]
  %v462 = vld [vmem:[%s2 + $0x28] sm:$0xff]
  %v463 = vld [vmem:[%s2 + $0x30] sm:$0xff]
  %v464 = vld [vmem:[%s2 + $0x38] sm:$0xff]
  %v465 = vld [vmem:[%s7] sm:$0xff]
  %v466 = vld [vmem:[%s7 + $0x8] sm:$0xff]
  %v467 = vld [vmem:[%s7 + $0x10] sm:$0xff]
  %v468 = vld [vmem:[%s7 + $0x18] sm:$0xff]
  %v469 = vld [vmem:[%s7 + $0x20] sm:$0xff]
  %v470 = vld [vmem:[%s7 + $0x28] sm:$0xff]
  %v471 = vld [vmem:[%s7 + $0x30] sm:$0xff]
  %v472 = vld [vmem:[%s7 + $0x38] sm:$0xff]
  %v473 = vld [vmem:[%s7 + $0x40] sm:$0xff]
  %v474 = vld [vmem:[%s7 + $0x48] sm:$0xff]
  %v475 = vld [vmem:[%s7 + $0x50] sm:$0xff]
  %v476 = vld [vmem:[%s7 + $0x58] sm:$0xff]
  %v477 = vld [vmem:[%s7 + $0x60] sm:$0xff]
  %v478 = vld [vmem:[%s7 + $0x68] sm:$0xff]
  %v479 = vld [vmem:[%s7 + $0x70] sm:$0xff]
  %v480 = vld [vmem:[%s7 + $0x78] sm:$0xff]
  %v481 = vld [vmem:[%s7 + $0x80] sm:$0xff]
  %v482 = vld [vmem:[%s7 + $0x88] sm:$0xff]
  %v483 = vld [vmem:[%s7 + $0x90] sm:$0xff]
  %v484 = vld [vmem:[%s7 + $0x98] sm:$0xff]
  %v485 = vld [vmem:[%s7 + $0xa0] sm:$0xff]
  %v486 = vld [vmem:[%s7 + $0xa8] sm:$0xff]
  %v487 = vld [vmem:[%s7 + $0xb0] sm:$0xff]
  %v488 = vld [vmem:[%s7 + $0xb8] sm:$0xff]
  %v489 = vld [vmem:[%s7 + $0xc0] sm:$0xff]
  %v490 = vld [vmem:[%s7 + $0xc8] sm:$0xff]
  %v491 = vld [vmem:[%s7 + $0xd0] sm:$0xff]
  %v492 = vld [vmem:[%s8] sm:$0x1]
  %v494 = vlaneseq
  %v495 = vshrl.u32 %v494, 7
  %v496 = vsub.s32 0, %v495
  %v497 = vrot.slane %v492, %v496
  %vm499 = vcmask 719872
  %v501 = vsel %vm499, %v458, 0
  %v504 = vsel %vm499, %v460, 0
  %v507 = vsel %vm499, %v462, 0
  %v510 = vsel %vm499, %v464, 0
  %512 = vmatprep.subr.mxu0 0.0
  %513 = vmatpush1.msra.mxu0 %v480
  %514 = vmatprep.subr.mxu0 0.0
  %515 = vmatpush1.msra.mxu0 %v479
  %516 = vmatprep.subr.mxu0 0.0
  %517 = vmatpush1.msra.mxu0 %v478
  %518 = vmatprep.subr.mxu0 0.0
  %519 = vmatpush1.msra.mxu0 %v477
  %520 = vmatprep.subr.mxu0 0.0
  %521 = vmatpush1.msra.mxu0 %v476
  %522 = vmatprep.subr.mxu0 0.0
  %523 = vmatpush1.msra.mxu0 %v475
  %524 = vmatprep.subr.mxu0 0.0
  %525 = vmatpush1.msra.mxu0 %v474
  %526 = vmatprep.subr.mxu0 0.0
  %527 = vmatpush1.msra.mxu0 %v473
  %528 = vmatprep.subr.mxu0 0.0
  %529 = vmatpush1.msra.mxu0 %v472
  %530 = vmatprep.subr.mxu0 0.0
  %531 = vmatpush1.msra.mxu0 %v471
  %532 = vmatprep.subr.mxu0 0.0
  %533 = vmatpush1.msra.mxu0 %v470
  %534 = vmatprep.subr.mxu0 0.0
  %535 = vmatpush1.msra.mxu0 %v469
  %536 = vmatprep.subr.mxu0 0.0
  %537 = vmatpush1.msra.mxu0 %v468
  %538 = vmatprep.subr.mxu0 0.0
  %539 = vmatpush1.msra.mxu0 %v467
  %540 = vmatprep.subr.mxu0 0.0
  %541 = vmatpush1.msra.mxu0 %v466
  %542 = vmatprep.subr.mxu0 0.0
  %543 = vmatpush1.msra.mxu0 %v465
  %544 = vmatprep.subr.mxu0 0.0
  %545 = vmatpush2.msra.mxu0 0.0
  %546 = vmatprep.subr.mxu0 0.0
  %547 = vmatpush2.msra.mxu0 0.0
  %548 = vmatprep.subr.mxu0 0.0
  %549 = vmatpush2.msra.mxu0 0.0
  %550 = vmatprep.subr.mxu0 0.0
  %551 = vmatpush2.msra.mxu0 0.0
  %552 = vmatprep.subr.mxu0 0.0
  %553 = vmatpush2.msra.mxu0 0.0
  %554 = vmatprep.subr.mxu0 0.0
  %555 = vmatpush2.msra.mxu0 %v491
  %556 = vmatprep.subr.mxu0 0.0
  %557 = vmatpush2.msra.mxu0 %v490
  %558 = vmatprep.subr.mxu0 0.0
  %559 = vmatpush2.msra.mxu0 %v489
  %560 = vmatprep.subr.mxu0 0.0
  %561 = vmatpush2.msra.mxu0 %v488
  %562 = vmatprep.subr.mxu0 0.0
  %563 = vmatpush2.msra.mxu0 %v487
  %564 = vmatprep.subr.mxu0 0.0
  %565 = vmatpush2.msra.mxu0 %v486
  %566 = vmatprep.subr.mxu0 0.0
  %567 = vmatpush2.msra.mxu0 %v485
  %568 = vmatprep.subr.mxu0 0.0
  %569 = vmatpush2.msra.mxu0 %v484
  %570 = vmatprep.subr.mxu0 0.0
  %571 = vmatpush2.msra.mxu0 %v483
  %572 = vmatprep.subr.mxu0 0.0
  %573 = vmatpush2.msra.mxu0 %v482
  %574 = vmatprep.subr.mxu0 0.0
  %575 = vmatpush2.msra.mxu0 %v481
  %576 = vmatprep.mubr.f32.mxu0 %v501
  %577 = vmatmul.mubr.f32.gmra.mxu0 %v457
  %v578 = vpop.f32.mrf.mxu0
  %v579 = vadd.f32 %v497, %v578
  %v580 = vpop.f32.mrf.mxu0
  %581 = vmatprep.mubr.f32.mxu0 %v504
  %582 = vmatmul.mubr.f32.gmra.mxu0 %v459
  %v583 = vpop.f32.mrf.mxu0
  %v584 = vadd.f32 %v497, %v583
  %v585 = vpop.f32.mrf.mxu0
  %586 = vmatprep.mubr.f32.mxu0 %v507
  %587 = vmatmul.mubr.f32.gmra.mxu0 %v461
  %v588 = vpop.f32.mrf.mxu0
  %v589 = vadd.f32 %v497, %v588
  %v590 = vpop.f32.mrf.mxu0
  %591 = vmatprep.mubr.f32.mxu0 %v510
  %592 = vmatmul.mubr.f32.gmra.mxu0 %v463
  %v593 = vpop.f32.mrf.mxu0
  %v594 = vadd.f32 %v497, %v593
  %v595 = vpop.f32.mrf.mxu0
  %596 = vdwg.mxu0
  %v597 = vmax.f32 %v579, 0.0
  %v598 = vmax.f32 %v584, 0.0
  %v599 = vmax.f32 %v589, 0.0
  %v600 = vmax.f32 %v594, 0.0
  %601 = vst.msk [vmem:[%s11] sm:$0xff] %vm302, %v597
  %602 = vst.msk [vmem:[%s11 + $0x8] sm:$0xff] %vm302, %v598
  %603 = vst.msk [vmem:[%s11 + $0x10] sm:$0xff] %vm302, %v599
  %604 = vst.msk [vmem:[%s11 + $0x18] sm:$0xff] %vm302, %v600
  // Predicated region
  $region38: #{policy_net_forward.3} parent=0 // pred_check
    _
  $region39: #{policy_net_forward.3} parent=0 // pred_check_branch
    %606 = sbr.rel (0) target = $region41
  $region40: #{policy_net_forward.3} parent=0 // pred_region
    _
  $region41: #{policy_net_forward.3} parent=0 // pred_fallthru
    _
  // Predicated region
  $region42: #{policy_net_forward.3} parent=0 // pred_check
    _
  $region43: #{policy_net_forward.3} parent=0 // pred_check_branch
    %608 = sbr.rel (0) target = $region45
  $region44: #{policy_net_forward.3} parent=0 // pred_region
    _
  $region45: #{policy_net_forward.3} parent=0 // pred_fallthru
    _
  // Predicated region
  $region46: #{policy_net_forward.3} parent=0 // pred_check
    _
  $region47: #{policy_net_forward.3} parent=0 // pred_check_branch
    %610 = sbr.rel (0) target = $region49
  $region48: #{policy_net_forward.3} parent=0 // pred_region
    _
  $region49: #{policy_net_forward.3} parent=0 // pred_fallthru
    _
  // Predicated region
  $region50: #{policy_net_forward.3} parent=0 // pred_check
    _
  $region51: #{policy_net_forward.3} parent=0 // pred_check_branch
    %612 = sbr.rel (0) target = $region53
  $region52: #{policy_net_forward.3} parent=0 // pred_region
    _
  $region53: #{policy_net_forward.3} parent=0 // pred_fallthru
    _
  // Predicated region
  $region54: #{policy_net_forward.3} parent=0 // pred_check
    _
  $region55: #{policy_net_forward.3} parent=0 // pred_check_branch
    %614 = sbr.rel (0) target = $region57
  $region56: #{policy_net_forward.3} parent=0 // pred_region
    _
  $region57: #{policy_net_forward.3} parent=0 // pred_fallthru
    _
  // Predicated region
  $region58: #{policy_net_forward.3} parent=0 // pred_check
    _
  $region59: #{policy_net_forward.3} parent=0 // pred_check_branch
    %616 = sbr.rel (0) target = $region61
  $region60: #{policy_net_forward.3} parent=0 // pred_region
    _
  $region61: #{policy_net_forward.3} parent=0 // pred_fallthru
    _

// kernel: policy_net_forward.4
$region0: #{policy_net_forward.4}
  #allocation0 [shape = 'u32[]', space=smem, size = 0x4, offset = 0x4, fixed_abs, tag = 'smem constant byte address 0x4 - core index']
  #allocation1 [shape = 'u32[144,128]{1,0:T(1,128)}', space=vmem, size = 0x12000, scoped, tag = 'internal scratch']
  %s0 = inlined_call_operand.vmem [shape: f32[16,512], index: 0, kind: input, shape index: {}]
  %s1 = inlined_call_operand.vmem [shape: f32[16,1], index: 1, kind: input, shape index: {}]
  %s2 = inlined_call_operand.vmem [shape: f32[16,5], index: 2, kind: input, shape index: {}]
  %s3 = inlined_call_operand.vmem [shape: f32[4,512], index: 3, kind: input, shape index: {}]
  %s4 = inlined_call_operand.vmem [shape: f32[4,512], index: 4, kind: input, shape index: {}]
  %s5 = inlined_call_operand.vmem [shape: f32[4,1], index: 5, kind: input, shape index: {}]
  %s6 = inlined_call_operand.vmem [shape: f32[4,5], index: 6, kind: input, shape index: {}]
  %s7 = inlined_call_operand.vmem [shape: f32[5,16], index: 7, kind: input, shape index: {}]
  %s8 = inlined_call_operand.vmem [shape: f32[1,16], index: 8, kind: input, shape index: {}]
  %s9 = inlined_call_operand.vmem [shape: f32[512,32], index: 9, kind: input, shape index: {}]
  %s10 = inlined_call_operand.vmem [shape: f32[1,32], index: 10, kind: input, shape index: {}]
  %s11 = inlined_call_operand.vmem [shape: f32[512,64], index: 11, kind: input, shape index: {}]
  %s12 = inlined_call_operand.vmem [shape: f32[512,64], index: 12, kind: input, shape index: {}]
  %s13 = inlined_call_operand.vmem [shape: f32[1,64], index: 13, kind: input, shape index: {}]
  %s14 = inlined_call_operand.vmem [shape: f32[48,32], index: 14, kind: input, shape index: {}]
  %s15 = inlined_call_operand.vmem [shape: f32[1,32], index: 15, kind: input, shape index: {}]
  %s16 = inlined_call_operand.vmem [shape: f32[80,32], index: 16, kind: input, shape index: {}]
  %s17 = inlined_call_operand.vmem [shape: f32[1,32], index: 17, kind: input, shape index: {}]
  %s18 = inlined_call_operand.vmem [shape: f32[16,32], index: 18, kind: output, shape index: {0}]
  %s19 = inlined_call_operand.vmem [shape: f32[4,32], index: 19, kind: output, shape index: {1}]
  %20 = xla_tuple %s18, %s19
  %s21 = sld [smem:[#allocation0]]
  $region90: #{policy_net_forward.4} parent=0
    _
  %s23 = ssub.s32 1, %s21
  %s24 = scalar_select 0, %s23, %s21
  // Predicated region
  $region2: #{policy_net_forward.4} parent=0 // pred_check
    _
  $region3: #{policy_net_forward.4} parent=0 // pred_check_branch
    %26 = sbr.rel (0) target = $region5
  $region4: #{policy_net_forward.4} parent=0 // pred_region
    _
  $region5: #{policy_net_forward.4} parent=0 // pred_fallthru
    _
  // Predicated region
  $region6: #{policy_net_forward.4} parent=0 // pred_check
    _
  $region7: #{policy_net_forward.4} parent=0 // pred_check_branch
    %28 = sbr.rel (0) target = $region9
  $region8: #{policy_net_forward.4} parent=0 // pred_region
    _
  $region9: #{policy_net_forward.4} parent=0 // pred_fallthru
    _
  // Predicated region
  $region10: #{policy_net_forward.4} parent=0 // pred_check
    _
  $region11: #{policy_net_forward.4} parent=0 // pred_check_branch
    %30 = sbr.rel (0) target = $region13
  $region12: #{policy_net_forward.4} parent=0 // pred_region
    _
  $region13: #{policy_net_forward.4} parent=0 // pred_fallthru
    _
  // Predicated region
  $region14: #{policy_net_forward.4} parent=0 // pred_check
    _
  $region15: #{policy_net_forward.4} parent=0 // pred_check_branch
    %32 = sbr.rel (0) target = $region17
  $region16: #{policy_net_forward.4} parent=0 // pred_region
    _
  $region17: #{policy_net_forward.4} parent=0 // pred_fallthru
    _
  // Predicated region
  $region18: #{policy_net_forward.4} parent=0 // pred_check
    _
  $region19: #{policy_net_forward.4} parent=0 // pred_check_branch
    %34 = sbr.rel (0) target = $region21
  $region20: #{policy_net_forward.4} parent=0 // pred_region
    _
  $region21: #{policy_net_forward.4} parent=0 // pred_fallthru
    _
  // Predicated region
  $region22: #{policy_net_forward.4} parent=0 // pred_check
    _
  $region23: #{policy_net_forward.4} parent=0 // pred_check_branch
    %36 = sbr.rel (0) target = $region25
  $region24: #{policy_net_forward.4} parent=0 // pred_region
    _
  $region25: #{policy_net_forward.4} parent=0 // pred_fallthru
    _
  // Predicated region
  $region26: #{policy_net_forward.4} parent=0 // pred_check
    _
  $region27: #{policy_net_forward.4} parent=0 // pred_check_branch
    %38 = sbr.rel (0) target = $region29
  $region28: #{policy_net_forward.4} parent=0 // pred_region
    _
  $region29: #{policy_net_forward.4} parent=0 // pred_fallthru
    _
  // Predicated region
  $region30: #{policy_net_forward.4} parent=0 // pred_check
    _
  $region31: #{policy_net_forward.4} parent=0 // pred_check_branch
    %40 = sbr.rel (0) target = $region33
  $region32: #{policy_net_forward.4} parent=0 // pred_region
    _
  $region33: #{policy_net_forward.4} parent=0 // pred_fallthru
    _
  // Predicated region
  $region34: #{policy_net_forward.4} parent=0 // pred_check
    _
  $region35: #{policy_net_forward.4} parent=0 // pred_check_branch
    %42 = sbr.rel (0) target = $region37
  $region36: #{policy_net_forward.4} parent=0 // pred_region
    _
  $region37: #{policy_net_forward.4} parent=0 // pred_fallthru
    _
  // Predicated region
  $region38: #{policy_net_forward.4} parent=0 // pred_check
    _
  $region39: #{policy_net_forward.4} parent=0 // pred_check_branch
    %44 = sbr.rel (0) target = $region41
  $region40: #{policy_net_forward.4} parent=0 // pred_region
    _
  $region41: #{policy_net_forward.4} parent=0 // pred_fallthru
    _
  // Predicated region
  $region42: #{policy_net_forward.4} parent=0 // pred_check
    _
  $region43: #{policy_net_forward.4} parent=0 // pred_check_branch
    %46 = sbr.rel (0) target = $region45
  $region44: #{policy_net_forward.4} parent=0 // pred_region
    _
  $region45: #{policy_net_forward.4} parent=0 // pred_fallthru
    _
  // Predicated region
  $region46: #{policy_net_forward.4} parent=0 // pred_check
    _
  $region47: #{policy_net_forward.4} parent=0 // pred_check_branch
    %48 = sbr.rel (0) target = $region49
  $region48: #{policy_net_forward.4} parent=0 // pred_region
    _
  $region49: #{policy_net_forward.4} parent=0 // pred_fallthru
    _
  // Predicated region
  $region50: #{policy_net_forward.4} parent=0 // pred_check
    _
  $region51: #{policy_net_forward.4} parent=0 // pred_check_branch
    %50 = sbr.rel (0) target = $region53
  $region52: #{policy_net_forward.4} parent=0 // pred_region
    _
  $region53: #{policy_net_forward.4} parent=0 // pred_fallthru
    _
  // Predicated region
  $region54: #{policy_net_forward.4} parent=0 // pred_check
    _
  $region55: #{policy_net_forward.4} parent=0 // pred_check_branch
    %52 = sbr.rel (0) target = $region57
  $region56: #{policy_net_forward.4} parent=0 // pred_region
    _
  $region57: #{policy_net_forward.4} parent=0 // pred_fallthru
    _
  // Predicated region
  $region58: #{policy_net_forward.4} parent=0 // pred_check
    _
  $region59: #{policy_net_forward.4} parent=0 // pred_check_branch
    %54 = sbr.rel (0) target = $region61
  $region60: #{policy_net_forward.4} parent=0 // pred_region
    _
  $region61: #{policy_net_forward.4} parent=0 // pred_fallthru
    _
  // Predicated region
  $region62: #{policy_net_forward.4} parent=0 // pred_check
    _
  $region63: #{policy_net_forward.4} parent=0 // pred_check_branch
    %56 = sbr.rel (0) target = $region65
  $region64: #{policy_net_forward.4} parent=0 // pred_region
    _
  $region65: #{policy_net_forward.4} parent=0 // pred_fallthru
    _
  // Predicated region
  $region66: #{policy_net_forward.4} parent=0 // pred_check
    _
  $region67: #{policy_net_forward.4} parent=0 // pred_check_branch
    %58 = sbr.rel (0) target = $region69
  $region68: #{policy_net_forward.4} parent=0 // pred_region
    _
  $region69: #{policy_net_forward.4} parent=0 // pred_fallthru
    _
  // Predicated region
  $region70: #{policy_net_forward.4} parent=0 // pred_check
    _
  $region71: #{policy_net_forward.4} parent=0 // pred_check_branch
    %60 = sbr.rel (0) target = $region73
  $region72: #{policy_net_forward.4} parent=0 // pred_region
    _
  $region73: #{policy_net_forward.4} parent=0 // pred_fallthru
    _
  %v61 = vld [vmem:[%s0] sm:$0xff]
  %v62 = vld [vmem:[%s0 + $0x8] sm:$0xff]
  %v63 = vld [vmem:[%s0 + $0x10] sm:$0xff]
  %v64 = vld [vmem:[%s0 + $0x18] sm:$0xff]
  %v65 = vld [vmem:[%s0 + $0x20] sm:$0xff]
  %v66 = vld [vmem:[%s0 + $0x28] sm:$0xff]
  %v67 = vld [vmem:[%s0 + $0x30] sm:$0xff]
  %v68 = vld [vmem:[%s0 + $0x38] sm:$0xff]
  %v69 = vld [vmem:[%s9] sm:$0xff]
  %v70 = vld [vmem:[%s9 + $0x8] sm:$0xff]
  %v71 = vld [vmem:[%s9 + $0x10] sm:$0xff]
  %v72 = vld [vmem:[%s9 + $0x18] sm:$0xff]
  %v73 = vld [vmem:[%s9 + $0x20] sm:$0xff]
  %v74 = vld [vmem:[%s9 + $0x28] sm:$0xff]
  %v75 = vld [vmem:[%s9 + $0x30] sm:$0xff]
  %v76 = vld [vmem:[%s9 + $0x38] sm:$0xff]
  %v77 = vld [vmem:[%s9 + $0x40] sm:$0xff]
  %v78 = vld [vmem:[%s9 + $0x48] sm:$0xff]
  %v79 = vld [vmem:[%s9 + $0x50] sm:$0xff]
  %v80 = vld [vmem:[%s9 + $0x58] sm:$0xff]
  %v81 = vld [vmem:[%s9 + $0x60] sm:$0xff]
  %v82 = vld [vmem:[%s9 + $0x68] sm:$0xff]
  %v83 = vld [vmem:[%s9 + $0x70] sm:$0xff]
  %v84 = vld [vmem:[%s9 + $0x78] sm:$0xff]
  %v85 = vld [vmem:[%s9 + $0x80] sm:$0xff]
  %v86 = vld [vmem:[%s9 + $0x88] sm:$0xff]
  %v87 = vld [vmem:[%s9 + $0x90] sm:$0xff]
  %v88 = vld [vmem:[%s9 + $0x98] sm:$0xff]
  %v89 = vld [vmem:[%s9 + $0xa0] sm:$0xff]
  %v90 = vld [vmem:[%s9 + $0xa8] sm:$0xff]
  %v91 = vld [vmem:[%s9 + $0xb0] sm:$0xff]
  %v92 = vld [vmem:[%s9 + $0xb8] sm:$0xff]
  %v93 = vld [vmem:[%s9 + $0xc0] sm:$0xff]
  %v94 = vld [vmem:[%s9 + $0xc8] sm:$0xff]
  %v95 = vld [vmem:[%s9 + $0xd0] sm:$0xff]
  %v96 = vld [vmem:[%s9 + $0xd8] sm:$0xff]
  %v97 = vld [vmem:[%s9 + $0xe0] sm:$0xff]
  %v98 = vld [vmem:[%s9 + $0xe8] sm:$0xff]
  %v99 = vld [vmem:[%s9 + $0xf0] sm:$0xff]
  %v100 = vld [vmem:[%s9 + $0xf8] sm:$0xff]
  %v101 = vld [vmem:[%s9 + $0x100] sm:$0xff]
  %v102 = vld [vmem:[%s9 + $0x108] sm:$0xff]
  %v103 = vld [vmem:[%s9 + $0x110] sm:$0xff]
  %v104 = vld [vmem:[%s9 + $0x118] sm:$0xff]
  %v105 = vld [vmem:[%s9 + $0x120] sm:$0xff]
  %v106 = vld [vmem:[%s9 + $0x128] sm:$0xff]
  %v107 = vld [vmem:[%s9 + $0x130] sm:$0xff]
  %v108 = vld [vmem:[%s9 + $0x138] sm:$0xff]
  %v109 = vld [vmem:[%s9 + $0x140] sm:$0xff]
  %v110 = vld [vmem:[%s9 + $0x148] sm:$0xff]
  %v111 = vld [vmem:[%s9 + $0x150] sm:$0xff]
  %v112 = vld [vmem:[%s9 + $0x158] sm:$0xff]
  %v113 = vld [vmem:[%s9 + $0x160] sm:$0xff]
  %v114 = vld [vmem:[%s9 + $0x168] sm:$0xff]
  %v115 = vld [vmem:[%s9 + $0x170] sm:$0xff]
  %v116 = vld [vmem:[%s9 + $0x178] sm:$0xff]
  %v117 = vld [vmem:[%s9 + $0x180] sm:$0xff]
  %v118 = vld [vmem:[%s9 + $0x188] sm:$0xff]
  %v119 = vld [vmem:[%s9 + $0x190] sm:$0xff]
  %v120 = vld [vmem:[%s9 + $0x198] sm:$0xff]
  %v121 = vld [vmem:[%s9 + $0x1a0] sm:$0xff]
  %v122 = vld [vmem:[%s9 + $0x1a8] sm:$0xff]
  %v123 = vld [vmem:[%s9 + $0x1b0] sm:$0xff]
  %v124 = vld [vmem:[%s9 + $0x1b8] sm:$0xff]
  %v125 = vld [vmem:[%s9 + $0x1c0] sm:$0xff]
  %v126 = vld [vmem:[%s9 + $0x1c8] sm:$0xff]
  %v127 = vld [vmem:[%s9 + $0x1d0] sm:$0xff]
  %v128 = vld [vmem:[%s9 + $0x1d8] sm:$0xff]
  %v129 = vld [vmem:[%s9 + $0x1e0] sm:$0xff]
  %v130 = vld [vmem:[%s9 + $0x1e8] sm:$0xff]
  %v131 = vld [vmem:[%s9 + $0x1f0] sm:$0xff]
  %v132 = vld [vmem:[%s9 + $0x1f8] sm:$0xff]
  %v133 = vld [vmem:[%s10] sm:$0x1]
  %v135 = vlaneseq
  %v136 = vshrl.u32 %v135, 7
  %v137 = vsub.s32 0, %v136
  %v138 = vrot.slane %v133, %v137
  %140 = vmatprep.subr.mxu0 0.0
  %141 = vmatpush1.msra.mxu0 %v84
  %142 = vmatprep.subr.mxu0 0.0
  %143 = vmatpush1.msra.mxu0 %v83
  %144 = vmatprep.subr.mxu0 0.0
  %145 = vmatpush1.msra.mxu0 %v82
  %146 = vmatprep.subr.mxu0 0.0
  %147 = vmatpush1.msra.mxu0 %v81
  %148 = vmatprep.subr.mxu0 0.0
  %149 = vmatpush1.msra.mxu0 %v80
  %150 = vmatprep.subr.mxu0 0.0
  %151 = vmatpush1.msra.mxu0 %v79
  %152 = vmatprep.subr.mxu0 0.0
  %153 = vmatpush1.msra.mxu0 %v78
  %154 = vmatprep.subr.mxu0 0.0
  %155 = vmatpush1.msra.mxu0 %v77
  %156 = vmatprep.subr.mxu0 0.0
  %157 = vmatpush1.msra.mxu0 %v76
  %158 = vmatprep.subr.mxu0 0.0
  %159 = vmatpush1.msra.mxu0 %v75
  %160 = vmatprep.subr.mxu0 0.0
  %161 = vmatpush1.msra.mxu0 %v74
  %162 = vmatprep.subr.mxu0 0.0
  %163 = vmatpush1.msra.mxu0 %v73
  %164 = vmatprep.subr.mxu0 0.0
  %165 = vmatpush1.msra.mxu0 %v72
  %166 = vmatprep.subr.mxu0 0.0
  %167 = vmatpush1.msra.mxu0 %v71
  %168 = vmatprep.subr.mxu0 0.0
  %169 = vmatpush1.msra.mxu0 %v70
  %170 = vmatprep.subr.mxu0 0.0
  %171 = vmatpush1.msra.mxu0 %v69
  %172 = vmatprep.subr.mxu0 0.0
  %173 = vmatpush2.msra.mxu0 %v100
  %174 = vmatprep.subr.mxu0 0.0
  %175 = vmatpush2.msra.mxu0 %v99
  %176 = vmatprep.subr.mxu0 0.0
  %177 = vmatpush2.msra.mxu0 %v98
  %178 = vmatprep.subr.mxu0 0.0
  %179 = vmatpush2.msra.mxu0 %v97
  %180 = vmatprep.subr.mxu0 0.0
  %181 = vmatpush2.msra.mxu0 %v96
  %182 = vmatprep.subr.mxu0 0.0
  %183 = vmatpush2.msra.mxu0 %v95
  %184 = vmatprep.subr.mxu0 0.0
  %185 = vmatpush2.msra.mxu0 %v94
  %186 = vmatprep.subr.mxu0 0.0
  %187 = vmatpush2.msra.mxu0 %v93
  %188 = vmatprep.subr.mxu0 0.0
  %189 = vmatpush2.msra.mxu0 %v92
  %190 = vmatprep.subr.mxu0 0.0
  %191 = vmatpush2.msra.mxu0 %v91
  %192 = vmatprep.subr.mxu0 0.0
  %193 = vmatpush2.msra.mxu0 %v90
  %194 = vmatprep.subr.mxu0 0.0
  %195 = vmatpush2.msra.mxu0 %v89
  %196 = vmatprep.subr.mxu0 0.0
  %197 = vmatpush2.msra.mxu0 %v88
  %198 = vmatprep.subr.mxu0 0.0
  %199 = vmatpush2.msra.mxu0 %v87
  %200 = vmatprep.subr.mxu0 0.0
  %201 = vmatpush2.msra.mxu0 %v86
  %202 = vmatprep.subr.mxu0 0.0
  %203 = vmatpush2.msra.mxu0 %v85
  %204 = vmatprep.mubr.f32.mxu0 %v62
  %205 = vmatmul.mubr.f32.gmra.mxu0 %v61
  %v206 = vpop.f32.mrf.mxu0
  %v207 = vadd.f32 %v138, %v206
  %v208 = vpop.f32.mrf.mxu0
  %209 = vmatprep.mubr.f32.mxu0 %v66
  %210 = vmatmul.mubr.f32.gmra.mxu0 %v65
  %v211 = vpop.f32.mrf.mxu0
  %v212 = vadd.f32 %v138, %v211
  %v213 = vpop.f32.mrf.mxu0
  %214 = vdwg.mxu0
  %215 = vmatprep.subr.mxu0 0.0
  %216 = vmatpush1.msra.mxu0 %v116
  %217 = vmatprep.subr.mxu0 0.0
  %218 = vmatpush1.msra.mxu0 %v115
  %219 = vmatprep.subr.mxu0 0.0
  %220 = vmatpush1.msra.mxu0 %v114
  %221 = vmatprep.subr.mxu0 0.0
  %222 = vmatpush1.msra.mxu0 %v113
  %223 = vmatprep.subr.mxu0 0.0
  %224 = vmatpush1.msra.mxu0 %v112
  %225 = vmatprep.subr.mxu0 0.0
  %226 = vmatpush1.msra.mxu0 %v111
  %227 = vmatprep.subr.mxu0 0.0
  %228 = vmatpush1.msra.mxu0 %v110
  %229 = vmatprep.subr.mxu0 0.0
  %230 = vmatpush1.msra.mxu0 %v109
  %231 = vmatprep.subr.mxu0 0.0
  %232 = vmatpush1.msra.mxu0 %v108
  %233 = vmatprep.subr.mxu0 0.0
  %234 = vmatpush1.msra.mxu0 %v107
  %235 = vmatprep.subr.mxu0 0.0
  %236 = vmatpush1.msra.mxu0 %v106
  %237 = vmatprep.subr.mxu0 0.0
  %238 = vmatpush1.msra.mxu0 %v105
  %239 = vmatprep.subr.mxu0 0.0
  %240 = vmatpush1.msra.mxu0 %v104
  %241 = vmatprep.subr.mxu0 0.0
  %242 = vmatpush1.msra.mxu0 %v103
  %243 = vmatprep.subr.mxu0 0.0
  %244 = vmatpush1.msra.mxu0 %v102
  %245 = vmatprep.subr.mxu0 0.0
  %246 = vmatpush1.msra.mxu0 %v101
  %247 = vmatprep.subr.mxu0 0.0
  %248 = vmatpush2.msra.mxu0 %v132
  %249 = vmatprep.subr.mxu0 0.0
  %250 = vmatpush2.msra.mxu0 %v131
  %251 = vmatprep.subr.mxu0 0.0
  %252 = vmatpush2.msra.mxu0 %v130
  %253 = vmatprep.subr.mxu0 0.0
  %254 = vmatpush2.msra.mxu0 %v129
  %255 = vmatprep.subr.mxu0 0.0
  %256 = vmatpush2.msra.mxu0 %v128
  %257 = vmatprep.subr.mxu0 0.0
  %258 = vmatpush2.msra.mxu0 %v127
  %259 = vmatprep.subr.mxu0 0.0
  %260 = vmatpush2.msra.mxu0 %v126
  %261 = vmatprep.subr.mxu0 0.0
  %262 = vmatpush2.msra.mxu0 %v125
  %263 = vmatprep.subr.mxu0 0.0
  %264 = vmatpush2.msra.mxu0 %v124
  %265 = vmatprep.subr.mxu0 0.0
  %266 = vmatpush2.msra.mxu0 %v123
  %267 = vmatprep.subr.mxu0 0.0
  %268 = vmatpush2.msra.mxu0 %v122
  %269 = vmatprep.subr.mxu0 0.0
  %270 = vmatpush2.msra.mxu0 %v121
  %271 = vmatprep.subr.mxu0 0.0
  %272 = vmatpush2.msra.mxu0 %v120
  %273 = vmatprep.subr.mxu0 0.0
  %274 = vmatpush2.msra.mxu0 %v119
  %275 = vmatprep.subr.mxu0 0.0
  %276 = vmatpush2.msra.mxu0 %v118
  %277 = vmatprep.subr.mxu0 0.0
  %278 = vmatpush2.msra.mxu0 %v117
  %279 = vmatprep.mubr.f32.mxu0 %v64
  %280 = vmatmul.mubr.f32.gmra.mxu0 %v63
  %v281 = vpop.f32.mrf.mxu0
  %v282 = vadd.f32 %v207, %v281
  %v283 = vpop.f32.mrf.mxu0
  %284 = vmatprep.mubr.f32.mxu0 %v68
  %285 = vmatmul.mubr.f32.gmra.mxu0 %v67
  %v286 = vpop.f32.mrf.mxu0
  %v287 = vadd.f32 %v212, %v286
  %v288 = vpop.f32.mrf.mxu0
  %289 = vdwg.mxu0
  %v290 = vmax.f32 %v282, 0.0
  %v291 = vmax.f32 %v287, 0.0
  %v292 = vld [vmem:[%s1] sm:$0xff]
  %v293 = vld [vmem:[%s1 + $0x8] sm:$0xff]
  %295 = vset.pattern.permute.xlu0 0
  %296 = vperm.xlu0 %295, %v292
  %v297 = vpop.permute.xlu0 %296
  %300 = vset.pattern.permute.xlu0 0
  %301 = vperm.xlu0 %300, %v293
  %v302 = vpop.permute.xlu0 %301
  %v304 = vmul.f32 %v290, %v297
  %v305 = vmul.f32 %v291, %v302
  %v306 = vld [vmem:[%s2] sm:$0xff]
  %v307 = vld [vmem:[%s2 + $0x8] sm:$0xff]
  %v308 = vld [vmem:[%s7] sm:$0x1f]
  %v309 = vld [vmem:[%s8] sm:$0x1]
  %311 = vset.pattern.permute.xlu0 0
  %312 = vperm.xlu0 %311, %v306
  %v313 = vpop.permute.xlu0 %312
  %316 = vset.pattern.permute.xlu0 0
  %317 = vperm.xlu0 %316, %v307
  %v318 = vpop.permute.xlu0 %317
  %v320 = vlaneseq
  %v321 = vshrl.u32 %v320, 7
  %v322 = vsub.s32 0, %v321
  %v323 = vrot.slane %v308, %v322
  %v324 = vmul.f32 %v313, %v323
  %v325 = vmul.f32 %v318, %v323
  %v327 = vlaneseq
  %v328 = vshrl.u32 %v327, 7
  %v329 = vsub.s32 0, %v328
  %v330 = vrot.slane %v309, %v329
  %v332 = vadd.f32 %v330, %v324
  %v333 = vadd.f32 %v330, %v325
  %334 = vset.pattern.permute.xlu0 1
  %335 = vperm.xlu0 %334, %v306
  %v336 = vpop.permute.xlu0 %335
  %338 = vset.pattern.permute.xlu0 1
  %339 = vperm.xlu0 %338, %v307
  %v340 = vpop.permute.xlu0 %339
  %v342 = vlaneseq
  %v343 = vshrl.u32 %v342, 7
  %v344 = vsub.s32 1, %v343
  %v345 = vrot.slane %v308, %v344
  %v346 = vmul.f32 %v336, %v345
  %v347 = vmul.f32 %v340, %v345
  %v348 = vadd.f32 %v332, %v346
  %v349 = vadd.f32 %v333, %v347
  %350 = vset.pattern.permute.xlu0 2
  %351 = vperm.xlu0 %350, %v306
  %v352 = vpop.permute.xlu0 %351
  %354 = vset.pattern.permute.xlu0 2
  %355 = vperm.xlu0 %354, %v307
  %v356 = vpop.permute.xlu0 %355
  %v358 = vlaneseq
  %v359 = vshrl.u32 %v358, 7
  %v360 = vsub.s32 2, %v359
  %v361 = vrot.slane %v308, %v360
  %v362 = vmul.f32 %v352, %v361
  %v363 = vmul.f32 %v356, %v361
  %v364 = vadd.f32 %v348, %v362
  %v365 = vadd.f32 %v349, %v363
  %366 = vset.pattern.permute.xlu0 3
  %367 = vperm.xlu0 %366, %v306
  %v368 = vpop.permute.xlu0 %367
  %370 = vset.pattern.permute.xlu0 3
  %371 = vperm.xlu0 %370, %v307
  %v372 = vpop.permute.xlu0 %371
  %v374 = vlaneseq
  %v375 = vshrl.u32 %v374, 7
  %v376 = vsub.s32 3, %v375
  %v377 = vrot.slane %v308, %v376
  %v378 = vmul.f32 %v368, %v377
  %v379 = vmul.f32 %v372, %v377
  %v380 = vadd.f32 %v364, %v378
  %v381 = vadd.f32 %v365, %v379
  %382 = vset.pattern.permute.xlu0 4
  %383 = vperm.xlu0 %382, %v306
  %v384 = vpop.permute.xlu0 %383
  %386 = vset.pattern.permute.xlu0 4
  %387 = vperm.xlu0 %386, %v307
  %v388 = vpop.permute.xlu0 %387
  %v390 = vlaneseq
  %v391 = vshrl.u32 %v390, 7
  %v392 = vsub.s32 4, %v391
  %v393 = vrot.slane %v308, %v392
  %v394 = vmul.f32 %v384, %v393
  %v395 = vmul.f32 %v388, %v393
  %v396 = vadd.f32 %v380, %v394
  %v397 = vadd.f32 %v381, %v395
  %v398 = vmax.f32 %v396, 0.0
  %v399 = vmax.f32 %v397, 0.0
  %402 = vrot.lane.b32.xlu0 %v398, 32
  %v403 = vpop.permute.xlu0 %402
  %404 = vrot.lane.b32.xlu0 %v399, 32
  %v405 = vpop.permute.xlu0 %404
  %vm408 = vcmask 261120
  %v409 = vsel %vm408, %v304, %v403
  %v410 = vsel %vm408, %v305, %v405
  %v411 = vld [vmem:[%s14] sm:$0xff]
  %v412 = vld [vmem:[%s14 + $0x8] sm:$0xff]
  %v413 = vld [vmem:[%s14 + $0x10] sm:$0xff]
  %v414 = vld [vmem:[%s14 + $0x18] sm:$0xff]
  %v415 = vld [vmem:[%s14 + $0x20] sm:$0xff]
  %v416 = vld [vmem:[%s14 + $0x28] sm:$0xff]
  %v417 = vld [vmem:[%s15] sm:$0x1]
  %v419 = vlaneseq
  %v420 = vshrl.u32 %v419, 7
  %v421 = vsub.s32 0, %v420
  %v422 = vrot.slane %v417, %v421
  %vm424 = vcmask 392192
  %v426 = vsel %vm424, %v409, 0
  %v429 = vsel %vm424, %v410, 0
  %431 = vmatprep.subr.mxu0 0.0
  %432 = vmatpush1.msra.mxu0 0.0
  %433 = vmatprep.subr.mxu0 0.0
  %434 = vmatpush1.msra.mxu0 0.0
  %435 = vmatprep.subr.mxu0 0.0
  %436 = vmatpush1.msra.mxu0 0.0
  %437 = vmatprep.subr.mxu0 0.0
  %438 = vmatpush1.msra.mxu0 0.0
  %439 = vmatprep.subr.mxu0 0.0
  %440 = vmatpush1.msra.mxu0 0.0
  %441 = vmatprep.subr.mxu0 0.0
  %442 = vmatpush1.msra.mxu0 0.0
  %443 = vmatprep.subr.mxu0 0.0
  %444 = vmatpush1.msra.mxu0 0.0
  %445 = vmatprep.subr.mxu0 0.0
  %446 = vmatpush1.msra.mxu0 0.0
  %447 = vmatprep.subr.mxu0 0.0
  %448 = vmatpush1.msra.mxu0 0.0
  %449 = vmatprep.subr.mxu0 0.0
  %450 = vmatpush1.msra.mxu0 0.0
  %451 = vmatprep.subr.mxu0 0.0
  %452 = vmatpush1.msra.mxu0 %v416
  %453 = vmatprep.subr.mxu0 0.0
  %454 = vmatpush1.msra.mxu0 %v415
  %455 = vmatprep.subr.mxu0 0.0
  %456 = vmatpush1.msra.mxu0 %v414
  %457 = vmatprep.subr.mxu0 0.0
  %458 = vmatpush1.msra.mxu0 %v413
  %459 = vmatprep.subr.mxu0 0.0
  %460 = vmatpush1.msra.mxu0 %v412
  %461 = vmatprep.subr.mxu0 0.0
  %462 = vmatpush1.msra.mxu0 %v411
  %463 = vmatprep.subr.mxu0 0.0
  %464 = vmatpush2.msra.mxu0 0.0
  %465 = vmatprep.subr.mxu0 0.0
  %466 = vmatpush2.msra.mxu0 0.0
  %467 = vmatprep.subr.mxu0 0.0
  %468 = vmatpush2.msra.mxu0 0.0
  %469 = vmatprep.subr.mxu0 0.0
  %470 = vmatpush2.msra.mxu0 0.0
  %471 = vmatprep.subr.mxu0 0.0
  %472 = vmatpush2.msra.mxu0 0.0
  %473 = vmatprep.subr.mxu0 0.0
  %474 = vmatpush2.msra.mxu0 0.0
  %475 = vmatprep.subr.mxu0 0.0
  %476 = vmatpush2.msra.mxu0 0.0
  %477 = vmatprep.subr.mxu0 0.0
  %478 = vmatpush2.msra.mxu0 0.0
  %479 = vmatprep.subr.mxu0 0.0
  %480 = vmatpush2.msra.mxu0 0.0
  %481 = vmatprep.subr.mxu0 0.0
  %482 = vmatpush2.msra.mxu0 0.0
  %483 = vmatprep.subr.mxu0 0.0
  %484 = vmatpush2.msra.mxu0 0.0
  %485 = vmatprep.subr.mxu0 0.0
  %486 = vmatpush2.msra.mxu0 0.0
  %487 = vmatprep.subr.mxu0 0.0
  %488 = vmatpush2.msra.mxu0 0.0
  %489 = vmatprep.subr.mxu0 0.0
  %490 = vmatpush2.msra.mxu0 0.0
  %491 = vmatprep.subr.mxu0 0.0
  %492 = vmatpush2.msra.mxu0 0.0
  %493 = vmatprep.subr.mxu0 0.0
  %494 = vmatpush2.msra.mxu0 0.0
  %495 = vmatprep.mubr.f32.mxu0 0.0
  %496 = vmatmul.mubr.f32.gmra.mxu0 %v426
  %v497 = vpop.f32.mrf.mxu0
  %v498 = vadd.f32 %v422, %v497
  %v499 = vpop.f32.mrf.mxu0
  %500 = vmatprep.mubr.f32.mxu0 0.0
  %501 = vmatmul.mubr.f32.gmra.mxu0 %v429
  %v502 = vpop.f32.mrf.mxu0
  %v503 = vadd.f32 %v422, %v502
  %v504 = vpop.f32.mrf.mxu0
  %505 = vdwg.mxu0
  %v506 = vmax.f32 %v498, 0.0
  %v507 = vmax.f32 %v503, 0.0
  %508 = vst.msk [vmem:[%s18] sm:$0xff] %vm408, %v506
  %509 = vst.msk [vmem:[%s18 + $0x8] sm:$0xff] %vm408, %v507
  %v510 = vld [vmem:[%s3] sm:$0xff]
  %v511 = vld [vmem:[%s3 + $0x8] sm:$0xff]
  %v512 = vld [vmem:[%s11] sm:$0xff]
  %v513 = vld [vmem:[%s11 + $0x8] sm:$0xff]
  %v514 = vld [vmem:[%s11 + $0x10] sm:$0xff]
  %v515 = vld [vmem:[%s11 + $0x18] sm:$0xff]
  %v516 = vld [vmem:[%s11 + $0x20] sm:$0xff]
  %v517 = vld [vmem:[%s11 + $0x28] sm:$0xff]
  %v518 = vld [vmem:[%s11 + $0x30] sm:$0xff]
  %v519 = vld [vmem:[%s11 + $0x38] sm:$0xff]
  %v520 = vld [vmem:[%s11 + $0x40] sm:$0xff]
  %v521 = vld [vmem:[%s11 + $0x48] sm:$0xff]
  %v522 = vld [vmem:[%s11 + $0x50] sm:$0xff]
  %v523 = vld [vmem:[%s11 + $0x58] sm:$0xff]
  %v524 = vld [vmem:[%s11 + $0x60] sm:$0xff]
  %v525 = vld [vmem:[%s11 + $0x68] sm:$0xff]
  %v526 = vld [vmem:[%s11 + $0x70] sm:$0xff]
  %v527 = vld [vmem:[%s11 + $0x78] sm:$0xff]
  %v528 = vld [vmem:[%s11 + $0x80] sm:$0xff]
  %v529 = vld [vmem:[%s11 + $0x88] sm:$0xff]
  %v530 = vld [vmem:[%s11 + $0x90] sm:$0xff]
  %v531 = vld [vmem:[%s11 + $0x98] sm:$0xff]
  %v532 = vld [vmem:[%s11 + $0xa0] sm:$0xff]
  %v533 = vld [vmem:[%s11 + $0xa8] sm:$0xff]
  %v534 = vld [vmem:[%s11 + $0xb0] sm:$0xff]
  %v535 = vld [vmem:[%s11 + $0xb8] sm:$0xff]
  %v536 = vld [vmem:[%s11 + $0xc0] sm:$0xff]
  %v537 = vld [vmem:[%s11 + $0xc8] sm:$0xff]
  %v538 = vld [vmem:[%s11 + $0xd0] sm:$0xff]
  %v539 = vld [vmem:[%s11 + $0xd8] sm:$0xff]
  %v540 = vld [vmem:[%s11 + $0xe0] sm:$0xff]
  %v541 = vld [vmem:[%s11 + $0xe8] sm:$0xff]
  %v542 = vld [vmem:[%s11 + $0xf0] sm:$0xff]
  %v543 = vld [vmem:[%s11 + $0xf8] sm:$0xff]
  %v544 = vld [vmem:[%s11 + $0x100] sm:$0xff]
  %v545 = vld [vmem:[%s11 + $0x108] sm:$0xff]
  %v546 = vld [vmem:[%s11 + $0x110] sm:$0xff]
  %v547 = vld [vmem:[%s11 + $0x118] sm:$0xff]
  %v548 = vld [vmem:[%s11 + $0x120] sm:$0xff]
  %v549 = vld [vmem:[%s11 + $0x128] sm:$0xff]
  %v550 = vld [vmem:[%s11 + $0x130] sm:$0xff]
  %v551 = vld [vmem:[%s11 + $0x138] sm:$0xff]
  %v552 = vld [vmem:[%s11 + $0x140] sm:$0xff]
  %v553 = vld [vmem:[%s11 + $0x148] sm:$0xff]
  %v554 = vld [vmem:[%s11 + $0x150] sm:$0xff]
  %v555 = vld [vmem:[%s11 + $0x158] sm:$0xff]
  %v556 = vld [vmem:[%s11 + $0x160] sm:$0xff]
  %v557 = vld [vmem:[%s11 + $0x168] sm:$0xff]
  %v558 = vld [vmem:[%s11 + $0x170] sm:$0xff]
  %v559 = vld [vmem:[%s11 + $0x178] sm:$0xff]
  %v560 = vld [vmem:[%s11 + $0x180] sm:$0xff]
  %v561 = vld [vmem:[%s11 + $0x188] sm:$0xff]
  %v562 = vld [vmem:[%s11 + $0x190] sm:$0xff]
  %v563 = vld [vmem:[%s11 + $0x198] sm:$0xff]
  %v564 = vld [vmem:[%s11 + $0x1a0] sm:$0xff]
  %v565 = vld [vmem:[%s11 + $0x1a8] sm:$0xff]
  %v566 = vld [vmem:[%s11 + $0x1b0] sm:$0xff]
  %v567 = vld [vmem:[%s11 + $0x1b8] sm:$0xff]
  %v568 = vld [vmem:[%s11 + $0x1c0] sm:$0xff]
  %v569 = vld [vmem:[%s11 + $0x1c8] sm:$0xff]
  %v570 = vld [vmem:[%s11 + $0x1d0] sm:$0xff]
  %v571 = vld [vmem:[%s11 + $0x1d8] sm:$0xff]
  %v572 = vld [vmem:[%s11 + $0x1e0] sm:$0xff]
  %v573 = vld [vmem:[%s11 + $0x1e8] sm:$0xff]
  %v574 = vld [vmem:[%s11 + $0x1f0] sm:$0xff]
  %v575 = vld [vmem:[%s11 + $0x1f8] sm:$0xff]
  %v576 = vld [vmem:[%s4] sm:$0xff]
  %v577 = vld [vmem:[%s4 + $0x8] sm:$0xff]
  %v578 = vld [vmem:[%s12] sm:$0xff]
  %v579 = vld [vmem:[%s12 + $0x8] sm:$0xff]
  %v580 = vld [vmem:[%s12 + $0x10] sm:$0xff]
  %v581 = vld [vmem:[%s12 + $0x18] sm:$0xff]
  %v582 = vld [vmem:[%s12 + $0x20] sm:$0xff]
  %v583 = vld [vmem:[%s12 + $0x28] sm:$0xff]
  %v584 = vld [vmem:[%s12 + $0x30] sm:$0xff]
  %v585 = vld [vmem:[%s12 + $0x38] sm:$0xff]
  %v586 = vld [vmem:[%s12 + $0x40] sm:$0xff]
  %v587 = vld [vmem:[%s12 + $0x48] sm:$0xff]
  %v588 = vld [vmem:[%s12 + $0x50] sm:$0xff]
  %v589 = vld [vmem:[%s12 + $0x58] sm:$0xff]
  %v590 = vld [vmem:[%s12 + $0x60] sm:$0xff]
  %v591 = vld [vmem:[%s12 + $0x68] sm:$0xff]
  %v592 = vld [vmem:[%s12 + $0x70] sm:$0xff]
  %v593 = vld [vmem:[%s12 + $0x78] sm:$0xff]
  %v594 = vld [vmem:[%s12 + $0x80] sm:$0xff]
  %v595 = vld [vmem:[%s12 + $0x88] sm:$0xff]
  %v596 = vld [vmem:[%s12 + $0x90] sm:$0xff]
  %v597 = vld [vmem:[%s12 + $0x98] sm:$0xff]
  %v598 = vld [vmem:[%s12 + $0xa0] sm:$0xff]
  %v599 = vld [vmem:[%s12 + $0xa8] sm:$0xff]
  %v600 = vld [vmem:[%s12 + $0xb0] sm:$0xff]
  %v601 = vld [vmem:[%s12 + $0xb8] sm:$0xff]
  %v602 = vld [vmem:[%s12 + $0xc0] sm:$0xff]
  %v603 = vld [vmem:[%s12 + $0xc8] sm:$0xff]
  %v604 = vld [vmem:[%s12 + $0xd0] sm:$0xff]
  %v605 = vld [vmem:[%s12 + $0xd8] sm:$0xff]
  %v606 = vld [vmem:[%s12 + $0xe0] sm:$0xff]
  %v607 = vld [vmem:[%s12 + $0xe8] sm:$0xff]
  %v608 = vld [vmem:[%s12 + $0xf0] sm:$0xff]
  %v609 = vld [vmem:[%s12 + $0xf8] sm:$0xff]
  %v610 = vld [vmem:[%s12 + $0x100] sm:$0xff]
  %v611 = vld [vmem:[%s12 + $0x108] sm:$0xff]
  %v612 = vld [vmem:[%s12 + $0x110] sm:$0xff]
  %v613 = vld [vmem:[%s12 + $0x118] sm:$0xff]
  %v614 = vld [vmem:[%s12 + $0x120] sm:$0xff]
  %v615 = vld [vmem:[%s12 + $0x128] sm:$0xff]
  %v616 = vld [vmem:[%s12 + $0x130] sm:$0xff]
  %v617 = vld [vmem:[%s12 + $0x138] sm:$0xff]
  %v618 = vld [vmem:[%s12 + $0x140] sm:$0xff]
  %v619 = vld [vmem:[%s12 + $0x148] sm:$0xff]
  %v620 = vld [vmem:[%s12 + $0x150] sm:$0xff]
  %v621 = vld [vmem:[%s12 + $0x158] sm:$0xff]
  %v622 = vld [vmem:[%s12 + $0x160] sm:$0xff]
  %v623 = vld [vmem:[%s12 + $0x168] sm:$0xff]
  %v624 = vld [vmem:[%s12 + $0x170] sm:$0xff]
  %v625 = vld [vmem:[%s12 + $0x178] sm:$0xff]
  %v626 = vld [vmem:[%s12 + $0x180] sm:$0xff]
  %v627 = vld [vmem:[%s12 + $0x188] sm:$0xff]
  %v628 = vld [vmem:[%s12 + $0x190] sm:$0xff]
  %v629 = vld [vmem:[%s12 + $0x198] sm:$0xff]
  %v630 = vld [vmem:[%s12 + $0x1a0] sm:$0xff]
  %v631 = vld [vmem:[%s12 + $0x1a8] sm:$0xff]
  %v632 = vld [vmem:[%s12 + $0x1b0] sm:$0xff]
  %v633 = vld [vmem:[%s12 + $0x1b8] sm:$0xff]
  %v634 = vld [vmem:[%s12 + $0x1c0] sm:$0xff]
  %v635 = vld [vmem:[%s12 + $0x1c8] sm:$0xff]
  %v636 = vld [vmem:[%s12 + $0x1d0] sm:$0xff]
  %v637 = vld [vmem:[%s12 + $0x1d8] sm:$0xff]
  %v638 = vld [vmem:[%s12 + $0x1e0] sm:$0xff]
  %v639 = vld [vmem:[%s12 + $0x1e8] sm:$0xff]
  %v640 = vld [vmem:[%s12 + $0x1f0] sm:$0xff]
  %v641 = vld [vmem:[%s12 + $0x1f8] sm:$0xff]
  %v644 = vcombine.high %v576, %v576
  %v645 = vcombine.high %v577, %v577
  %648 = vmatprep.subr.mxu0 0.0
  %649 = vmatpush1.msra.mxu0 %v593
  %650 = vmatprep.subr.mxu0 0.0
  %651 = vmatpush1.msra.mxu0 %v592
  %652 = vmatprep.subr.mxu0 0.0
  %653 = vmatpush1.msra.mxu0 %v591
  %654 = vmatprep.subr.mxu0 0.0
  %655 = vmatpush1.msra.mxu0 %v590
  %656 = vmatprep.subr.mxu0 0.0
  %657 = vmatpush1.msra.mxu0 %v589
  %658 = vmatprep.subr.mxu0 0.0
  %659 = vmatpush1.msra.mxu0 %v588
  %660 = vmatprep.subr.mxu0 0.0
  %661 = vmatpush1.msra.mxu0 %v587
  %662 = vmatprep.subr.mxu0 0.0
  %663 = vmatpush1.msra.mxu0 %v586
  %664 = vmatprep.subr.mxu0 0.0
  %665 = vmatpush1.msra.mxu0 %v585
  %666 = vmatprep.subr.mxu0 0.0
  %667 = vmatpush1.msra.mxu0 %v584
  %668 = vmatprep.subr.mxu0 0.0
  %669 = vmatpush1.msra.mxu0 %v583
  %670 = vmatprep.subr.mxu0 0.0
  %671 = vmatpush1.msra.mxu0 %v582
  %672 = vmatprep.subr.mxu0 0.0
  %673 = vmatpush1.msra.mxu0 %v581
  %674 = vmatprep.subr.mxu0 0.0
  %675 = vmatpush1.msra.mxu0 %v580
  %676 = vmatprep.subr.mxu0 0.0
  %677 = vmatpush1.msra.mxu0 %v579
  %678 = vmatprep.subr.mxu0 0.0
  %679 = vmatpush1.msra.mxu0 %v578
  %680 = vmatprep.subr.mxu0 0.0
  %681 = vmatpush2.msra.mxu0 %v609
  %682 = vmatprep.subr.mxu0 0.0
  %683 = vmatpush2.msra.mxu0 %v608
  %684 = vmatprep.subr.mxu0 0.0
  %685 = vmatpush2.msra.mxu0 %v607
  %686 = vmatprep.subr.mxu0 0.0
  %687 = vmatpush2.msra.mxu0 %v606
  %688 = vmatprep.subr.mxu0 0.0
  %689 = vmatpush2.msra.mxu0 %v605
  %690 = vmatprep.subr.mxu0 0.0
  %691 = vmatpush2.msra.mxu0 %v604
  %692 = vmatprep.subr.mxu0 0.0
  %693 = vmatpush2.msra.mxu0 %v603
  %694 = vmatprep.subr.mxu0 0.0
  %695 = vmatpush2.msra.mxu0 %v602
  %696 = vmatprep.subr.mxu0 0.0
  %697 = vmatpush2.msra.mxu0 %v601
  %698 = vmatprep.subr.mxu0 0.0
  %699 = vmatpush2.msra.mxu0 %v600
  %700 = vmatprep.subr.mxu0 0.0
  %701 = vmatpush2.msra.mxu0 %v599
  %702 = vmatprep.subr.mxu0 0.0
  %703 = vmatpush2.msra.mxu0 %v598
  %704 = vmatprep.subr.mxu0 0.0
  %705 = vmatpush2.msra.mxu0 %v597
  %706 = vmatprep.subr.mxu0 0.0
  %707 = vmatpush2.msra.mxu0 %v596
  %708 = vmatprep.subr.mxu0 0.0
  %709 = vmatpush2.msra.mxu0 %v595
  %710 = vmatprep.subr.mxu0 0.0
  %711 = vmatpush2.msra.mxu0 %v594
  %712 = vmatprep.mubr.f32.mxu0 %v644
  %713 = vmatmul.mubr.f32.gmra.mxu0 %v576
  %v714 = vpop.f32.mrf.mxu0
  %v715 = vadd.f32 0.0, %v714
  %v716 = vpop.f32.mrf.mxu0
  %717 = vdwg.mxu0
  %718 = vmatprep.subr.mxu0 0.0
  %719 = vmatpush1.msra.mxu0 %v625
  %720 = vmatprep.subr.mxu0 0.0
  %721 = vmatpush1.msra.mxu0 %v624
  %722 = vmatprep.subr.mxu0 0.0
  %723 = vmatpush1.msra.mxu0 %v623
  %724 = vmatprep.subr.mxu0 0.0
  %725 = vmatpush1.msra.mxu0 %v622
  %726 = vmatprep.subr.mxu0 0.0
  %727 = vmatpush1.msra.mxu0 %v621
  %728 = vmatprep.subr.mxu0 0.0
  %729 = vmatpush1.msra.mxu0 %v620
  %730 = vmatprep.subr.mxu0 0.0
  %731 = vmatpush1.msra.mxu0 %v619
  %732 = vmatprep.subr.mxu0 0.0
  %733 = vmatpush1.msra.mxu0 %v618
  %734 = vmatprep.subr.mxu0 0.0
  %735 = vmatpush1.msra.mxu0 %v617
  %736 = vmatprep.subr.mxu0 0.0
  %737 = vmatpush1.msra.mxu0 %v616
  %738 = vmatprep.subr.mxu0 0.0
  %739 = vmatpush1.msra.mxu0 %v615
  %740 = vmatprep.subr.mxu0 0.0
  %741 = vmatpush1.msra.mxu0 %v614
  %742 = vmatprep.subr.mxu0 0.0
  %743 = vmatpush1.msra.mxu0 %v613
  %744 = vmatprep.subr.mxu0 0.0
  %745 = vmatpush1.msra.mxu0 %v612
  %746 = vmatprep.subr.mxu0 0.0
  %747 = vmatpush1.msra.mxu0 %v611
  %748 = vmatprep.subr.mxu0 0.0
  %749 = vmatpush1.msra.mxu0 %v610
  %750 = vmatprep.subr.mxu0 0.0
  %751 = vmatpush2.msra.mxu0 %v641
  %752 = vmatprep.subr.mxu0 0.0
  %753 = vmatpush2.msra.mxu0 %v640
  %754 = vmatprep.subr.mxu0 0.0
  %755 = vmatpush2.msra.mxu0 %v639
  %756 = vmatprep.subr.mxu0 0.0
  %757 = vmatpush2.msra.mxu0 %v638
  %758 = vmatprep.subr.mxu0 0.0
  %759 = vmatpush2.msra.mxu0 %v637
  %760 = vmatprep.subr.mxu0 0.0
  %761 = vmatpush2.msra.mxu0 %v636
  %762 = vmatprep.subr.mxu0 0.0
  %763 = vmatpush2.msra.mxu0 %v635
  %764 = vmatprep.subr.mxu0 0.0
  %765 = vmatpush2.msra.mxu0 %v634
  %766 = vmatprep.subr.mxu0 0.0
  %767 = vmatpush2.msra.mxu0 %v633
  %768 = vmatprep.subr.mxu0 0.0
  %769 = vmatpush2.msra.mxu0 %v632
  %770 = vmatprep.subr.mxu0 0.0
  %771 = vmatpush2.msra.mxu0 %v631
  %772 = vmatprep.subr.mxu0 0.0
  %773 = vmatpush2.msra.mxu0 %v630
  %774 = vmatprep.subr.mxu0 0.0
  %775 = vmatpush2.msra.mxu0 %v629
  %776 = vmatprep.subr.mxu0 0.0
  %777 = vmatpush2.msra.mxu0 %v628
  %778 = vmatprep.subr.mxu0 0.0
  %779 = vmatpush2.msra.mxu0 %v627
  %780 = vmatprep.subr.mxu0 0.0
  %781 = vmatpush2.msra.mxu0 %v626
  %782 = vmatprep.mubr.f32.mxu0 %v645
  %783 = vmatmul.mubr.f32.gmra.mxu0 %v577
  %v784 = vpop.f32.mrf.mxu0
  %v785 = vadd.f32 %v715, %v784
  %v786 = vpop.f32.mrf.mxu0
  %787 = vdwg.mxu0
  %v790 = vcombine.high %v510, %v510
  %v791 = vcombine.high %v511, %v511
  %794 = vmatprep.subr.mxu0 0.0
  %795 = vmatpush1.msra.mxu0 %v527
  %796 = vmatprep.subr.mxu0 0.0
  %797 = vmatpush1.msra.mxu0 %v526
  %798 = vmatprep.subr.mxu0 0.0
  %799 = vmatpush1.msra.mxu0 %v525
  %800 = vmatprep.subr.mxu0 0.0
  %801 = vmatpush1.msra.mxu0 %v524
  %802 = vmatprep.subr.mxu0 0.0
  %803 = vmatpush1.msra.mxu0 %v523
  %804 = vmatprep.subr.mxu0 0.0
  %805 = vmatpush1.msra.mxu0 %v522
  %806 = vmatprep.subr.mxu0 0.0
  %807 = vmatpush1.msra.mxu0 %v521
  %808 = vmatprep.subr.mxu0 0.0
  %809 = vmatpush1.msra.mxu0 %v520
  %810 = vmatprep.subr.mxu0 0.0
  %811 = vmatpush1.msra.mxu0 %v519
  %812 = vmatprep.subr.mxu0 0.0
  %813 = vmatpush1.msra.mxu0 %v518
  %814 = vmatprep.subr.mxu0 0.0
  %815 = vmatpush1.msra.mxu0 %v517
  %816 = vmatprep.subr.mxu0 0.0
  %817 = vmatpush1.msra.mxu0 %v516
  %818 = vmatprep.subr.mxu0 0.0
  %819 = vmatpush1.msra.mxu0 %v515
  %820 = vmatprep.subr.mxu0 0.0
  %821 = vmatpush1.msra.mxu0 %v514
  %822 = vmatprep.subr.mxu0 0.0
  %823 = vmatpush1.msra.mxu0 %v513
  %824 = vmatprep.subr.mxu0 0.0
  %825 = vmatpush1.msra.mxu0 %v512
  %826 = vmatprep.subr.mxu0 0.0
  %827 = vmatpush2.msra.mxu0 %v543
  %828 = vmatprep.subr.mxu0 0.0
  %829 = vmatpush2.msra.mxu0 %v542
  %830 = vmatprep.subr.mxu0 0.0
  %831 = vmatpush2.msra.mxu0 %v541
  %832 = vmatprep.subr.mxu0 0.0
  %833 = vmatpush2.msra.mxu0 %v540
  %834 = vmatprep.subr.mxu0 0.0
  %835 = vmatpush2.msra.mxu0 %v539
  %836 = vmatprep.subr.mxu0 0.0
  %837 = vmatpush2.msra.mxu0 %v538
  %838 = vmatprep.subr.mxu0 0.0
  %839 = vmatpush2.msra.mxu0 %v537
  %840 = vmatprep.subr.mxu0 0.0
  %841 = vmatpush2.msra.mxu0 %v536
  %842 = vmatprep.subr.mxu0 0.0
  %843 = vmatpush2.msra.mxu0 %v535
  %844 = vmatprep.subr.mxu0 0.0
  %845 = vmatpush2.msra.mxu0 %v534
  %846 = vmatprep.subr.mxu0 0.0
  %847 = vmatpush2.msra.mxu0 %v533
  %848 = vmatprep.subr.mxu0 0.0
  %849 = vmatpush2.msra.mxu0 %v532
  %850 = vmatprep.subr.mxu0 0.0
  %851 = vmatpush2.msra.mxu0 %v531
  %852 = vmatprep.subr.mxu0 0.0
  %853 = vmatpush2.msra.mxu0 %v530
  %854 = vmatprep.subr.mxu0 0.0
  %855 = vmatpush2.msra.mxu0 %v529
  %856 = vmatprep.subr.mxu0 0.0
  %857 = vmatpush2.msra.mxu0 %v528
  %858 = vmatprep.mubr.f32.mxu0 %v790
  %859 = vmatmul.mubr.f32.gmra.mxu0 %v510
  %v860 = vpop.f32.mrf.mxu0
  %v861 = vadd.f32 %v785, %v860
  %v862 = vpop.f32.mrf.mxu0
  %863 = vdwg.mxu0
  %864 = vmatprep.subr.mxu0 0.0
  %865 = vmatpush1.msra.mxu0 %v559
  %866 = vmatprep.subr.mxu0 0.0
  %867 = vmatpush1.msra.mxu0 %v558
  %868 = vmatprep.subr.mxu0 0.0
  %869 = vmatpush1.msra.mxu0 %v557
  %870 = vmatprep.subr.mxu0 0.0
  %871 = vmatpush1.msra.mxu0 %v556
  %872 = vmatprep.subr.mxu0 0.0
  %873 = vmatpush1.msra.mxu0 %v555
  %874 = vmatprep.subr.mxu0 0.0
  %875 = vmatpush1.msra.mxu0 %v554
  %876 = vmatprep.subr.mxu0 0.0
  %877 = vmatpush1.msra.mxu0 %v553
  %878 = vmatprep.subr.mxu0 0.0
  %879 = vmatpush1.msra.mxu0 %v552
  %880 = vmatprep.subr.mxu0 0.0
  %881 = vmatpush1.msra.mxu0 %v551
  %882 = vmatprep.subr.mxu0 0.0
  %883 = vmatpush1.msra.mxu0 %v550
  %884 = vmatprep.subr.mxu0 0.0
  %885 = vmatpush1.msra.mxu0 %v549
  %886 = vmatprep.subr.mxu0 0.0
  %887 = vmatpush1.msra.mxu0 %v548
  %888 = vmatprep.subr.mxu0 0.0
  %889 = vmatpush1.msra.mxu0 %v547
  %890 = vmatprep.subr.mxu0 0.0
  %891 = vmatpush1.msra.mxu0 %v546
  %892 = vmatprep.subr.mxu0 0.0
  %893 = vmatpush1.msra.mxu0 %v545
  %894 = vmatprep.subr.mxu0 0.0
  %895 = vmatpush1.msra.mxu0 %v544
  %896 = vmatprep.subr.mxu0 0.0
  %897 = vmatpush2.msra.mxu0 %v575
  %898 = vmatprep.subr.mxu0 0.0
  %899 = vmatpush2.msra.mxu0 %v574
  %900 = vmatprep.subr.mxu0 0.0
  %901 = vmatpush2.msra.mxu0 %v573
  %902 = vmatprep.subr.mxu0 0.0
  %903 = vmatpush2.msra.mxu0 %v572
  %904 = vmatprep.subr.mxu0 0.0
  %905 = vmatpush2.msra.mxu0 %v571
  %906 = vmatprep.subr.mxu0 0.0
  %907 = vmatpush2.msra.mxu0 %v570
  %908 = vmatprep.subr.mxu0 0.0
  %909 = vmatpush2.msra.mxu0 %v569
  %910 = vmatprep.subr.mxu0 0.0
  %911 = vmatpush2.msra.mxu0 %v568
  %912 = vmatprep.subr.mxu0 0.0
  %913 = vmatpush2.msra.mxu0 %v567
  %914 = vmatprep.subr.mxu0 0.0
  %915 = vmatpush2.msra.mxu0 %v566
  %916 = vmatprep.subr.mxu0 0.0
  %917 = vmatpush2.msra.mxu0 %v565
  %918 = vmatprep.subr.mxu0 0.0
  %919 = vmatpush2.msra.mxu0 %v564
  %920 = vmatprep.subr.mxu0 0.0
  %921 = vmatpush2.msra.mxu0 %v563
  %922 = vmatprep.subr.mxu0 0.0
  %923 = vmatpush2.msra.mxu0 %v562
  %924 = vmatprep.subr.mxu0 0.0
  %925 = vmatpush2.msra.mxu0 %v561
  %926 = vmatprep.subr.mxu0 0.0
  %927 = vmatpush2.msra.mxu0 %v560
  %928 = vmatprep.mubr.f32.mxu0 %v791
  %929 = vmatmul.mubr.f32.gmra.mxu0 %v511
  %v930 = vpop.f32.mrf.mxu0
  %v931 = vadd.f32 %v861, %v930
  %v932 = vpop.f32.mrf.mxu0
  %933 = vdwg.mxu0
  %v934 = vld [vmem:[%s13] sm:$0x1]
  %v936 = vlaneseq
  %v937 = vshrl.u32 %v936, 7
  %v938 = vsub.s32 0, %v937
  %v939 = vrot.slane %v934, %v938
  %v941 = vadd.f32 %v931, %v939
  %v942 = vmax.f32 %v941, 0.0
  %v943 = vld [vmem:[%s5] sm:$0xf]
  %945 = vset.pattern.permute.xlu0 0
  %946 = vperm.xlu0 %945, %v943
  %v947 = vpop.permute.xlu0 %946
  %v949 = vmul.f32 %v942, %v947
  %v950 = vld [vmem:[%s6] sm:$0xf]
  %v951 = vld [vmem:[%s7] sm:$0x1f]
  %v952 = vld [vmem:[%s8] sm:$0x1]
  %954 = vset.pattern.permute.xlu0 0
  %955 = vperm.xlu0 %954, %v950
  %v956 = vpop.permute.xlu0 %955
  %v958 = vlaneseq
  %v959 = vshrl.u32 %v958, 7
  %v960 = vsub.s32 0, %v959
  %v961 = vrot.slane %v951, %v960
  %v962 = vmul.f32 %v956, %v961
  %v964 = vlaneseq
  %v965 = vshrl.u32 %v964, 7
  %v966 = vsub.s32 0, %v965
  %v967 = vrot.slane %v952, %v966
  %v969 = vadd.f32 %v967, %v962
  %970 = vset.pattern.permute.xlu0 1
  %971 = vperm.xlu0 %970, %v950
  %v972 = vpop.permute.xlu0 %971
  %v974 = vlaneseq
  %v975 = vshrl.u32 %v974, 7
  %v976 = vsub.s32 1, %v975
  %v977 = vrot.slane %v951, %v976
  %v978 = vmul.f32 %v972, %v977
  %v979 = vadd.f32 %v969, %v978
  %980 = vset.pattern.permute.xlu0 2
  %981 = vperm.xlu0 %980, %v950
  %v982 = vpop.permute.xlu0 %981
  %v984 = vlaneseq
  %v985 = vshrl.u32 %v984, 7
  %v986 = vsub.s32 2, %v985
  %v987 = vrot.slane %v951, %v986
  %v988 = vmul.f32 %v982, %v987
  %v989 = vadd.f32 %v979, %v988
  %990 = vset.pattern.permute.xlu0 3
  %991 = vperm.xlu0 %990, %v950
  %v992 = vpop.permute.xlu0 %991
  %v994 = vlaneseq
  %v995 = vshrl.u32 %v994, 7
  %v996 = vsub.s32 3, %v995
  %v997 = vrot.slane %v951, %v996
  %v998 = vmul.f32 %v992, %v997
  %v999 = vadd.f32 %v989, %v998
  %1000 = vset.pattern.permute.xlu0 4
  %1001 = vperm.xlu0 %1000, %v950
  %v1002 = vpop.permute.xlu0 %1001
  %v1004 = vlaneseq
  %v1005 = vshrl.u32 %v1004, 7
  %v1006 = vsub.s32 4, %v1005
  %v1007 = vrot.slane %v951, %v1006
  %v1008 = vmul.f32 %v1002, %v1007
  %v1009 = vadd.f32 %v999, %v1008
  %v1010 = vmax.f32 %v1009, 0.0
  %1012 = vrot.lane.b32.xlu0 %v1010, 64
  %v1013 = vpop.permute.xlu0 %1012
  %vm1015 = vcmask 523264
  %v1016 = vsel %vm1015, %v949, %v1013
  %v1017 = vld [vmem:[%s16] sm:$0xff]
  %v1018 = vld [vmem:[%s16 + $0x8] sm:$0xff]
  %v1019 = vld [vmem:[%s16 + $0x10] sm:$0xff]
  %v1020 = vld [vmem:[%s16 + $0x18] sm:$0xff]
  %v1021 = vld [vmem:[%s16 + $0x20] sm:$0xff]
  %v1022 = vld [vmem:[%s16 + $0x28] sm:$0xff]
  %v1023 = vld [vmem:[%s16 + $0x30] sm:$0xff]
  %v1024 = vld [vmem:[%s16 + $0x38] sm:$0xff]
  %v1025 = vld [vmem:[%s16 + $0x40] sm:$0xff]
  %v1026 = vld [vmem:[%s16 + $0x48] sm:$0xff]
  %v1027 = vld [vmem:[%s17] sm:$0x1]
  %v1029 = vlaneseq
  %v1030 = vshrl.u32 %v1029, 7
  %v1031 = vsub.s32 0, %v1030
  %v1032 = vrot.slane %v1027, %v1031
  %vm1034 = vcmask 654336
  %v1036 = vsel %vm1034, %v1016, 0
  %1038 = vmatprep.subr.mxu0 0.0
  %1039 = vmatpush1.msra.mxu0 0.0
  %1040 = vmatprep.subr.mxu0 0.0
  %1041 = vmatpush1.msra.mxu0 0.0
  %1042 = vmatprep.subr.mxu0 0.0
  %1043 = vmatpush1.msra.mxu0 0.0
  %1044 = vmatprep.subr.mxu0 0.0
  %1045 = vmatpush1.msra.mxu0 0.0
  %1046 = vmatprep.subr.mxu0 0.0
  %1047 = vmatpush1.msra.mxu0 0.0
  %1048 = vmatprep.subr.mxu0 0.0
  %1049 = vmatpush1.msra.mxu0 0.0
  %1050 = vmatprep.subr.mxu0 0.0
  %1051 = vmatpush1.msra.mxu0 %v1026
  %1052 = vmatprep.subr.mxu0 0.0
  %1053 = vmatpush1.msra.mxu0 %v1025
  %1054 = vmatprep.subr.mxu0 0.0
  %1055 = vmatpush1.msra.mxu0 %v1024
  %1056 = vmatprep.subr.mxu0 0.0
  %1057 = vmatpush1.msra.mxu0 %v1023
  %1058 = vmatprep.subr.mxu0 0.0
  %1059 = vmatpush1.msra.mxu0 %v1022
  %1060 = vmatprep.subr.mxu0 0.0
  %1061 = vmatpush1.msra.mxu0 %v1021
  %1062 = vmatprep.subr.mxu0 0.0
  %1063 = vmatpush1.msra.mxu0 %v1020
  %1064 = vmatprep.subr.mxu0 0.0
  %1065 = vmatpush1.msra.mxu0 %v1019
  %1066 = vmatprep.subr.mxu0 0.0
  %1067 = vmatpush1.msra.mxu0 %v1018
  %1068 = vmatprep.subr.mxu0 0.0
  %1069 = vmatpush1.msra.mxu0 %v1017
  %1070 = vmatprep.subr.mxu0 0.0
  %1071 = vmatpush2.msra.mxu0 0.0
  %1072 = vmatprep.subr.mxu0 0.0
  %1073 = vmatpush2.msra.mxu0 0.0
  %1074 = vmatprep.subr.mxu0 0.0
  %1075 = vmatpush2.msra.mxu0 0.0
  %1076 = vmatprep.subr.mxu0 0.0
  %1077 = vmatpush2.msra.mxu0 0.0
  %1078 = vmatprep.subr.mxu0 0.0
  %1079 = vmatpush2.msra.mxu0 0.0
  %1080 = vmatprep.subr.mxu0 0.0
  %1081 = vmatpush2.msra.mxu0 0.0
  %1082 = vmatprep.subr.mxu0 0.0
  %1083 = vmatpush2.msra.mxu0 0.0
  %1084 = vmatprep.subr.mxu0 0.0
  %1085 = vmatpush2.msra.mxu0 0.0
  %1086 = vmatprep.subr.mxu0 0.0
  %1087 = vmatpush2.msra.mxu0 0.0
  %1088 = vmatprep.subr.mxu0 0.0
  %1089 = vmatpush2.msra.mxu0 0.0
  %1090 = vmatprep.subr.mxu0 0.0
  %1091 = vmatpush2.msra.mxu0 0.0
  %1092 = vmatprep.subr.mxu0 0.0
  %1093 = vmatpush2.msra.mxu0 0.0
  %1094 = vmatprep.subr.mxu0 0.0
  %1095 = vmatpush2.msra.mxu0 0.0
  %1096 = vmatprep.subr.mxu0 0.0
  %1097 = vmatpush2.msra.mxu0 0.0
  %1098 = vmatprep.subr.mxu0 0.0
  %1099 = vmatpush2.msra.mxu0 0.0
  %1100 = vmatprep.subr.mxu0 0.0
  %1101 = vmatpush2.msra.mxu0 0.0
  %1102 = vmatprep.mubr.f32.mxu0 0.0
  %1103 = vmatmul.mubr.f32.gmra.mxu0 %v1036
  %v1104 = vpop.f32.mrf.mxu0
  %v1105 = vadd.f32 %v1032, %v1104
  %v1106 = vpop.f32.mrf.mxu0
  %1107 = vdwg.mxu0
  %v1108 = vmax.f32 %v1105, 0.0
  %vm1109 = vcmask 257024
  %1110 = vst.msk [vmem:[%s19] sm:$0xf] %vm1109, %v1108
  // Predicated region
  $region74: #{policy_net_forward.4} parent=0 // pred_check
    _
  $region75: #{policy_net_forward.4} parent=0 // pred_check_branch
    %1112 = sbr.rel (0) target = $region77
  $region76: #{policy_net_forward.4} parent=0 // pred_region
    _
  $region77: #{policy_net_forward.4} parent=0 // pred_fallthru
    _
  // Predicated region
  $region78: #{policy_net_forward.4} parent=0 // pred_check
    _
  $region79: #{policy_net_forward.4} parent=0 // pred_check_branch
    %1114 = sbr.rel (0) target = $region81
  $region80: #{policy_net_forward.4} parent=0 // pred_region
    _
  $region81: #{policy_net_forward.4} parent=0 // pred_fallthru
    _
  // Predicated region
  $region82: #{policy_net_forward.4} parent=0 // pred_check
    _
  $region83: #{policy_net_forward.4} parent=0 // pred_check_branch
    %1116 = sbr.rel (0) target = $region85
  $region84: #{policy_net_forward.4} parent=0 // pred_region
    _
  $region85: #{policy_net_forward.4} parent=0 // pred_fallthru
    _
  // Predicated region
  $region86: #{policy_net_forward.4} parent=0 // pred_check
    _
  $region87: #{policy_net_forward.4} parent=0 // pred_check_branch
    %1118 = sbr.rel (0) target = $region89
  $region88: #{policy_net_forward.4} parent=0 // pred_region
    _
  $region89: #{policy_net_forward.4} parent=0 // pred_fallthru
    _

// kernel: policy_net_forward.5
$region0: #{policy_net_forward.5}
  #allocation0 [shape = 'u32[]', space=smem, size = 0x4, offset = 0x4, fixed_abs, tag = 'smem constant byte address 0x4 - core index']
  #allocation1 [shape = 'u32[144,128]{1,0:T(1,128)}', space=vmem, size = 0x12000, scoped, tag = 'internal scratch']
  %s0 = inlined_call_operand.vmem [shape: f32[2,2,32], index: 0, kind: input, shape index: {}]
  %s1 = inlined_call_operand.vmem [shape: f32[4,2,2,32], index: 1, kind: input, shape index: {}]
  %s2 = inlined_call_operand.vmem [shape: f32[2,2,2,5], index: 2, kind: input, shape index: {}]
  %s3 = inlined_call_operand.vmem [shape: f32[2,1], index: 3, kind: input, shape index: {}]
  %s4 = inlined_call_operand.vmem [shape: f32[2,64], index: 4, kind: input, shape index: {}, may-alias: {4,20}]
  %s5 = inlined_call_operand.vmem [shape: f32[2,1], index: 5, kind: input, shape index: {}]
  %s6 = inlined_call_operand.vmem [shape: f32[5,16], index: 6, kind: input, shape index: {}]
  %s7 = inlined_call_operand.vmem [shape: f32[1,16], index: 7, kind: input, shape index: {}]
  %s8 = inlined_call_operand.vmem [shape: f32[1,16], index: 8, kind: input, shape index: {}]
  %s9 = inlined_call_operand.vmem [shape: f32[1,16], index: 9, kind: input, shape index: {}]
  %s10 = inlined_call_operand.vmem [shape: f32[64,32], index: 10, kind: input, shape index: {}]
  %s11 = inlined_call_operand.vmem [shape: f32[1,32], index: 11, kind: input, shape index: {}]
  %s12 = inlined_call_operand.vmem [shape: f32[64,32], index: 12, kind: input, shape index: {}]
  %s13 = inlined_call_operand.vmem [shape: f32[1,32], index: 13, kind: input, shape index: {}]
  %s14 = inlined_call_operand.vmem [shape: f32[32,32], index: 14, kind: input, shape index: {}]
  %s15 = inlined_call_operand.vmem [shape: f32[1,32], index: 15, kind: input, shape index: {}]
  %s16 = inlined_call_operand.vmem [shape: f32[272,192], index: 16, kind: input, shape index: {}]
  %s17 = inlined_call_operand.vmem [shape: f32[64,192], index: 17, kind: input, shape index: {}]
  %s18 = inlined_call_operand.vmem [shape: f32[1,192], index: 18, kind: input, shape index: {}]
  %s19 = inlined_call_operand.vmem [shape: f32[1,192], index: 19, kind: input, shape index: {}]
  %s20 = inlined_call_operand.vmem [shape: f32[2,64], index: 20, kind: output, shape index: {}, may-alias: {4,20}]
  %s21 = sld [smem:[#allocation0]]
  $region90: #{policy_net_forward.5} parent=0
    _
  %s23 = ssub.s32 1, %s21
  %s24 = scalar_select 0, %s23, %s21
  // Predicated region
  $region2: #{policy_net_forward.5} parent=0 // pred_check
    _
  $region3: #{policy_net_forward.5} parent=0 // pred_check_branch
    %26 = sbr.rel (0) target = $region5
  $region4: #{policy_net_forward.5} parent=0 // pred_region
    _
  $region5: #{policy_net_forward.5} parent=0 // pred_fallthru
    _
  // Predicated region
  $region6: #{policy_net_forward.5} parent=0 // pred_check
    _
  $region7: #{policy_net_forward.5} parent=0 // pred_check_branch
    %28 = sbr.rel (0) target = $region9
  $region8: #{policy_net_forward.5} parent=0 // pred_region
    _
  $region9: #{policy_net_forward.5} parent=0 // pred_fallthru
    _
  // Predicated region
  $region10: #{policy_net_forward.5} parent=0 // pred_check
    _
  $region11: #{policy_net_forward.5} parent=0 // pred_check_branch
    %30 = sbr.rel (0) target = $region13
  $region12: #{policy_net_forward.5} parent=0 // pred_region
    _
  $region13: #{policy_net_forward.5} parent=0 // pred_fallthru
    _
  // Predicated region
  $region14: #{policy_net_forward.5} parent=0 // pred_check
    _
  $region15: #{policy_net_forward.5} parent=0 // pred_check_branch
    %32 = sbr.rel (0) target = $region17
  $region16: #{policy_net_forward.5} parent=0 // pred_region
    _
  $region17: #{policy_net_forward.5} parent=0 // pred_fallthru
    _
  // Predicated region
  $region18: #{policy_net_forward.5} parent=0 // pred_check
    _
  $region19: #{policy_net_forward.5} parent=0 // pred_check_branch
    %34 = sbr.rel (0) target = $region21
  $region20: #{policy_net_forward.5} parent=0 // pred_region
    _
  $region21: #{policy_net_forward.5} parent=0 // pred_fallthru
    _
  // Predicated region
  $region22: #{policy_net_forward.5} parent=0 // pred_check
    _
  $region23: #{policy_net_forward.5} parent=0 // pred_check_branch
    %36 = sbr.rel (0) target = $region25
  $region24: #{policy_net_forward.5} parent=0 // pred_region
    _
  $region25: #{policy_net_forward.5} parent=0 // pred_fallthru
    _
  // Predicated region
  $region26: #{policy_net_forward.5} parent=0 // pred_check
    _
  $region27: #{policy_net_forward.5} parent=0 // pred_check_branch
    %38 = sbr.rel (0) target = $region29
  $region28: #{policy_net_forward.5} parent=0 // pred_region
    _
  $region29: #{policy_net_forward.5} parent=0 // pred_fallthru
    _
  // Predicated region
  $region30: #{policy_net_forward.5} parent=0 // pred_check
    _
  $region31: #{policy_net_forward.5} parent=0 // pred_check_branch
    %40 = sbr.rel (0) target = $region33
  $region32: #{policy_net_forward.5} parent=0 // pred_region
    _
  $region33: #{policy_net_forward.5} parent=0 // pred_fallthru
    _
  // Predicated region
  $region34: #{policy_net_forward.5} parent=0 // pred_check
    _
  $region35: #{policy_net_forward.5} parent=0 // pred_check_branch
    %42 = sbr.rel (0) target = $region37
  $region36: #{policy_net_forward.5} parent=0 // pred_region
    _
  $region37: #{policy_net_forward.5} parent=0 // pred_fallthru
    _
  // Predicated region
  $region38: #{policy_net_forward.5} parent=0 // pred_check
    _
  $region39: #{policy_net_forward.5} parent=0 // pred_check_branch
    %44 = sbr.rel (0) target = $region41
  $region40: #{policy_net_forward.5} parent=0 // pred_region
    _
  $region41: #{policy_net_forward.5} parent=0 // pred_fallthru
    _
  // Predicated region
  $region42: #{policy_net_forward.5} parent=0 // pred_check
    _
  $region43: #{policy_net_forward.5} parent=0 // pred_check_branch
    %46 = sbr.rel (0) target = $region45
  $region44: #{policy_net_forward.5} parent=0 // pred_region
    _
  $region45: #{policy_net_forward.5} parent=0 // pred_fallthru
    _
  // Predicated region
  $region46: #{policy_net_forward.5} parent=0 // pred_check
    _
  $region47: #{policy_net_forward.5} parent=0 // pred_check_branch
    %48 = sbr.rel (0) target = $region49
  $region48: #{policy_net_forward.5} parent=0 // pred_region
    _
  $region49: #{policy_net_forward.5} parent=0 // pred_fallthru
    _
  // Predicated region
  $region50: #{policy_net_forward.5} parent=0 // pred_check
    _
  $region51: #{policy_net_forward.5} parent=0 // pred_check_branch
    %50 = sbr.rel (0) target = $region53
  $region52: #{policy_net_forward.5} parent=0 // pred_region
    _
  $region53: #{policy_net_forward.5} parent=0 // pred_fallthru
    _
  // Predicated region
  $region54: #{policy_net_forward.5} parent=0 // pred_check
    _
  $region55: #{policy_net_forward.5} parent=0 // pred_check_branch
    %52 = sbr.rel (0) target = $region57
  $region56: #{policy_net_forward.5} parent=0 // pred_region
    _
  $region57: #{policy_net_forward.5} parent=0 // pred_fallthru
    _
  // Predicated region
  $region58: #{policy_net_forward.5} parent=0 // pred_check
    _
  $region59: #{policy_net_forward.5} parent=0 // pred_check_branch
    %54 = sbr.rel (0) target = $region61
  $region60: #{policy_net_forward.5} parent=0 // pred_region
    _
  $region61: #{policy_net_forward.5} parent=0 // pred_fallthru
    _
  // Predicated region
  $region62: #{policy_net_forward.5} parent=0 // pred_check
    _
  $region63: #{policy_net_forward.5} parent=0 // pred_check_branch
    %56 = sbr.rel (0) target = $region65
  $region64: #{policy_net_forward.5} parent=0 // pred_region
    _
  $region65: #{policy_net_forward.5} parent=0 // pred_fallthru
    _
  // Predicated region
  $region66: #{policy_net_forward.5} parent=0 // pred_check
    _
  $region67: #{policy_net_forward.5} parent=0 // pred_check_branch
    %58 = sbr.rel (0) target = $region69
  $region68: #{policy_net_forward.5} parent=0 // pred_region
    _
  $region69: #{policy_net_forward.5} parent=0 // pred_fallthru
    _
  // Predicated region
  $region70: #{policy_net_forward.5} parent=0 // pred_check
    _
  $region71: #{policy_net_forward.5} parent=0 // pred_check_branch
    %60 = sbr.rel (0) target = $region73
  $region72: #{policy_net_forward.5} parent=0 // pred_region
    _
  $region73: #{policy_net_forward.5} parent=0 // pred_fallthru
    _
  // Predicated region
  $region74: #{policy_net_forward.5} parent=0 // pred_check
    _
  $region75: #{policy_net_forward.5} parent=0 // pred_check_branch
    %62 = sbr.rel (0) target = $region77
  $region76: #{policy_net_forward.5} parent=0 // pred_region
    _
  $region77: #{policy_net_forward.5} parent=0 // pred_fallthru
    _
  // Predicated region
  $region78: #{policy_net_forward.5} parent=0 // pred_check
    _
  $region79: #{policy_net_forward.5} parent=0 // pred_check_branch
    %64 = sbr.rel (0) target = $region81
  $region80: #{policy_net_forward.5} parent=0 // pred_region
    _
  $region81: #{policy_net_forward.5} parent=0 // pred_fallthru
    _
  %v65 = vld [vmem:[%s0] sm:$0x3]
  %v66 = vld [vmem:[%s0 + $0x2] sm:$0x3]
  %v67 = vld [vmem:[%s1] sm:$0x3]
  %v68 = vld [vmem:[%s1 + $0x2] sm:$0x3]
  %v69 = vld [vmem:[%s1 + $0x4] sm:$0x3]
  %v70 = vld [vmem:[%s1 + $0x6] sm:$0x3]
  %v71 = vld [vmem:[%s1 + $0x8] sm:$0x3]
  %v72 = vld [vmem:[%s1 + $0xa] sm:$0x3]
  %v73 = vld [vmem:[%s1 + $0xc] sm:$0x3]
  %v74 = vld [vmem:[%s1 + $0xe] sm:$0x3]
  %v75 = vld [vmem:[%s2] sm:$0x3]
  %v76 = vld [vmem:[%s2 + $0x2] sm:$0x3]
  %v77 = vld [vmem:[%s2 + $0x4] sm:$0x3]
  %v78 = vld [vmem:[%s2 + $0x6] sm:$0x3]
  %v79 = vld [vmem:[%s6] sm:$0x1f]
  %v80 = vld [vmem:[%s7] sm:$0x1]
  %v81 = vld [vmem:[%s4] sm:$0x3]
  %v82 = vld [vmem:[%s5] sm:$0x3]
  %84 = vset.pattern.permute.xlu0 0
  %85 = vperm.xlu0 %84, %v82
  %v86 = vpop.permute.xlu0 %85
  %v88 = vmul.f32 %v81, %v86
  %v89 = vld [vmem:[%s3] sm:$0x3]
  %v90 = vld [vmem:[%s8] sm:$0x1]
  %92 = vset.pattern.permute.xlu0 0
  %93 = vperm.xlu0 %92, %v89
  %v94 = vpop.permute.xlu0 %93
  %v97 = vlaneseq
  %v98 = vshrl.u32 %v97, 7
  %v99 = vsub.s32 0, %v98
  %v100 = vrot.slane %v90, %v99
  %v102 = vmul.f32 %v94, %v100
  %v103 = vld [vmem:[%s9] sm:$0x1]
  %v105 = vlaneseq
  %v106 = vshrl.u32 %v105, 7
  %v107 = vsub.s32 0, %v106
  %v108 = vrot.slane %v103, %v107
  %v110 = vadd.f32 %v102, %v108
  %v111 = vmax.f32 %v110, 0.0
  %113 = vrot.lane.b32.xlu0 %v69, 32
  %v114 = vpop.permute.xlu0 %113
  %vm116 = vcmask 261120
  %v117 = vsel %vm116, %v67, %v114
  %v118 = vld [vmem:[%s10] sm:$0xff]
  %v119 = vld [vmem:[%s10 + $0x8] sm:$0xff]
  %v120 = vld [vmem:[%s10 + $0x10] sm:$0xff]
  %v121 = vld [vmem:[%s10 + $0x18] sm:$0xff]
  %v122 = vld [vmem:[%s10 + $0x20] sm:$0xff]
  %v123 = vld [vmem:[%s10 + $0x28] sm:$0xff]
  %v124 = vld [vmem:[%s10 + $0x30] sm:$0xff]
  %v125 = vld [vmem:[%s10 + $0x38] sm:$0xff]
  %v126 = vld [vmem:[%s11] sm:$0x1]
  %v128 = vlaneseq
  %v129 = vshrl.u32 %v128, 7
  %v130 = vsub.s32 0, %v129
  %v131 = vrot.slane %v126, %v130
  %vm133 = vcmask 523264
  %v135 = vsel %vm133, %v117, 0
  %137 = vmatprep.subr.mxu0 0.0
  %138 = vmatpush1.msra.mxu0 0.0
  %139 = vmatprep.subr.mxu0 0.0
  %140 = vmatpush1.msra.mxu0 0.0
  %141 = vmatprep.subr.mxu0 0.0
  %142 = vmatpush1.msra.mxu0 0.0
  %143 = vmatprep.subr.mxu0 0.0
  %144 = vmatpush1.msra.mxu0 0.0
  %145 = vmatprep.subr.mxu0 0.0
  %146 = vmatpush1.msra.mxu0 0.0
  %147 = vmatprep.subr.mxu0 0.0
  %148 = vmatpush1.msra.mxu0 0.0
  %149 = vmatprep.subr.mxu0 0.0
  %150 = vmatpush1.msra.mxu0 0.0
  %151 = vmatprep.subr.mxu0 0.0
  %152 = vmatpush1.msra.mxu0 0.0
  %153 = vmatprep.subr.mxu0 0.0
  %154 = vmatpush1.msra.mxu0 %v125
  %155 = vmatprep.subr.mxu0 0.0
  %156 = vmatpush1.msra.mxu0 %v124
  %157 = vmatprep.subr.mxu0 0.0
  %158 = vmatpush1.msra.mxu0 %v123
  %159 = vmatprep.subr.mxu0 0.0
  %160 = vmatpush1.msra.mxu0 %v122
  %161 = vmatprep.subr.mxu0 0.0
  %162 = vmatpush1.msra.mxu0 %v121
  %163 = vmatprep.subr.mxu0 0.0
  %164 = vmatpush1.msra.mxu0 %v120
  %165 = vmatprep.subr.mxu0 0.0
  %166 = vmatpush1.msra.mxu0 %v119
  %167 = vmatprep.subr.mxu0 0.0
  %168 = vmatpush1.msra.mxu0 %v118
  %169 = vmatprep.subr.mxu0 0.0
  %170 = vmatpush2.msra.mxu0 0.0
  %171 = vmatprep.subr.mxu0 0.0
  %172 = vmatpush2.msra.mxu0 0.0
  %173 = vmatprep.subr.mxu0 0.0
  %174 = vmatpush2.msra.mxu0 0.0
  %175 = vmatprep.subr.mxu0 0.0
  %176 = vmatpush2.msra.mxu0 0.0
  %177 = vmatprep.subr.mxu0 0.0
  %178 = vmatpush2.msra.mxu0 0.0
  %179 = vmatprep.subr.mxu0 0.0
  %180 = vmatpush2.msra.mxu0 0.0
  %181 = vmatprep.subr.mxu0 0.0
  %182 = vmatpush2.msra.mxu0 0.0
  %183 = vmatprep.subr.mxu0 0.0
  %184 = vmatpush2.msra.mxu0 0.0
  %185 = vmatprep.subr.mxu0 0.0
  %186 = vmatpush2.msra.mxu0 0.0
  %187 = vmatprep.subr.mxu0 0.0
  %188 = vmatpush2.msra.mxu0 0.0
  %189 = vmatprep.subr.mxu0 0.0
  %190 = vmatpush2.msra.mxu0 0.0
  %191 = vmatprep.subr.mxu0 0.0
  %192 = vmatpush2.msra.mxu0 0.0
  %193 = vmatprep.subr.mxu0 0.0
  %194 = vmatpush2.msra.mxu0 0.0
  %195 = vmatprep.subr.mxu0 0.0
  %196 = vmatpush2.msra.mxu0 0.0
  %197 = vmatprep.subr.mxu0 0.0
  %198 = vmatpush2.msra.mxu0 0.0
  %199 = vmatprep.subr.mxu0 0.0
  %200 = vmatpush2.msra.mxu0 0.0
  %201 = vmatprep.mubr.f32.mxu0 0.0
  %202 = vmatmul.mubr.f32.gmra.mxu0 %v135
  %v203 = vpop.f32.mrf.mxu0
  %v204 = vadd.f32 %v131, %v203
  %v205 = vpop.f32.mrf.mxu0
  %206 = vdwg.mxu0
  %v207 = vmax.f32 %v204, 0.0
  %209 = vrot.lane.b32.xlu0 %v73, 32
  %v210 = vpop.permute.xlu0 %209
  %v212 = vsel %vm116, %v71, %v210
  %v213 = vld [vmem:[%s12] sm:$0xff]
  %v214 = vld [vmem:[%s12 + $0x8] sm:$0xff]
  %v215 = vld [vmem:[%s12 + $0x10] sm:$0xff]
  %v216 = vld [vmem:[%s12 + $0x18] sm:$0xff]
  %v217 = vld [vmem:[%s12 + $0x20] sm:$0xff]
  %v218 = vld [vmem:[%s12 + $0x28] sm:$0xff]
  %v219 = vld [vmem:[%s12 + $0x30] sm:$0xff]
  %v220 = vld [vmem:[%s12 + $0x38] sm:$0xff]
  %v221 = vld [vmem:[%s13] sm:$0x1]
  %v223 = vlaneseq
  %v224 = vshrl.u32 %v223, 7
  %v225 = vsub.s32 0, %v224
  %v226 = vrot.slane %v221, %v225
  %v229 = vsel %vm133, %v212, 0
  %231 = vmatprep.subr.mxu0 0.0
  %232 = vmatpush1.msra.mxu0 0.0
  %233 = vmatprep.subr.mxu0 0.0
  %234 = vmatpush1.msra.mxu0 0.0
  %235 = vmatprep.subr.mxu0 0.0
  %236 = vmatpush1.msra.mxu0 0.0
  %237 = vmatprep.subr.mxu0 0.0
  %238 = vmatpush1.msra.mxu0 0.0
  %239 = vmatprep.subr.mxu0 0.0
  %240 = vmatpush1.msra.mxu0 0.0
  %241 = vmatprep.subr.mxu0 0.0
  %242 = vmatpush1.msra.mxu0 0.0
  %243 = vmatprep.subr.mxu0 0.0
  %244 = vmatpush1.msra.mxu0 0.0
  %245 = vmatprep.subr.mxu0 0.0
  %246 = vmatpush1.msra.mxu0 0.0
  %247 = vmatprep.subr.mxu0 0.0
  %248 = vmatpush1.msra.mxu0 %v220
  %249 = vmatprep.subr.mxu0 0.0
  %250 = vmatpush1.msra.mxu0 %v219
  %251 = vmatprep.subr.mxu0 0.0
  %252 = vmatpush1.msra.mxu0 %v218
  %253 = vmatprep.subr.mxu0 0.0
  %254 = vmatpush1.msra.mxu0 %v217
  %255 = vmatprep.subr.mxu0 0.0
  %256 = vmatpush1.msra.mxu0 %v216
  %257 = vmatprep.subr.mxu0 0.0
  %258 = vmatpush1.msra.mxu0 %v215
  %259 = vmatprep.subr.mxu0 0.0
  %260 = vmatpush1.msra.mxu0 %v214
  %261 = vmatprep.subr.mxu0 0.0
  %262 = vmatpush1.msra.mxu0 %v213
  %263 = vmatprep.subr.mxu0 0.0
  %264 = vmatpush2.msra.mxu0 0.0
  %265 = vmatprep.subr.mxu0 0.0
  %266 = vmatpush2.msra.mxu0 0.0
  %267 = vmatprep.subr.mxu0 0.0
  %268 = vmatpush2.msra.mxu0 0.0
  %269 = vmatprep.subr.mxu0 0.0
  %270 = vmatpush2.msra.mxu0 0.0
  %271 = vmatprep.subr.mxu0 0.0
  %272 = vmatpush2.msra.mxu0 0.0
  %273 = vmatprep.subr.mxu0 0.0
  %274 = vmatpush2.msra.mxu0 0.0
  %275 = vmatprep.subr.mxu0 0.0
  %276 = vmatpush2.msra.mxu0 0.0
  %277 = vmatprep.subr.mxu0 0.0
  %278 = vmatpush2.msra.mxu0 0.0
  %279 = vmatprep.subr.mxu0 0.0
  %280 = vmatpush2.msra.mxu0 0.0
  %281 = vmatprep.subr.mxu0 0.0
  %282 = vmatpush2.msra.mxu0 0.0
  %283 = vmatprep.subr.mxu0 0.0
  %284 = vmatpush2.msra.mxu0 0.0
  %285 = vmatprep.subr.mxu0 0.0
  %286 = vmatpush2.msra.mxu0 0.0
  %287 = vmatprep.subr.mxu0 0.0
  %288 = vmatpush2.msra.mxu0 0.0
  %289 = vmatprep.subr.mxu0 0.0
  %290 = vmatpush2.msra.mxu0 0.0
  %291 = vmatprep.subr.mxu0 0.0
  %292 = vmatpush2.msra.mxu0 0.0
  %293 = vmatprep.subr.mxu0 0.0
  %294 = vmatpush2.msra.mxu0 0.0
  %295 = vmatprep.mubr.f32.mxu0 0.0
  %296 = vmatmul.mubr.f32.gmra.mxu0 %v229
  %v297 = vpop.f32.mrf.mxu0
  %v298 = vadd.f32 %v226, %v297
  %v299 = vpop.f32.mrf.mxu0
  %300 = vdwg.mxu0
  %v301 = vmax.f32 %v298, 0.0
  %303 = vset.pattern.permute.xlu0 0
  %304 = vperm.xlu0 %303, %v75
  %v305 = vpop.permute.xlu0 %304
  %v307 = vlaneseq
  %v308 = vshrl.u32 %v307, 7
  %v309 = vsub.s32 0, %v308
  %v310 = vrot.slane %v79, %v309
  %v311 = vmul.f32 %v305, %v310
  %v313 = vlaneseq
  %v314 = vshrl.u32 %v313, 7
  %v315 = vsub.s32 0, %v314
  %v316 = vrot.slane %v80, %v315
  %v318 = vadd.f32 %v316, %v311
  %319 = vset.pattern.permute.xlu0 1
  %320 = vperm.xlu0 %319, %v75
  %v321 = vpop.permute.xlu0 %320
  %v323 = vlaneseq
  %v324 = vshrl.u32 %v323, 7
  %v325 = vsub.s32 1, %v324
  %v326 = vrot.slane %v79, %v325
  %v327 = vmul.f32 %v321, %v326
  %v328 = vadd.f32 %v318, %v327
  %329 = vset.pattern.permute.xlu0 2
  %330 = vperm.xlu0 %329, %v75
  %v331 = vpop.permute.xlu0 %330
  %v333 = vlaneseq
  %v334 = vshrl.u32 %v333, 7
  %v335 = vsub.s32 2, %v334
  %v336 = vrot.slane %v79, %v335
  %v337 = vmul.f32 %v331, %v336
  %v338 = vadd.f32 %v328, %v337
  %339 = vset.pattern.permute.xlu0 3
  %340 = vperm.xlu0 %339, %v75
  %v341 = vpop.permute.xlu0 %340
  %v343 = vlaneseq
  %v344 = vshrl.u32 %v343, 7
  %v345 = vsub.s32 3, %v344
  %v346 = vrot.slane %v79, %v345
  %v347 = vmul.f32 %v341, %v346
  %v348 = vadd.f32 %v338, %v347
  %349 = vset.pattern.permute.xlu0 4
  %350 = vperm.xlu0 %349, %v75
  %v351 = vpop.permute.xlu0 %350
  %v353 = vlaneseq
  %v354 = vshrl.u32 %v353, 7
  %v355 = vsub.s32 4, %v354
  %v356 = vrot.slane %v79, %v355
  %v357 = vmul.f32 %v351, %v356
  %v358 = vadd.f32 %v348, %v357
  %v359 = vmax.f32 %v358, 0.0
  %361 = vset.pattern.permute.xlu0 0
  %362 = vperm.xlu0 %361, %v77
  %v363 = vpop.permute.xlu0 %362
  %v365 = vmul.f32 %v363, %v310
  %v366 = vadd.f32 %v316, %v365
  %367 = vset.pattern.permute.xlu0 1
  %368 = vperm.xlu0 %367, %v77
  %v369 = vpop.permute.xlu0 %368
  %v371 = vmul.f32 %v369, %v326
  %v372 = vadd.f32 %v366, %v371
  %373 = vset.pattern.permute.xlu0 2
  %374 = vperm.xlu0 %373, %v77
  %v375 = vpop.permute.xlu0 %374
  %v377 = vmul.f32 %v375, %v336
  %v378 = vadd.f32 %v372, %v377
  %379 = vset.pattern.permute.xlu0 3
  %380 = vperm.xlu0 %379, %v77
  %v381 = vpop.permute.xlu0 %380
  %v383 = vmul.f32 %v381, %v346
  %v384 = vadd.f32 %v378, %v383
  %385 = vset.pattern.permute.xlu0 4
  %386 = vperm.xlu0 %385, %v77
  %v387 = vpop.permute.xlu0 %386
  %v389 = vmul.f32 %v387, %v356
  %v390 = vadd.f32 %v384, %v389
  %v391 = vmax.f32 %v390, 0.0
  %393 = vrot.lane.b32.xlu0 %v391, 16
  %v394 = vpop.permute.xlu0 %393
  %vm396 = vcmask 130048
  %v397 = vsel %vm396, %v359, %v394
  %v398 = vld [vmem:[%s14] sm:$0xff]
  %v399 = vld [vmem:[%s14 + $0x8] sm:$0xff]
  %v400 = vld [vmem:[%s14 + $0x10] sm:$0xff]
  %v401 = vld [vmem:[%s14 + $0x18] sm:$0xff]
  %v402 = vld [vmem:[%s15] sm:$0x1]
  %v404 = vlaneseq
  %v405 = vshrl.u32 %v404, 7
  %v406 = vsub.s32 0, %v405
  %v407 = vrot.slane %v402, %v406
  %v410 = vsel %vm116, %v397, 0
  %412 = vmatprep.subr.mxu0 0.0
  %413 = vmatpush1.msra.mxu0 0.0
  %414 = vmatprep.subr.mxu0 0.0
  %415 = vmatpush1.msra.mxu0 0.0
  %416 = vmatprep.subr.mxu0 0.0
  %417 = vmatpush1.msra.mxu0 0.0
  %418 = vmatprep.subr.mxu0 0.0
  %419 = vmatpush1.msra.mxu0 0.0
  %420 = vmatprep.subr.mxu0 0.0
  %421 = vmatpush1.msra.mxu0 0.0
  %422 = vmatprep.subr.mxu0 0.0
  %423 = vmatpush1.msra.mxu0 0.0
  %424 = vmatprep.subr.mxu0 0.0
  %425 = vmatpush1.msra.mxu0 0.0
  %426 = vmatprep.subr.mxu0 0.0
  %427 = vmatpush1.msra.mxu0 0.0
  %428 = vmatprep.subr.mxu0 0.0
  %429 = vmatpush1.msra.mxu0 0.0
  %430 = vmatprep.subr.mxu0 0.0
  %431 = vmatpush1.msra.mxu0 0.0
  %432 = vmatprep.subr.mxu0 0.0
  %433 = vmatpush1.msra.mxu0 0.0
  %434 = vmatprep.subr.mxu0 0.0
  %435 = vmatpush1.msra.mxu0 0.0
  %436 = vmatprep.subr.mxu0 0.0
  %437 = vmatpush1.msra.mxu0 %v401
  %438 = vmatprep.subr.mxu0 0.0
  %439 = vmatpush1.msra.mxu0 %v400
  %440 = vmatprep.subr.mxu0 0.0
  %441 = vmatpush1.msra.mxu0 %v399
  %442 = vmatprep.subr.mxu0 0.0
  %443 = vmatpush1.msra.mxu0 %v398
  %444 = vmatprep.subr.mxu0 0.0
  %445 = vmatpush2.msra.mxu0 0.0
  %446 = vmatprep.subr.mxu0 0.0
  %447 = vmatpush2.msra.mxu0 0.0
  %448 = vmatprep.subr.mxu0 0.0
  %449 = vmatpush2.msra.mxu0 0.0
  %450 = vmatprep.subr.mxu0 0.0
  %451 = vmatpush2.msra.mxu0 0.0
  %452 = vmatprep.subr.mxu0 0.0
  %453 = vmatpush2.msra.mxu0 0.0
  %454 = vmatprep.subr.mxu0 0.0
  %455 = vmatpush2.msra.mxu0 0.0
  %456 = vmatprep.subr.mxu0 0.0
  %457 = vmatpush2.msra.mxu0 0.0
  %458 = vmatprep.subr.mxu0 0.0
  %459 = vmatpush2.msra.mxu0 0.0
  %460 = vmatprep.subr.mxu0 0.0
  %461 = vmatpush2.msra.mxu0 0.0
  %462 = vmatprep.subr.mxu0 0.0
  %463 = vmatpush2.msra.mxu0 0.0
  %464 = vmatprep.subr.mxu0 0.0
  %465 = vmatpush2.msra.mxu0 0.0
  %466 = vmatprep.subr.mxu0 0.0
  %467 = vmatpush2.msra.mxu0 0.0
  %468 = vmatprep.subr.mxu0 0.0
  %469 = vmatpush2.msra.mxu0 0.0
  %470 = vmatprep.subr.mxu0 0.0
  %471 = vmatpush2.msra.mxu0 0.0
  %472 = vmatprep.subr.mxu0 0.0
  %473 = vmatpush2.msra.mxu0 0.0
  %474 = vmatprep.subr.mxu0 0.0
  %475 = vmatpush2.msra.mxu0 0.0
  %476 = vmatprep.mubr.f32.mxu0 0.0
  %477 = vmatmul.mubr.f32.gmra.mxu0 %v410
  %v478 = vpop.f32.mrf.mxu0
  %v479 = vadd.f32 %v407, %v478
  %v480 = vpop.f32.mrf.mxu0
  %481 = vdwg.mxu0
  %v482 = vmax.f32 %v479, 0.0
  %484 = vrot.lane.b32.xlu0 %v70, 32
  %v485 = vpop.permute.xlu0 %484
  %v487 = vsel %vm116, %v68, %v485
  %v489 = vsel %vm133, %v487, 0
  %491 = vmatprep.subr.mxu0 0.0
  %492 = vmatpush1.msra.mxu0 0.0
  %493 = vmatprep.subr.mxu0 0.0
  %494 = vmatpush1.msra.mxu0 0.0
  %495 = vmatprep.subr.mxu0 0.0
  %496 = vmatpush1.msra.mxu0 0.0
  %497 = vmatprep.subr.mxu0 0.0
  %498 = vmatpush1.msra.mxu0 0.0
  %499 = vmatprep.subr.mxu0 0.0
  %500 = vmatpush1.msra.mxu0 0.0
  %501 = vmatprep.subr.mxu0 0.0
  %502 = vmatpush1.msra.mxu0 0.0
  %503 = vmatprep.subr.mxu0 0.0
  %504 = vmatpush1.msra.mxu0 0.0
  %505 = vmatprep.subr.mxu0 0.0
  %506 = vmatpush1.msra.mxu0 0.0
  %507 = vmatprep.subr.mxu0 0.0
  %508 = vmatpush1.msra.mxu0 %v125
  %509 = vmatprep.subr.mxu0 0.0
  %510 = vmatpush1.msra.mxu0 %v124
  %511 = vmatprep.subr.mxu0 0.0
  %512 = vmatpush1.msra.mxu0 %v123
  %513 = vmatprep.subr.mxu0 0.0
  %514 = vmatpush1.msra.mxu0 %v122
  %515 = vmatprep.subr.mxu0 0.0
  %516 = vmatpush1.msra.mxu0 %v121
  %517 = vmatprep.subr.mxu0 0.0
  %518 = vmatpush1.msra.mxu0 %v120
  %519 = vmatprep.subr.mxu0 0.0
  %520 = vmatpush1.msra.mxu0 %v119
  %521 = vmatprep.subr.mxu0 0.0
  %522 = vmatpush1.msra.mxu0 %v118
  %523 = vmatprep.subr.mxu0 0.0
  %524 = vmatpush2.msra.mxu0 0.0
  %525 = vmatprep.subr.mxu0 0.0
  %526 = vmatpush2.msra.mxu0 0.0
  %527 = vmatprep.subr.mxu0 0.0
  %528 = vmatpush2.msra.mxu0 0.0
  %529 = vmatprep.subr.mxu0 0.0
  %530 = vmatpush2.msra.mxu0 0.0
  %531 = vmatprep.subr.mxu0 0.0
  %532 = vmatpush2.msra.mxu0 0.0
  %533 = vmatprep.subr.mxu0 0.0
  %534 = vmatpush2.msra.mxu0 0.0
  %535 = vmatprep.subr.mxu0 0.0
  %536 = vmatpush2.msra.mxu0 0.0
  %537 = vmatprep.subr.mxu0 0.0
  %538 = vmatpush2.msra.mxu0 0.0
  %539 = vmatprep.subr.mxu0 0.0
  %540 = vmatpush2.msra.mxu0 0.0
  %541 = vmatprep.subr.mxu0 0.0
  %542 = vmatpush2.msra.mxu0 0.0
  %543 = vmatprep.subr.mxu0 0.0
  %544 = vmatpush2.msra.mxu0 0.0
  %545 = vmatprep.subr.mxu0 0.0
  %546 = vmatpush2.msra.mxu0 0.0
  %547 = vmatprep.subr.mxu0 0.0
  %548 = vmatpush2.msra.mxu0 0.0
  %549 = vmatprep.subr.mxu0 0.0
  %550 = vmatpush2.msra.mxu0 0.0
  %551 = vmatprep.subr.mxu0 0.0
  %552 = vmatpush2.msra.mxu0 0.0
  %553 = vmatprep.subr.mxu0 0.0
  %554 = vmatpush2.msra.mxu0 0.0
  %555 = vmatprep.mubr.f32.mxu0 0.0
  %556 = vmatmul.mubr.f32.gmra.mxu0 %v489
  %v557 = vpop.f32.mrf.mxu0
  %v558 = vadd.f32 %v131, %v557
  %v559 = vpop.f32.mrf.mxu0
  %560 = vdwg.mxu0
  %v561 = vmax.f32 %v558, 0.0
  %563 = vrot.lane.b32.xlu0 %v74, 32
  %v564 = vpop.permute.xlu0 %563
  %v566 = vsel %vm116, %v72, %v564
  %v568 = vsel %vm133, %v566, 0
  %570 = vmatprep.subr.mxu0 0.0
  %571 = vmatpush1.msra.mxu0 0.0
  %572 = vmatprep.subr.mxu0 0.0
  %573 = vmatpush1.msra.mxu0 0.0
  %574 = vmatprep.subr.mxu0 0.0
  %575 = vmatpush1.msra.mxu0 0.0
  %576 = vmatprep.subr.mxu0 0.0
  %577 = vmatpush1.msra.mxu0 0.0
  %578 = vmatprep.subr.mxu0 0.0
  %579 = vmatpush1.msra.mxu0 0.0
  %580 = vmatprep.subr.mxu0 0.0
  %581 = vmatpush1.msra.mxu0 0.0
  %582 = vmatprep.subr.mxu0 0.0
  %583 = vmatpush1.msra.mxu0 0.0
  %584 = vmatprep.subr.mxu0 0.0
  %585 = vmatpush1.msra.mxu0 0.0
  %586 = vmatprep.subr.mxu0 0.0
  %587 = vmatpush1.msra.mxu0 %v220
  %588 = vmatprep.subr.mxu0 0.0
  %589 = vmatpush1.msra.mxu0 %v219
  %590 = vmatprep.subr.mxu0 0.0
  %591 = vmatpush1.msra.mxu0 %v218
  %592 = vmatprep.subr.mxu0 0.0
  %593 = vmatpush1.msra.mxu0 %v217
  %594 = vmatprep.subr.mxu0 0.0
  %595 = vmatpush1.msra.mxu0 %v216
  %596 = vmatprep.subr.mxu0 0.0
  %597 = vmatpush1.msra.mxu0 %v215
  %598 = vmatprep.subr.mxu0 0.0
  %599 = vmatpush1.msra.mxu0 %v214
  %600 = vmatprep.subr.mxu0 0.0
  %601 = vmatpush1.msra.mxu0 %v213
  %602 = vmatprep.subr.mxu0 0.0
  %603 = vmatpush2.msra.mxu0 0.0
  %604 = vmatprep.subr.mxu0 0.0
  %605 = vmatpush2.msra.mxu0 0.0
  %606 = vmatprep.subr.mxu0 0.0
  %607 = vmatpush2.msra.mxu0 0.0
  %608 = vmatprep.subr.mxu0 0.0
  %609 = vmatpush2.msra.mxu0 0.0
  %610 = vmatprep.subr.mxu0 0.0
  %611 = vmatpush2.msra.mxu0 0.0
  %612 = vmatprep.subr.mxu0 0.0
  %613 = vmatpush2.msra.mxu0 0.0
  %614 = vmatprep.subr.mxu0 0.0
  %615 = vmatpush2.msra.mxu0 0.0
  %616 = vmatprep.subr.mxu0 0.0
  %617 = vmatpush2.msra.mxu0 0.0
  %618 = vmatprep.subr.mxu0 0.0
  %619 = vmatpush2.msra.mxu0 0.0
  %620 = vmatprep.subr.mxu0 0.0
  %621 = vmatpush2.msra.mxu0 0.0
  %622 = vmatprep.subr.mxu0 0.0
  %623 = vmatpush2.msra.mxu0 0.0
  %624 = vmatprep.subr.mxu0 0.0
  %625 = vmatpush2.msra.mxu0 0.0
  %626 = vmatprep.subr.mxu0 0.0
  %627 = vmatpush2.msra.mxu0 0.0
  %628 = vmatprep.subr.mxu0 0.0
  %629 = vmatpush2.msra.mxu0 0.0
  %630 = vmatprep.subr.mxu0 0.0
  %631 = vmatpush2.msra.mxu0 0.0
  %632 = vmatprep.subr.mxu0 0.0
  %633 = vmatpush2.msra.mxu0 0.0
  %634 = vmatprep.mubr.f32.mxu0 0.0
  %635 = vmatmul.mubr.f32.gmra.mxu0 %v568
  %v636 = vpop.f32.mrf.mxu0
  %v637 = vadd.f32 %v226, %v636
  %v638 = vpop.f32.mrf.mxu0
  %639 = vdwg.mxu0
  %v640 = vmax.f32 %v637, 0.0
  %642 = vset.pattern.permute.xlu0 0
  %643 = vperm.xlu0 %642, %v76
  %v644 = vpop.permute.xlu0 %643
  %v646 = vmul.f32 %v644, %v310
  %v647 = vadd.f32 %v316, %v646
  %648 = vset.pattern.permute.xlu0 1
  %649 = vperm.xlu0 %648, %v76
  %v650 = vpop.permute.xlu0 %649
  %v652 = vmul.f32 %v650, %v326
  %v653 = vadd.f32 %v647, %v652
  %654 = vset.pattern.permute.xlu0 2
  %655 = vperm.xlu0 %654, %v76
  %v656 = vpop.permute.xlu0 %655
  %v658 = vmul.f32 %v656, %v336
  %v659 = vadd.f32 %v653, %v658
  %660 = vset.pattern.permute.xlu0 3
  %661 = vperm.xlu0 %660, %v76
  %v662 = vpop.permute.xlu0 %661
  %v664 = vmul.f32 %v662, %v346
  %v665 = vadd.f32 %v659, %v664
  %666 = vset.pattern.permute.xlu0 4
  %667 = vperm.xlu0 %666, %v76
  %v668 = vpop.permute.xlu0 %667
  %v670 = vmul.f32 %v668, %v356
  %v671 = vadd.f32 %v665, %v670
  %v672 = vmax.f32 %v671, 0.0
  %674 = vset.pattern.permute.xlu0 0
  %675 = vperm.xlu0 %674, %v78
  %v676 = vpop.permute.xlu0 %675
  %v678 = vmul.f32 %v676, %v310
  %v679 = vadd.f32 %v316, %v678
  %680 = vset.pattern.permute.xlu0 1
  %681 = vperm.xlu0 %680, %v78
  %v682 = vpop.permute.xlu0 %681
  %v684 = vmul.f32 %v682, %v326
  %v685 = vadd.f32 %v679, %v684
  %686 = vset.pattern.permute.xlu0 2
  %687 = vperm.xlu0 %686, %v78
  %v688 = vpop.permute.xlu0 %687
  %v690 = vmul.f32 %v688, %v336
  %v691 = vadd.f32 %v685, %v690
  %692 = vset.pattern.permute.xlu0 3
  %693 = vperm.xlu0 %692, %v78
  %v694 = vpop.permute.xlu0 %693
  %v696 = vmul.f32 %v694, %v346
  %v697 = vadd.f32 %v691, %v696
  %698 = vset.pattern.permute.xlu0 4
  %699 = vperm.xlu0 %698, %v78
  %v700 = vpop.permute.xlu0 %699
  %v702 = vmul.f32 %v700, %v356
  %v703 = vadd.f32 %v697, %v702
  %v704 = vmax.f32 %v703, 0.0
  %706 = vrot.lane.b32.xlu0 %v704, 16
  %v707 = vpop.permute.xlu0 %706
  %v709 = vsel %vm396, %v672, %v707
  %v711 = vsel %vm116, %v709, 0
  %713 = vmatprep.subr.mxu0 0.0
  %714 = vmatpush1.msra.mxu0 0.0
  %715 = vmatprep.subr.mxu0 0.0
  %716 = vmatpush1.msra.mxu0 0.0
  %717 = vmatprep.subr.mxu0 0.0
  %718 = vmatpush1.msra.mxu0 0.0
  %719 = vmatprep.subr.mxu0 0.0
  %720 = vmatpush1.msra.mxu0 0.0
  %721 = vmatprep.subr.mxu0 0.0
  %722 = vmatpush1.msra.mxu0 0.0
  %723 = vmatprep.subr.mxu0 0.0
  %724 = vmatpush1.msra.mxu0 0.0
  %725 = vmatprep.subr.mxu0 0.0
  %726 = vmatpush1.msra.mxu0 0.0
  %727 = vmatprep.subr.mxu0 0.0
  %728 = vmatpush1.msra.mxu0 0.0
  %729 = vmatprep.subr.mxu0 0.0
  %730 = vmatpush1.msra.mxu0 0.0
  %731 = vmatprep.subr.mxu0 0.0
  %732 = vmatpush1.msra.mxu0 0.0
  %733 = vmatprep.subr.mxu0 0.0
  %734 = vmatpush1.msra.mxu0 0.0
  %735 = vmatprep.subr.mxu0 0.0
  %736 = vmatpush1.msra.mxu0 0.0
  %737 = vmatprep.subr.mxu0 0.0
  %738 = vmatpush1.msra.mxu0 %v401
  %739 = vmatprep.subr.mxu0 0.0
  %740 = vmatpush1.msra.mxu0 %v400
  %741 = vmatprep.subr.mxu0 0.0
  %742 = vmatpush1.msra.mxu0 %v399
  %743 = vmatprep.subr.mxu0 0.0
  %744 = vmatpush1.msra.mxu0 %v398
  %745 = vmatprep.subr.mxu0 0.0
  %746 = vmatpush2.msra.mxu0 0.0
  %747 = vmatprep.subr.mxu0 0.0
  %748 = vmatpush2.msra.mxu0 0.0
  %749 = vmatprep.subr.mxu0 0.0
  %750 = vmatpush2.msra.mxu0 0.0
  %751 = vmatprep.subr.mxu0 0.0
  %752 = vmatpush2.msra.mxu0 0.0
  %753 = vmatprep.subr.mxu0 0.0
  %754 = vmatpush2.msra.mxu0 0.0
  %755 = vmatprep.subr.mxu0 0.0
  %756 = vmatpush2.msra.mxu0 0.0
  %757 = vmatprep.subr.mxu0 0.0
  %758 = vmatpush2.msra.mxu0 0.0
  %759 = vmatprep.subr.mxu0 0.0
  %760 = vmatpush2.msra.mxu0 0.0
  %761 = vmatprep.subr.mxu0 0.0
  %762 = vmatpush2.msra.mxu0 0.0
  %763 = vmatprep.subr.mxu0 0.0
  %764 = vmatpush2.msra.mxu0 0.0
  %765 = vmatprep.subr.mxu0 0.0
  %766 = vmatpush2.msra.mxu0 0.0
  %767 = vmatprep.subr.mxu0 0.0
  %768 = vmatpush2.msra.mxu0 0.0
  %769 = vmatprep.subr.mxu0 0.0
  %770 = vmatpush2.msra.mxu0 0.0
  %771 = vmatprep.subr.mxu0 0.0
  %772 = vmatpush2.msra.mxu0 0.0
  %773 = vmatprep.subr.mxu0 0.0
  %774 = vmatpush2.msra.mxu0 0.0
  %775 = vmatprep.subr.mxu0 0.0
  %776 = vmatpush2.msra.mxu0 0.0
  %777 = vmatprep.mubr.f32.mxu0 0.0
  %778 = vmatmul.mubr.f32.gmra.mxu0 %v711
  %v779 = vpop.f32.mrf.mxu0
  %v780 = vadd.f32 %v407, %v779
  %v781 = vpop.f32.mrf.mxu0
  %782 = vdwg.mxu0
  %v783 = vmax.f32 %v780, 0.0
  %785 = vrot.lane.b32.xlu0 %v207, 32
  %v786 = vpop.permute.xlu0 %785
  %789 = vrot.lane.b32.xlu0 %v301, 64
  %v790 = vpop.permute.xlu0 %789
  %793 = vrot.lane.b32.xlu0 %v482, 96
  %v794 = vpop.permute.xlu0 %793
  %797 = vrot.lane.b32.xlu0 %v561, 32
  %v798 = vpop.permute.xlu0 %797
  %801 = vrot.lane.b32.xlu0 %v640, 64
  %v802 = vpop.permute.xlu0 %801
  %805 = vrot.lane.b32.xlu0 %v783, 96
  %v806 = vpop.permute.xlu0 %805
  %v808 = vsel %vm116, %v65, %v786
  %v809 = vsel %vm133, %v808, %v790
  %vm810 = vcmask 785408
  %v811 = vsel %vm810, %v809, %v794
  %v812 = vsel %vm116, %v66, %v798
  %v813 = vsel %vm133, %v812, %v802
  %v814 = vsel %vm810, %v813, %v806
  %v815 = vld [vmem:[%s16] sm:$0xff]
  %v816 = vld [vmem:[%s16 + $0x8] sm:$0xff]
  %v817 = vld [vmem:[%s16 + $0x10] sm:$0xff]
  %v818 = vld [vmem:[%s16 + $0x18] sm:$0xff]
  %v819 = vld [vmem:[%s16 + $0x20] sm:$0xff]
  %v820 = vld [vmem:[%s16 + $0x28] sm:$0xff]
  %v821 = vld [vmem:[%s16 + $0x30] sm:$0xff]
  %v822 = vld [vmem:[%s16 + $0x38] sm:$0xff]
  %v823 = vld [vmem:[%s16 + $0x40] sm:$0xff]
  %v824 = vld [vmem:[%s16 + $0x48] sm:$0xff]
  %v825 = vld [vmem:[%s16 + $0x50] sm:$0xff]
  %v826 = vld [vmem:[%s16 + $0x58] sm:$0xff]
  %v827 = vld [vmem:[%s16 + $0x60] sm:$0xff]
  %v828 = vld [vmem:[%s16 + $0x68] sm:$0xff]
  %v829 = vld [vmem:[%s16 + $0x70] sm:$0xff]
  %v830 = vld [vmem:[%s16 + $0x78] sm:$0xff]
  %v831 = vld [vmem:[%s16 + $0x80] sm:$0xff]
  %v832 = vld [vmem:[%s16 + $0x88] sm:$0xff]
  %v833 = vld [vmem:[%s16 + $0x90] sm:$0xff]
  %v834 = vld [vmem:[%s16 + $0x98] sm:$0xff]
  %v835 = vld [vmem:[%s16 + $0xa0] sm:$0xff]
  %v836 = vld [vmem:[%s16 + $0xa8] sm:$0xff]
  %v837 = vld [vmem:[%s16 + $0xb0] sm:$0xff]
  %v838 = vld [vmem:[%s16 + $0xb8] sm:$0xff]
  %v839 = vld [vmem:[%s16 + $0xc0] sm:$0xff]
  %v840 = vld [vmem:[%s16 + $0xc8] sm:$0xff]
  %v841 = vld [vmem:[%s16 + $0xd0] sm:$0xff]
  %v842 = vld [vmem:[%s16 + $0xd8] sm:$0xff]
  %v843 = vld [vmem:[%s16 + $0xe0] sm:$0xff]
  %v844 = vld [vmem:[%s16 + $0xe8] sm:$0xff]
  %v845 = vld [vmem:[%s16 + $0xf0] sm:$0xff]
  %v846 = vld [vmem:[%s16 + $0xf8] sm:$0xff]
  %v847 = vld [vmem:[%s16 + $0x100] sm:$0xff]
  %v848 = vld [vmem:[%s16 + $0x108] sm:$0xff]
  %v849 = vld [vmem:[%s16 + $0x110] sm:$0xff]
  %v850 = vld [vmem:[%s16 + $0x118] sm:$0xff]
  %v851 = vld [vmem:[%s16 + $0x120] sm:$0xff]
  %v852 = vld [vmem:[%s16 + $0x128] sm:$0xff]
  %v853 = vld [vmem:[%s16 + $0x130] sm:$0xff]
  %v854 = vld [vmem:[%s16 + $0x138] sm:$0xff]
  %v855 = vld [vmem:[%s16 + $0x140] sm:$0xff]
  %v856 = vld [vmem:[%s16 + $0x148] sm:$0xff]
  %v857 = vld [vmem:[%s16 + $0x150] sm:$0xff]
  %v858 = vld [vmem:[%s16 + $0x158] sm:$0xff]
  %v859 = vld [vmem:[%s16 + $0x160] sm:$0xff]
  %v860 = vld [vmem:[%s16 + $0x168] sm:$0xff]
  %v861 = vld [vmem:[%s16 + $0x170] sm:$0xff]
  %v862 = vld [vmem:[%s16 + $0x178] sm:$0xff]
  %v863 = vld [vmem:[%s16 + $0x180] sm:$0xff]
  %v864 = vld [vmem:[%s16 + $0x188] sm:$0xff]
  %v865 = vld [vmem:[%s16 + $0x190] sm:$0xff]
  %v866 = vld [vmem:[%s16 + $0x198] sm:$0xff]
  %v867 = vld [vmem:[%s16 + $0x1a0] sm:$0xff]
  %v868 = vld [vmem:[%s16 + $0x1a8] sm:$0xff]
  %v869 = vld [vmem:[%s16 + $0x1b0] sm:$0xff]
  %v870 = vld [vmem:[%s16 + $0x1b8] sm:$0xff]
  %v871 = vld [vmem:[%s16 + $0x1c0] sm:$0xff]
  %v872 = vld [vmem:[%s16 + $0x1c8] sm:$0xff]
  %v873 = vld [vmem:[%s16 + $0x1d0] sm:$0xff]
  %v874 = vld [vmem:[%s16 + $0x1d8] sm:$0xff]
  %v875 = vld [vmem:[%s16 + $0x1e0] sm:$0xff]
  %v876 = vld [vmem:[%s16 + $0x1e8] sm:$0xff]
  %v877 = vld [vmem:[%s16 + $0x1f0] sm:$0xff]
  %v878 = vld [vmem:[%s16 + $0x1f8] sm:$0xff]
  %v879 = vld [vmem:[%s16 + $0x200] sm:$0xff]
  %v880 = vld [vmem:[%s16 + $0x208] sm:$0xff]
  %v881 = vld [vmem:[%s16 + $0x210] sm:$0xff]
  %v882 = vld [vmem:[%s16 + $0x218] sm:$0xff]
  %v883 = vld [vmem:[%s18] sm:$0x3]
  %v885 = vlaneseq
  %v886 = vshrl.u32 %v885, 7
  %v887 = vsub.s32 0, %v886
  %v888 = vrot.slane %v883, %v887
  %v889 = vlaneseq
  %v890 = vshrl.u32 %v889, 7
  %v891 = vsub.s32 1, %v890
  %v892 = vrot.slane %v883, %v891
  %v896 = vsel %vm396, %v111, 0
  %898 = vmatprep.subr.mxu0 %v846
  %899 = vmatpush1.msra.mxu0 %v845
  %900 = vmatprep.subr.mxu0 %v844
  %901 = vmatpush1.msra.mxu0 %v843
  %902 = vmatprep.subr.mxu0 %v842
  %903 = vmatpush1.msra.mxu0 %v841
  %904 = vmatprep.subr.mxu0 %v840
  %905 = vmatpush1.msra.mxu0 %v839
  %906 = vmatprep.subr.mxu0 %v838
  %907 = vmatpush1.msra.mxu0 %v837
  %908 = vmatprep.subr.mxu0 %v836
  %909 = vmatpush1.msra.mxu0 %v835
  %910 = vmatprep.subr.mxu0 %v834
  %911 = vmatpush1.msra.mxu0 %v833
  %912 = vmatprep.subr.mxu0 %v832
  %913 = vmatpush1.msra.mxu0 %v831
  %914 = vmatprep.subr.mxu0 %v830
  %915 = vmatpush1.msra.mxu0 %v829
  %916 = vmatprep.subr.mxu0 %v828
  %917 = vmatpush1.msra.mxu0 %v827
  %918 = vmatprep.subr.mxu0 %v826
  %919 = vmatpush1.msra.mxu0 %v825
  %920 = vmatprep.subr.mxu0 %v824
  %921 = vmatpush1.msra.mxu0 %v823
  %922 = vmatprep.subr.mxu0 %v822
  %923 = vmatpush1.msra.mxu0 %v821
  %924 = vmatprep.subr.mxu0 %v820
  %925 = vmatpush1.msra.mxu0 %v819
  %926 = vmatprep.subr.mxu0 %v818
  %927 = vmatpush1.msra.mxu0 %v817
  %928 = vmatprep.subr.mxu0 %v816
  %929 = vmatpush1.msra.mxu0 %v815
  %930 = vmatprep.subr.mxu0 %v878
  %931 = vmatpush2.msra.mxu0 %v877
  %932 = vmatprep.subr.mxu0 %v876
  %933 = vmatpush2.msra.mxu0 %v875
  %934 = vmatprep.subr.mxu0 %v874
  %935 = vmatpush2.msra.mxu0 %v873
  %936 = vmatprep.subr.mxu0 %v872
  %937 = vmatpush2.msra.mxu0 %v871
  %938 = vmatprep.subr.mxu0 %v870
  %939 = vmatpush2.msra.mxu0 %v869
  %940 = vmatprep.subr.mxu0 %v868
  %941 = vmatpush2.msra.mxu0 %v867
  %942 = vmatprep.subr.mxu0 %v866
  %943 = vmatpush2.msra.mxu0 %v865
  %944 = vmatprep.subr.mxu0 %v864
  %945 = vmatpush2.msra.mxu0 %v863
  %946 = vmatprep.subr.mxu0 %v862
  %947 = vmatpush2.msra.mxu0 %v861
  %948 = vmatprep.subr.mxu0 %v860
  %949 = vmatpush2.msra.mxu0 %v859
  %950 = vmatprep.subr.mxu0 %v858
  %951 = vmatpush2.msra.mxu0 %v857
  %952 = vmatprep.subr.mxu0 %v856
  %953 = vmatpush2.msra.mxu0 %v855
  %954 = vmatprep.subr.mxu0 %v854
  %955 = vmatpush2.msra.mxu0 %v853
  %956 = vmatprep.subr.mxu0 %v852
  %957 = vmatpush2.msra.mxu0 %v851
  %958 = vmatprep.subr.mxu0 %v850
  %959 = vmatpush2.msra.mxu0 %v849
  %960 = vmatprep.subr.mxu0 %v848
  %961 = vmatpush2.msra.mxu0 %v847
  %962 = vmatprep.mubr.f32.mxu0 %v814
  %963 = vmatmul.mubr.f32.gmra.mxu0 %v811
  %v964 = vpop.f32.mrf.mxu0
  %v965 = vadd.f32 %v888, %v964
  %v966 = vpop.f32.mrf.mxu0
  %v967 = vadd.f32 %v892, %v966
  %968 = vdwg.mxu0
  %969 = vmatprep.subr.mxu0 0.0
  %970 = vmatpush1.msra.mxu0 0.0
  %971 = vmatprep.subr.mxu0 0.0
  %972 = vmatpush1.msra.mxu0 0.0
  %973 = vmatprep.subr.mxu0 0.0
  %974 = vmatpush1.msra.mxu0 0.0
  %975 = vmatprep.subr.mxu0 0.0
  %976 = vmatpush1.msra.mxu0 0.0
  %977 = vmatprep.subr.mxu0 0.0
  %978 = vmatpush1.msra.mxu0 0.0
  %979 = vmatprep.subr.mxu0 0.0
  %980 = vmatpush1.msra.mxu0 0.0
  %981 = vmatprep.subr.mxu0 0.0
  %982 = vmatpush1.msra.mxu0 0.0
  %983 = vmatprep.subr.mxu0 0.0
  %984 = vmatpush1.msra.mxu0 0.0
  %985 = vmatprep.subr.mxu0 0.0
  %986 = vmatpush1.msra.mxu0 0.0
  %987 = vmatprep.subr.mxu0 0.0
  %988 = vmatpush1.msra.mxu0 0.0
  %989 = vmatprep.subr.mxu0 0.0
  %990 = vmatpush1.msra.mxu0 0.0
  %991 = vmatprep.subr.mxu0 0.0
  %992 = vmatpush1.msra.mxu0 0.0
  %993 = vmatprep.subr.mxu0 0.0
  %994 = vmatpush1.msra.mxu0 0.0
  %995 = vmatprep.subr.mxu0 0.0
  %996 = vmatpush1.msra.mxu0 0.0
  %997 = vmatprep.subr.mxu0 %v882
  %998 = vmatpush1.msra.mxu0 %v881
  %999 = vmatprep.subr.mxu0 %v880
  %1000 = vmatpush1.msra.mxu0 %v879
  %1001 = vmatprep.subr.mxu0 0.0
  %1002 = vmatpush2.msra.mxu0 0.0
  %1003 = vmatprep.subr.mxu0 0.0
  %1004 = vmatpush2.msra.mxu0 0.0
  %1005 = vmatprep.subr.mxu0 0.0
  %1006 = vmatpush2.msra.mxu0 0.0
  %1007 = vmatprep.subr.mxu0 0.0
  %1008 = vmatpush2.msra.mxu0 0.0
  %1009 = vmatprep.subr.mxu0 0.0
  %1010 = vmatpush2.msra.mxu0 0.0
  %1011 = vmatprep.subr.mxu0 0.0
  %1012 = vmatpush2.msra.mxu0 0.0
  %1013 = vmatprep.subr.mxu0 0.0
  %1014 = vmatpush2.msra.mxu0 0.0
  %1015 = vmatprep.subr.mxu0 0.0
  %1016 = vmatpush2.msra.mxu0 0.0
  %1017 = vmatprep.subr.mxu0 0.0
  %1018 = vmatpush2.msra.mxu0 0.0
  %1019 = vmatprep.subr.mxu0 0.0
  %1020 = vmatpush2.msra.mxu0 0.0
  %1021 = vmatprep.subr.mxu0 0.0
  %1022 = vmatpush2.msra.mxu0 0.0
  %1023 = vmatprep.subr.mxu0 0.0
  %1024 = vmatpush2.msra.mxu0 0.0
  %1025 = vmatprep.subr.mxu0 0.0
  %1026 = vmatpush2.msra.mxu0 0.0
  %1027 = vmatprep.subr.mxu0 0.0
  %1028 = vmatpush2.msra.mxu0 0.0
  %1029 = vmatprep.subr.mxu0 0.0
  %1030 = vmatpush2.msra.mxu0 0.0
  %1031 = vmatprep.subr.mxu0 0.0
  %1032 = vmatpush2.msra.mxu0 0.0
  %1033 = vmatprep.mubr.f32.mxu0 0.0
  %1034 = vmatmul.mubr.f32.gmra.mxu0 %v896
  %v1035 = vpop.f32.mrf.mxu0
  %v1036 = vadd.f32 %v965, %v1035
  %v1037 = vpop.f32.mrf.mxu0
  %v1038 = vadd.f32 %v967, %v1037
  %1039 = vdwg.mxu0
  %v1040 = vld [vmem:[%s17] sm:$0xff]
  %v1041 = vld [vmem:[%s17 + $0x8] sm:$0xff]
  %v1042 = vld [vmem:[%s17 + $0x10] sm:$0xff]
  %v1043 = vld [vmem:[%s17 + $0x18] sm:$0xff]
  %v1044 = vld [vmem:[%s17 + $0x20] sm:$0xff]
  %v1045 = vld [vmem:[%s17 + $0x28] sm:$0xff]
  %v1046 = vld [vmem:[%s17 + $0x30] sm:$0xff]
  %v1047 = vld [vmem:[%s17 + $0x38] sm:$0xff]
  %v1048 = vld [vmem:[%s17 + $0x40] sm:$0xff]
  %v1049 = vld [vmem:[%s17 + $0x48] sm:$0xff]
  %v1050 = vld [vmem:[%s17 + $0x50] sm:$0xff]
  %v1051 = vld [vmem:[%s17 + $0x58] sm:$0xff]
  %v1052 = vld [vmem:[%s17 + $0x60] sm:$0xff]
  %v1053 = vld [vmem:[%s17 + $0x68] sm:$0xff]
  %v1054 = vld [vmem:[%s17 + $0x70] sm:$0xff]
  %v1055 = vld [vmem:[%s17 + $0x78] sm:$0xff]
  %v1056 = vld [vmem:[%s19] sm:$0x3]
  %v1058 = vlaneseq
  %v1059 = vshrl.u32 %v1058, 7
  %v1060 = vsub.s32 0, %v1059
  %v1061 = vrot.slane %v1056, %v1060
  %v1062 = vlaneseq
  %v1063 = vshrl.u32 %v1062, 7
  %v1064 = vsub.s32 1, %v1063
  %v1065 = vrot.slane %v1056, %v1064
  %v1069 = vsel %vm133, %v88, 0
  %1071 = vmatprep.subr.mxu0 0.0
  %1072 = vmatpush1.msra.mxu0 0.0
  %1073 = vmatprep.subr.mxu0 0.0
  %1074 = vmatpush1.msra.mxu0 0.0
  %1075 = vmatprep.subr.mxu0 0.0
  %1076 = vmatpush1.msra.mxu0 0.0
  %1077 = vmatprep.subr.mxu0 0.0
  %1078 = vmatpush1.msra.mxu0 0.0
  %1079 = vmatprep.subr.mxu0 0.0
  %1080 = vmatpush1.msra.mxu0 0.0
  %1081 = vmatprep.subr.mxu0 0.0
  %1082 = vmatpush1.msra.mxu0 0.0
  %1083 = vmatprep.subr.mxu0 0.0
  %1084 = vmatpush1.msra.mxu0 0.0
  %1085 = vmatprep.subr.mxu0 0.0
  %1086 = vmatpush1.msra.mxu0 0.0
  %1087 = vmatprep.subr.mxu0 %v1055
  %1088 = vmatpush1.msra.mxu0 %v1054
  %1089 = vmatprep.subr.mxu0 %v1053
  %1090 = vmatpush1.msra.mxu0 %v1052
  %1091 = vmatprep.subr.mxu0 %v1051
  %1092 = vmatpush1.msra.mxu0 %v1050
  %1093 = vmatprep.subr.mxu0 %v1049
  %1094 = vmatpush1.msra.mxu0 %v1048
  %1095 = vmatprep.subr.mxu0 %v1047
  %1096 = vmatpush1.msra.mxu0 %v1046
  %1097 = vmatprep.subr.mxu0 %v1045
  %1098 = vmatpush1.msra.mxu0 %v1044
  %1099 = vmatprep.subr.mxu0 %v1043
  %1100 = vmatpush1.msra.mxu0 %v1042
  %1101 = vmatprep.subr.mxu0 %v1041
  %1102 = vmatpush1.msra.mxu0 %v1040
  %1103 = vmatprep.subr.mxu0 0.0
  %1104 = vmatpush2.msra.mxu0 0.0
  %1105 = vmatprep.subr.mxu0 0.0
  %1106 = vmatpush2.msra.mxu0 0.0
  %1107 = vmatprep.subr.mxu0 0.0
  %1108 = vmatpush2.msra.mxu0 0.0
  %1109 = vmatprep.subr.mxu0 0.0
  %1110 = vmatpush2.msra.mxu0 0.0
  %1111 = vmatprep.subr.mxu0 0.0
  %1112 = vmatpush2.msra.mxu0 0.0
  %1113 = vmatprep.subr.mxu0 0.0
  %1114 = vmatpush2.msra.mxu0 0.0
  %1115 = vmatprep.subr.mxu0 0.0
  %1116 = vmatpush2.msra.mxu0 0.0
  %1117 = vmatprep.subr.mxu0 0.0
  %1118 = vmatpush2.msra.mxu0 0.0
  %1119 = vmatprep.subr.mxu0 0.0
  %1120 = vmatpush2.msra.mxu0 0.0
  %1121 = vmatprep.subr.mxu0 0.0
  %1122 = vmatpush2.msra.mxu0 0.0
  %1123 = vmatprep.subr.mxu0 0.0
  %1124 = vmatpush2.msra.mxu0 0.0
  %1125 = vmatprep.subr.mxu0 0.0
  %1126 = vmatpush2.msra.mxu0 0.0
  %1127 = vmatprep.subr.mxu0 0.0
  %1128 = vmatpush2.msra.mxu0 0.0
  %1129 = vmatprep.subr.mxu0 0.0
  %1130 = vmatpush2.msra.mxu0 0.0
  %1131 = vmatprep.subr.mxu0 0.0
  %1132 = vmatpush2.msra.mxu0 0.0
  %1133 = vmatprep.subr.mxu0 0.0
  %1134 = vmatpush2.msra.mxu0 0.0
  %1135 = vmatprep.mubr.f32.mxu0 0.0
  %1136 = vmatmul.mubr.f32.gmra.mxu0 %v1069
  %v1137 = vpop.f32.mrf.mxu0
  %v1138 = vadd.f32 %v1061, %v1137
  %v1139 = vpop.f32.mrf.mxu0
  %v1140 = vadd.f32 %v1065, %v1139
  %1141 = vdwg.mxu0
  %v1142 = vadd.f32 %v1036, %v1138
  %v1143 = vxor.u32 %v1142, 2147483648
  %v1144 = vmul.f32 %v1143, 1.442695
  %v1145 = vpow.pop %v1144
  %v1146 = vadd.f32 %v1145, 1.0
  %v1147 = vrcp.pop %v1146
  %v1148 = vmul.f32 1.0, %v1147
  %v1149 = vmul.f32 %v1148, %v1140
  %v1150 = vadd.f32 %v1038, %v1149
  %v1151 = vtanh.pop %v1150
  %v1152 = vsub.f32 1.0, %v1148
  %1154 = vrot.lane.b32.xlu0 %v1151, 64
  %v1155 = vpop.permute.xlu0 %1154
  %v1157 = vmul.f32 %v1152, %v1155
  %1158 = vrot.lane.b32.xlu0 %v88, 64
  %v1159 = vpop.permute.xlu0 %1158
  %v1161 = vmul.f32 %v1148, %v1159
  %v1162 = vadd.f32 %v1157, %v1161
  %1164 = vrot.lane.b32.xlu0 %v1162, 64
  %v1165 = vpop.permute.xlu0 %1164
  %vm1167 = vcmask 517120
  %1168 = vst.msk [vmem:[%s20] sm:$0x3] %vm1167, %v1165
  // Predicated region
  $region82: #{policy_net_forward.5} parent=0 // pred_check
    _
  $region83: #{policy_net_forward.5} parent=0 // pred_check_branch
    %1170 = sbr.rel (0) target = $region85
  $region84: #{policy_net_forward.5} parent=0 // pred_region
    _
  $region85: #{policy_net_forward.5} parent=0 // pred_fallthru
    _
  // Predicated region
  $region86: #{policy_net_forward.5} parent=0 // pred_check
    _
  $region87: #{policy_net_forward.5} parent=0 // pred_check_branch
    %1172 = sbr.rel (0) target = $region89
  $region88: #{policy_net_forward.5} parent=0 // pred_region
    _
  $region89: #{policy_net_forward.5} parent=0 // pred_fallthru
    _

</llo_original>
